<compile_context>
chip_gen: v5e
topology: v5e:2x2
jax: 0.10.0
libtpu: 0.0.40
codegen_flags: <defaults>
</compile_context>

<pallas_src>
import functools

import numpy as np

import jax
import jax.numpy as jnp
from jax.experimental import pallas as pl
from jax.experimental.pallas import tpu as pltpu


def _round_up(n, m):
    return ((n + m - 1) // m) * m


# Whole-image working set here is well under 4 MiB; 32 MiB is safe on all gens.
_COMPILER_PARAMS = pltpu.CompilerParams(
    dimension_semantics=("parallel",),
    vmem_limit_bytes=32 * 1024 * 1024,
)


def _full_spec(arr):
    shape = tuple(arr.shape)
    zeros = (0,) * len(shape)
    return pl.BlockSpec(shape, lambda n: zeros)


def _img_spec(C, HW):
    return pl.BlockSpec((1, C, HW), lambda n: (n, 0, 0))


def _conv_tap_masks(H, W):
    """(9, H*W) f32 border-validity masks for the 9 taps of a 3x3 'same' conv
    applied to the lane-flattened (C, H*W) image (host-side constants)."""
    yy, xx = np.meshgrid(np.arange(H), np.arange(W), indexing="ij")
    rows = []
    for dy in (-1, 0, 1):
        for dx in (-1, 0, 1):
            valid = ((yy + dy >= 0) & (yy + dy < H) &
                     (xx + dx >= 0) & (xx + dx < W))
            rows.append(valid.reshape(-1))
    return jnp.asarray(np.stack(rows).astype(np.float32))


def _nearest_resize_nchw(x, H, W):
    """F.interpolate(mode='nearest') on an NCHW tensor (wrapper-side, tiny)."""
    Hs, Ws = x.shape[2], x.shape[3]
    hi = (np.arange(H) * Hs) // H
    wi = (np.arange(W) * Ws) // W
    return x[:, :, hi][:, :, :, wi]


# ----------------------------------------------------------------------------
# The single fused kernel: one grid step == one image, everything in VMEM.
# ----------------------------------------------------------------------------
def _steblock_kernel(mask_ref, fe_ref, fd_ref, seg_ref,
                     w1_ref, b1_ref, w2_ref, b2_ref, w11_ref, b11_ref,
                     wst_ref, bst_ref, w1s_ref, b1s_ref, wfu_ref, bfu_ref,
                     wsh_ref, bsh_ref, wgb_ref, bgb_ref,
                     out_ref, tex_ref, str_ref, *, H, W, Cp, mxu_dtype):
    HW = H * W

    def conv3x3(x, w_ref, b_ref):
        # x: f32 (Cin_p, HW).  Build the (9*Cin_p, HW) im2col patch matrix via
        # lane rolls (XLU) + border masks + sublane concat, then ONE MXU matmul
        # W(Cout_p, 9*Cin_p) @ patches -> lane-dense (Cout_p, HW) f32 result.
        taps = []
        t = 0
        for dy in (-1, 0, 1):
            for dx in (-1, 0, 1):
                d = dy * W + dx
                if d == 0:
                    taps.append(x)                       # centre tap: mask == 1
                else:
                    shifted = pltpu.roll(x, shift=(-d) % HW, axis=1)
                    taps.append(shifted * mask_ref[t:t + 1, :])
                t += 1
        patches = jnp.concatenate(taps, axis=0).astype(mxu_dtype)
        acc = jnp.dot(w_ref[...], patches, preferred_element_type=jnp.float32)
        return acc + b_ref[...]                           # bias is f32

    relu = lambda v: jnp.maximum(v, 0.0)

    fe = fe_ref[0].astype(jnp.float32)                    # (Cp, HW)
    fd = fd_ref[0].astype(jnp.float32)
    seg = seg_ref[0].astype(jnp.float32)                  # (Csegp, HW)

    # ---- texture chain: conv1 -> conv2 -> conv1_1(tanh) --------------------
    feature1 = relu(conv3x3(fe + fd, w1_ref, b1_ref))
    f_text = relu(conv3x3(feature1, w2_ref, b2_ref))
    f_text_m = f_text.astype(mxu_dtype)
    texture = jnp.tanh(jnp.dot(w11_ref[...], f_text_m,
                               preferred_element_type=jnp.float32)
                       + b11_ref[...])
    tex_ref[0] = texture.astype(tex_ref.dtype)

    # ---- structure chain: param_st -> conv1_s(tanh) ------------------------
    f_struct = relu(conv3x3(fe, wst_ref, bst_ref))
    f_struct_m = f_struct.astype(mxu_dtype)
    structure = jnp.tanh(jnp.dot(w1s_ref[...], f_struct_m,
                                 preferred_element_type=jnp.float32)
                         + b1s_ref[...])
    str_ref[0] = structure.astype(str_ref.dtype)

    # ---- conv1_fu on cat([F_text, F_structure]): one K = 2*Cp matmul -------
    fused_in = jnp.concatenate([f_text_m, f_struct_m], axis=0)
    fusion = relu(jnp.dot(wfu_ref[...], fused_in,
                          preferred_element_type=jnp.float32) + bfu_ref[...])

    # ---- InstanceNorm2d(affine=False), eps=1e-5, biased var -----------------
    # Exact single pass: one grid step covers the full image.
    mean = jnp.mean(fusion, axis=1, keepdims=True)
    var = jnp.mean(jnp.square(fusion - mean), axis=1, keepdims=True)
    normalized = (fusion - mean) * jax.lax.rsqrt(var + 1e-5)

    # ---- AD: actv = relu(mlp_shared(seg)); merged gamma/beta head ----------
    actv = relu(conv3x3(seg, wsh_ref, bsh_ref))           # (128, HW)
    gb = conv3x3(actv, wgb_ref, bgb_ref)                  # (2*Cp, HW)
    gamma = gb[:Cp, :]
    beta = gb[Cp:, :]

    out_ref[0] = (normalized * (1.0 + gamma) + beta).astype(out_ref.dtype)


# ----------------------------------------------------------------------------
# STEBlock wrapper
# ----------------------------------------------------------------------------
class STEBlockPallas:
    """Pallas-TPU forward of STEBlock (only the sub-modules forward() uses;
    the unused sigmoid / param_te / parm_fusion / BatchNorm are omitted)."""

    def __init__(self, in_planes, out_planes, kernel_size, key,
                 use_bf16_mxu=True):
        assert kernel_size == 3, "forward() semantics require 3x3 with pad=1"
        assert in_planes == out_planes, "forward() computes conv1(fe + fd)"
        nhidden = 128
        label_nc = 3
        self.out_planes = out_planes
        self.Cp = _round_up(out_planes, 8)
        self.C3p = _round_up(3, 8)
        self.Csegp = _round_up(label_nc, 8)
        self.nhidden = nhidden
        # bf16 MXU operands (f32 accumulation + f32 epilogue): ~2x matmul
        # throughput and half the operand bytes on v5e / v6e / v7x.
        self._mxu_dtype = jnp.bfloat16 if use_bf16_mxu else jnp.float32

        def conv_params(k, cin, cout, subkey):
            kw, kb = jax.random.split(subkey)
            w = jax.random.normal(kw, (k, k, cin, cout), jnp.float32) * 0.05
            b = jax.random.normal(kb, (cout,), jnp.float32) * 0.05
            return w, b

        keys = jax.random.split(key, 9)
        raw = {
            "conv1": conv_params(3, out_planes, out_planes, keys[0]),
            "conv2": conv_params(3, out_planes, out_planes, keys[1]),
            "conv1_1": conv_params(1, out_planes, 3, keys[2]),
            "param_st": conv_params(3, in_planes, out_planes, keys[3]),
            "conv1_s": conv_params(1, out_planes, 3, keys[4]),
            "conv1_fu": conv_params(1, out_planes * 2, out_planes, keys[5]),
            "mlp_shared": conv_params(3, label_nc, nhidden, keys[6]),
            "mlp_gamma": conv_params(3, nhidden, out_planes, keys[7]),
            "mlp_beta": conv_params(3, nhidden, out_planes, keys[8]),
        }
        self.raw = raw  # unpadded HWIO params (used by the pure-JAX reference)

        md = self._mxu_dtype
        Cp, C3p, Csegp = self.Cp, self.C3p, self.Csegp

        def prep(w, b, cin_p, cout_p):
            # pad channels, HWIO -> transposed-flat (cout_p, k*k*cin_p) weight
            # (lane-dense last dim) + (cout_p, 1) f32 bias.
            k, _, cin, cout = w.shape
            wp = jnp.pad(w, ((0, 0), (0, 0), (0, cin_p - cin),
                             (0, cout_p - cout)))
            wf = jnp.transpose(wp, (3, 0, 1, 2)).reshape(cout_p, k * k * cin_p)
            bp = jnp.pad(b, (0, cout_p - cout)).reshape(cout_p, 1)
            return wf.astype(md), bp.astype(jnp.float32)

        self.w1, self.b1 = prep(*raw["conv1"], Cp, Cp)
        self.w2, self.b2 = prep(*raw["conv2"], Cp, Cp)
        self.w11, self.b11 = prep(*raw["conv1_1"], Cp, C3p)
        self.wst, self.bst = prep(*raw["param_st"], Cp, Cp)
        self.w1s, self.b1s = prep(*raw["conv1_s"], Cp, C3p)

        # conv1_fu: split by the torch.cat([F_text, F_structure]) channel
        # order, pad each half's Cin to Cp, restack -> single K=2*Cp matmul.
        wfu, bfu = raw["conv1_fu"]
        pad_cin = ((0, 0), (0, 0), (0, Cp - out_planes), (0, 0))
        wfu_cat = jnp.concatenate(
            [jnp.pad(wfu[:, :, :out_planes, :], pad_cin),
             jnp.pad(wfu[:, :, out_planes:, :], pad_cin)], axis=2)
        self.wfu, self.bfu = prep(wfu_cat, bfu, 2 * Cp, Cp)

        self.wsh, self.bsh = prep(*raw["mlp_shared"], Csegp, nhidden)

        # mlp_gamma / mlp_beta merged along Cout -> one (2*Cp, 9*128) head.
        (wg, bg), (wb_, bb_) = raw["mlp_gamma"], raw["mlp_beta"]
        pad_cout = ((0, 0), (0, 0), (0, 0), (0, Cp - out_planes))
        wgb = jnp.concatenate([jnp.pad(wg, pad_cout), jnp.pad(wb_, pad_cout)],
                              axis=3)
        bgb = jnp.concatenate([jnp.pad(bg, (0, Cp - out_planes)),
                               jnp.pad(bb_, (0, Cp - out_planes))])
        self.wgb, self.bgb = prep(wgb, bgb, nhidden, 2 * Cp)

    def forward(self, fe, fd, segmap):
        """fe: (N, in_planes, H, W), fd: (N, out_planes, H, W),
        segmap: (N, 3, Hs, Ws) -- NCHW, exactly like the PyTorch module."""
        N, _, H, W = fe.shape
        HW = H * W
        assert HW % 128 == 0, "lane-dense layout assumes H*W % 128 == 0"
        Cp, C3p, Csegp = self.Cp, self.C3p, self.Csegp
        dt = fe.dtype

        def chan_pad_flat(a, cp):
            c = a.shape[1]
            if cp != c:
                a = jnp.pad(a, ((0, 0), (0, cp - c), (0, 0), (0, 0)))
            return a.reshape(a.shape[0], cp, HW)

        fe_f = chan_pad_flat(fe, Cp)          # no-op pad when C is already Cp
        fd_f = chan_pad_flat(fd, Cp)
        seg_f = chan_pad_flat(_nearest_resize_nchw(segmap, H, W), Csegp)
        mask = _conv_tap_masks(H, W)

        kern = functools.partial(_steblock_kernel, H=H, W=W, Cp=Cp,
                                 mxu_dtype=self._mxu_dtype)
        weights = (self.w1, self.b1, self.w2, self.b2, self.w11, self.b11,
                   self.wst, self.bst, self.w1s, self.b1s, self.wfu, self.bfu,
                   self.wsh, self.bsh, self.wgb, self.bgb)

        out, tex, struct = pl.pallas_call(
            kern,
            out_shape=(jax.ShapeDtypeStruct((N, Cp, HW), dt),
                       jax.ShapeDtypeStruct((N, C3p, HW), dt),
                       jax.ShapeDtypeStruct((N, C3p, HW), dt)),
            grid=(N,),
            in_specs=[_full_spec(mask), _img_spec(Cp, HW), _img_spec(Cp, HW),
                      _img_spec(Csegp, HW)] + [_full_spec(a) for a in weights],
            out_specs=(_img_spec(Cp, HW), _img_spec(C3p, HW),
                       _img_spec(C3p, HW)),
            compiler_params=_COMPILER_PARAMS,
        )(mask, fe_f, fd_f, seg_f, *weights)

        op = self.out_planes
        return (out[:, :op, :].reshape(N, op, H, W),
                tex[:, :3, :].reshape(N, 3, H, W),
                struct[:, :3, :].reshape(N, 3, H, W))


# ----------------------------------------------------------------------------
# Pure-JAX reference (correctness oracle only, runs through XLA not Pallas)
# ----------------------------------------------------------------------------
def nearest_resize_nhwc(x, H, W):
    Hs, Ws = x.shape[1], x.shape[2]
    hi = (jnp.arange(H) * Hs) // H
    wi = (jnp.arange(W) * Ws) // W
    return x[:, hi][:, :, wi]


def _conv_ref(x, wb, pad):
    w, b = wb
    y = jax.lax.conv_general_dilated(
        x, w, window_strides=(1, 1), padding=[(pad, pad), (pad, pad)],
        dimension_numbers=("NHWC", "HWIO", "NHWC"),
        precision=jax.lax.Precision.HIGHEST)
    return y + b


def reference_forward(raw, fe, fd, segmap):
    to_nhwc = lambda a: jnp.transpose(a, (0, 2, 3, 1))
    to_nchw = lambda a: jnp.transpose(a, (0, 3, 1, 2))
    relu = jax.nn.relu
    fe_, fd_, seg_ = to_nhwc(fe), to_nhwc(fd), to_nhwc(segmap)
    H, W = fe_.shape[1], fe_.shape[2]

    feature1 = relu(_conv_ref(fe_ + fd_, raw["conv1"], 1))
    f_text = relu(_conv_ref(feature1, raw["conv2"], 1))
    texture = jnp.tanh(_conv_ref(f_text, raw["conv1_1"], 0))
    f_struct = relu(_conv_ref(fe_, raw["param_st"], 1))
    structure = jnp.tanh(_conv_ref(f_struct, raw["conv1_s"], 0))
    fusion = relu(_conv_ref(jnp.concatenate([f_text, f_struct], axis=-1),
                            raw["conv1_fu"], 0))

    seg_rs = nearest_resize_nhwc(seg_, H, W)
    actv = relu(_conv_ref(seg_rs, raw["mlp_shared"], 1))
    gamma = _conv_ref(actv, raw["mlp_gamma"], 1)
    beta = _conv_ref(actv, raw["mlp_beta"], 1)

    mean = jnp.mean(fusion, axis=(1, 2), keepdims=True)
    var = jnp.mean(jnp.square(fusion - mean), axis=(1, 2), keepdims=True)
    normalized = (fusion - mean) * jax.lax.rsqrt(var + 1e-5)
    out = normalized * (1.0 + gamma) + beta
    return to_nchw(out), to_nchw(texture), to_nchw(structure)


if __name__ == "__main__":
    # NOTE: forward() requires in_planes == out_planes (conv1 consumes fe+fd).
    in_planes = out_planes = 16
    N, H, W = 2, 16, 16   # N=2 -> both v7x TensorCores get a "parallel" step

    k1, k2, k3 = jax.random.split(jax.random.PRNGKey(0), 3)
    fe = jax.random.normal(k1, (N, in_planes, H, W), jnp.float32)
    fd = jax.random.normal(k2, (N, out_planes, H, W), jnp.float32)
    segmap = jax.random.normal(k3, (N, 3, H // 2, W // 2), jnp.float32)

    # Same PRNG key -> identical raw weights for both precision variants.
    block_bf16 = STEBlockPallas(in_planes, out_planes, 3,
                                jax.random.PRNGKey(0), use_bf16_mxu=True)
    block_f32 = STEBlockPallas(in_planes, out_planes, 3,
                               jax.random.PRNGKey(0), use_bf16_mxu=False)

    ref_out, ref_tex, ref_str = reference_forward(block_bf16.raw, fe, fd,
                                                  segmap)

    def max_err(a, b):
        return float(jnp.max(jnp.abs(a - b)))

    # f32 MXU operands: tight check against the XLA reference.
    out, tex, st = jax.jit(block_f32.forward)(fe, fd, segmap)
    jax.block_until_ready((out, tex, st))
    assert out.shape == (N, out_planes, H, W)
    assert tex.shape == (N, 3, H, W) and st.shape == (N, 3, H, W)
    assert max_err(tex, ref_tex) < 2e-2, f"f32 texture err {max_err(tex, ref_tex)}"
    assert max_err(st, ref_str) < 2e-2, f"f32 structure err {max_err(st, ref_str)}"
    assert max_err(out, ref_out) < 2e-2, f"f32 out err {max_err(out, ref_out)}"

    # bf16 MXU operands (default): texture/structure stay tight; `out` passes
    # through InstanceNorm, which amplifies input error by 1/std(channel), so
    # allow a looser (but still bug-catching) absolute bound there.
    out, tex, st = jax.jit(block_bf16.forward)(fe, fd, segmap)
    jax.block_until_ready((out, tex, st))
    assert out.shape == (N, out_planes, H, W)
    assert max_err(tex, ref_tex) < 3e-2, f"bf16 texture err {max_err(tex, ref_tex)}"
    assert max_err(st, ref_str) < 3e-2, f"bf16 structure err {max_err(st, ref_str)}"
    assert max_err(out, ref_out) < 2e-1, f"bf16 out err {max_err(out, ref_out)}"

    print("KERNEL_OK")
</pallas_src>

<mosaic_0001>
module attributes {stable_mosaic.version = 11 : i64} {
  func.func @_steblock_kernel(%arg0: i32, %arg1: memref<9x256xf32, #tpu.memory_space<vmem>>, %arg2: memref<1x16x256xf32, #tpu.memory_space<vmem>>, %arg3: memref<1x16x256xf32, #tpu.memory_space<vmem>>, %arg4: memref<1x8x256xf32, #tpu.memory_space<vmem>>, %arg5: memref<16x144xf32, #tpu.memory_space<vmem>>, %arg6: memref<16x1xf32, #tpu.memory_space<vmem>>, %arg7: memref<16x144xf32, #tpu.memory_space<vmem>>, %arg8: memref<16x1xf32, #tpu.memory_space<vmem>>, %arg9: memref<8x16xf32, #tpu.memory_space<vmem>>, %arg10: memref<8x1xf32, #tpu.memory_space<vmem>>, %arg11: memref<16x144xf32, #tpu.memory_space<vmem>>, %arg12: memref<16x1xf32, #tpu.memory_space<vmem>>, %arg13: memref<8x16xf32, #tpu.memory_space<vmem>>, %arg14: memref<8x1xf32, #tpu.memory_space<vmem>>, %arg15: memref<16x32xf32, #tpu.memory_space<vmem>>, %arg16: memref<16x1xf32, #tpu.memory_space<vmem>>, %arg17: memref<128x72xf32, #tpu.memory_space<vmem>>, %arg18: memref<128x1xf32, #tpu.memory_space<vmem>>, %arg19: memref<32x1152xf32, #tpu.memory_space<vmem>>, %arg20: memref<32x1xf32, #tpu.memory_space<vmem>>, %arg21: memref<1x16x256xf32, #tpu.memory_space<vmem>>, %arg22: memref<1x8x256xf32, #tpu.memory_space<vmem>>, %arg23: memref<1x8x256xf32, #tpu.memory_space<vmem>>) attributes {dimension_semantics = [#tpu.dimension_semantics<parallel>], iteration_bounds = array<i64: 2>, scalar_prefetch = 0 : i64, scratch_operands = 0 : i64, tpu.core_type = #tpu.core_type<tc>, window_params = [{pipeline_mode = #tpu.pipeline_mode<synchronous>, transform_indices = @transform_0, window_bounds = array<i64: 9, 256>}, {transform_indices = @transform_1, window_bounds = array<i64: 1, 16, 256>}, {transform_indices = @transform_2, window_bounds = array<i64: 1, 16, 256>}, {transform_indices = @transform_3, window_bounds = array<i64: 1, 8, 256>}, {pipeline_mode = #tpu.pipeline_mode<synchronous>, transform_indices = @transform_4, window_bounds = array<i64: 16, 144>}, {pipeline_mode = #tpu.pipeline_mode<synchronous>, transform_indices = @transform_5, window_bounds = array<i64: 16, 1>}, {pipeline_mode = #tpu.pipeline_mode<synchronous>, transform_indices = @transform_6, window_bounds = array<i64: 16, 144>}, {pipeline_mode = #tpu.pipeline_mode<synchronous>, transform_indices = @transform_7, window_bounds = array<i64: 16, 1>}, {pipeline_mode = #tpu.pipeline_mode<synchronous>, transform_indices = @transform_8, window_bounds = array<i64: 8, 16>}, {pipeline_mode = #tpu.pipeline_mode<synchronous>, transform_indices = @transform_9, window_bounds = array<i64: 8, 1>}, {pipeline_mode = #tpu.pipeline_mode<synchronous>, transform_indices = @transform_10, window_bounds = array<i64: 16, 144>}, {pipeline_mode = #tpu.pipeline_mode<synchronous>, transform_indices = @transform_11, window_bounds = array<i64: 16, 1>}, {pipeline_mode = #tpu.pipeline_mode<synchronous>, transform_indices = @transform_12, window_bounds = array<i64: 8, 16>}, {pipeline_mode = #tpu.pipeline_mode<synchronous>, transform_indices = @transform_13, window_bounds = array<i64: 8, 1>}, {pipeline_mode = #tpu.pipeline_mode<synchronous>, transform_indices = @transform_14, window_bounds = array<i64: 16, 32>}, {pipeline_mode = #tpu.pipeline_mode<synchronous>, transform_indices = @transform_15, window_bounds = array<i64: 16, 1>}, {pipeline_mode = #tpu.pipeline_mode<synchronous>, transform_indices = @transform_16, window_bounds = array<i64: 128, 72>}, {pipeline_mode = #tpu.pipeline_mode<synchronous>, transform_indices = @transform_17, window_bounds = array<i64: 128, 1>}, {pipeline_mode = #tpu.pipeline_mode<synchronous>, transform_indices = @transform_18, window_bounds = array<i64: 32, 1152>}, {pipeline_mode = #tpu.pipeline_mode<synchronous>, transform_indices = @transform_19, window_bounds = array<i64: 32, 1>}, {transform_indices = @transform_20, window_bounds = array<i64: 1, 16, 256>}, {transform_indices = @transform_21, window_bounds = array<i64: 1, 8, 256>}, {transform_indices = @transform_22, window_bounds = array<i64: 1, 8, 256>}]} {
    %c0 = arith.constant 0 : index
    %c0_0 = arith.constant 0 : index
    %c0_1 = arith.constant 0 : index
    %0 = vector.load %arg2[%c0, %c0_0, %c0_1] : memref<1x16x256xf32, #tpu.memory_space<vmem>>, vector<1x16x256xf32>
    %1 = vector.shape_cast %0 : vector<1x16x256xf32> to vector<16x256xf32>
    %c0_2 = arith.constant 0 : index
    %c0_3 = arith.constant 0 : index
    %c0_4 = arith.constant 0 : index
    %2 = vector.load %arg3[%c0_2, %c0_3, %c0_4] : memref<1x16x256xf32, #tpu.memory_space<vmem>>, vector<1x16x256xf32>
    %3 = vector.shape_cast %2 : vector<1x16x256xf32> to vector<16x256xf32>
    %c0_5 = arith.constant 0 : index
    %c0_6 = arith.constant 0 : index
    %c0_7 = arith.constant 0 : index
    %4 = vector.load %arg4[%c0_5, %c0_6, %c0_7] : memref<1x8x256xf32, #tpu.memory_space<vmem>>, vector<1x8x256xf32>
    %5 = vector.shape_cast %4 : vector<1x8x256xf32> to vector<8x256xf32>
    %6 = arith.addf %1, %3 : vector<16x256xf32>
    %c17_i32 = arith.constant 17 : i32
    %7 = tpu.dynamic_rotate %6 by %c17_i32 dim 1 : vector<16x256xf32>, i32 -> vector<16x256xf32>
    %c0_8 = arith.constant 0 : index
    %c0_9 = arith.constant 0 : index
    %8 = vector.load %arg1[%c0_8, %c0_9] : memref<9x256xf32, #tpu.memory_space<vmem>>, vector<1x256xf32>
    %9 = vector.broadcast %8 : vector<1x256xf32> to vector<16x256xf32>
    %10 = arith.mulf %7, %9 : vector<16x256xf32>
    %c16_i32 = arith.constant 16 : i32
    %11 = tpu.dynamic_rotate %6 by %c16_i32 dim 1 : vector<16x256xf32>, i32 -> vector<16x256xf32>
    %c1 = arith.constant 1 : index
    %c0_10 = arith.constant 0 : index
    %12 = vector.load %arg1[%c1, %c0_10] : memref<9x256xf32, #tpu.memory_space<vmem>>, vector<1x256xf32>
    %13 = vector.broadcast %12 : vector<1x256xf32> to vector<16x256xf32>
    %14 = arith.mulf %11, %13 : vector<16x256xf32>
    %c15_i32 = arith.constant 15 : i32
    %15 = tpu.dynamic_rotate %6 by %c15_i32 dim 1 : vector<16x256xf32>, i32 -> vector<16x256xf32>
    %c2 = arith.constant 2 : index
    %c0_11 = arith.constant 0 : index
    %16 = vector.load %arg1[%c2, %c0_11] : memref<9x256xf32, #tpu.memory_space<vmem>>, vector<1x256xf32>
    %17 = vector.broadcast %16 : vector<1x256xf32> to vector<16x256xf32>
    %18 = arith.mulf %15, %17 : vector<16x256xf32>
    %c1_i32 = arith.constant 1 : i32
    %19 = tpu.dynamic_rotate %6 by %c1_i32 dim 1 : vector<16x256xf32>, i32 -> vector<16x256xf32>
    %c3 = arith.constant 3 : index
    %c0_12 = arith.constant 0 : index
    %20 = vector.load %arg1[%c3, %c0_12] : memref<9x256xf32, #tpu.memory_space<vmem>>, vector<1x256xf32>
    %21 = vector.broadcast %20 : vector<1x256xf32> to vector<16x256xf32>
    %22 = arith.mulf %19, %21 : vector<16x256xf32>
    %c255_i32 = arith.constant 255 : i32
    %23 = tpu.dynamic_rotate %6 by %c255_i32 dim 1 : vector<16x256xf32>, i32 -> vector<16x256xf32>
    %c5 = arith.constant 5 : index
    %c0_13 = arith.constant 0 : index
    %24 = vector.load %arg1[%c5, %c0_13] : memref<9x256xf32, #tpu.memory_space<vmem>>, vector<1x256xf32>
    %25 = vector.broadcast %24 : vector<1x256xf32> to vector<16x256xf32>
    %26 = arith.mulf %23, %25 : vector<16x256xf32>
    %c241_i32 = arith.constant 241 : i32
    %27 = tpu.dynamic_rotate %6 by %c241_i32 dim 1 : vector<16x256xf32>, i32 -> vector<16x256xf32>
    %c6 = arith.constant 6 : index
    %c0_14 = arith.constant 0 : index
    %28 = vector.load %arg1[%c6, %c0_14] : memref<9x256xf32, #tpu.memory_space<vmem>>, vector<1x256xf32>
    %29 = vector.broadcast %28 : vector<1x256xf32> to vector<16x256xf32>
    %30 = arith.mulf %27, %29 : vector<16x256xf32>
    %c240_i32 = arith.constant 240 : i32
    %31 = tpu.dynamic_rotate %6 by %c240_i32 dim 1 : vector<16x256xf32>, i32 -> vector<16x256xf32>
    %c7 = arith.constant 7 : index
    %c0_15 = arith.constant 0 : index
    %32 = vector.load %arg1[%c7, %c0_15] : memref<9x256xf32, #tpu.memory_space<vmem>>, vector<1x256xf32>
    %33 = vector.broadcast %32 : vector<1x256xf32> to vector<16x256xf32>
    %34 = arith.mulf %31, %33 : vector<16x256xf32>
    %c239_i32 = arith.constant 239 : i32
    %35 = tpu.dynamic_rotate %6 by %c239_i32 dim 1 : vector<16x256xf32>, i32 -> vector<16x256xf32>
    %c8 = arith.constant 8 : index
    %c0_16 = arith.constant 0 : index
    %36 = vector.load %arg1[%c8, %c0_16] : memref<9x256xf32, #tpu.memory_space<vmem>>, vector<1x256xf32>
    %37 = vector.broadcast %36 : vector<1x256xf32> to vector<16x256xf32>
    %38 = arith.mulf %35, %37 : vector<16x256xf32>
    %39 = tpu.concatenate %10, %14, %18, %22, %6, %26, %30, %34, %38 in 0 : vector<16x256xf32>, vector<16x256xf32>, vector<16x256xf32>, vector<16x256xf32>, vector<16x256xf32>, vector<16x256xf32>, vector<16x256xf32>, vector<16x256xf32>, vector<16x256xf32> -> vector<144x256xf32>
    %c0_17 = arith.constant 0 : index
    %c0_18 = arith.constant 0 : index
    %40 = vector.load %arg5[%c0_17, %c0_18] : memref<16x144xf32, #tpu.memory_space<vmem>>, vector<16x144xf32>
    %cst = arith.constant dense<0.000000e+00> : vector<16x256xf32>
    %41 = tpu.matmul %40, %39, %cst {dimension_numbers = #tpu.dot_dimension_numbers<[1], [0], [0], [1], [0, 0, 1, 1], [], []>} : vector<16x144xf32>, vector<144x256xf32>, vector<16x256xf32> -> vector<16x256xf32>
    %c0_19 = arith.constant 0 : index
    %c0_20 = arith.constant 0 : index
    %42 = vector.load %arg6[%c0_19, %c0_20] : memref<16x1xf32, #tpu.memory_space<vmem>>, vector<16x1xf32>
    %43 = vector.broadcast %42 : vector<16x1xf32> to vector<16x256xf32>
    %44 = arith.addf %41, %43 : vector<16x256xf32>
    %cst_21 = arith.constant 0.000000e+00 : f32
    %45 = vector.broadcast %cst_21 : f32 to vector<16x256xf32>
    %46 = arith.maximumf %44, %45 : vector<16x256xf32>
    %c17_i32_22 = arith.constant 17 : i32
    %47 = tpu.dynamic_rotate %46 by %c17_i32_22 dim 1 : vector<16x256xf32>, i32 -> vector<16x256xf32>
    %c0_23 = arith.constant 0 : index
    %c0_24 = arith.constant 0 : index
    %48 = vector.load %arg1[%c0_23, %c0_24] : memref<9x256xf32, #tpu.memory_space<vmem>>, vector<1x256xf32>
    %49 = vector.broadcast %48 : vector<1x256xf32> to vector<16x256xf32>
    %50 = arith.mulf %47, %49 : vector<16x256xf32>
    %c16_i32_25 = arith.constant 16 : i32
    %51 = tpu.dynamic_rotate %46 by %c16_i32_25 dim 1 : vector<16x256xf32>, i32 -> vector<16x256xf32>
    %c1_26 = arith.constant 1 : index
    %c0_27 = arith.constant 0 : index
    %52 = vector.load %arg1[%c1_26, %c0_27] : memref<9x256xf32, #tpu.memory_space<vmem>>, vector<1x256xf32>
    %53 = vector.broadcast %52 : vector<1x256xf32> to vector<16x256xf32>
    %54 = arith.mulf %51, %53 : vector<16x256xf32>
    %c15_i32_28 = arith.constant 15 : i32
    %55 = tpu.dynamic_rotate %46 by %c15_i32_28 dim 1 : vector<16x256xf32>, i32 -> vector<16x256xf32>
    %c2_29 = arith.constant 2 : index
    %c0_30 = arith.constant 0 : index
    %56 = vector.load %arg1[%c2_29, %c0_30] : memref<9x256xf32, #tpu.memory_space<vmem>>, vector<1x256xf32>
    %57 = vector.broadcast %56 : vector<1x256xf32> to vector<16x256xf32>
    %58 = arith.mulf %55, %57 : vector<16x256xf32>
    %c1_i32_31 = arith.constant 1 : i32
    %59 = tpu.dynamic_rotate %46 by %c1_i32_31 dim 1 : vector<16x256xf32>, i32 -> vector<16x256xf32>
    %c3_32 = arith.constant 3 : index
    %c0_33 = arith.constant 0 : index
    %60 = vector.load %arg1[%c3_32, %c0_33] : memref<9x256xf32, #tpu.memory_space<vmem>>, vector<1x256xf32>
    %61 = vector.broadcast %60 : vector<1x256xf32> to vector<16x256xf32>
    %62 = arith.mulf %59, %61 : vector<16x256xf32>
    %c255_i32_34 = arith.constant 255 : i32
    %63 = tpu.dynamic_rotate %46 by %c255_i32_34 dim 1 : vector<16x256xf32>, i32 -> vector<16x256xf32>
    %c5_35 = arith.constant 5 : index
    %c0_36 = arith.constant 0 : index
    %64 = vector.load %arg1[%c5_35, %c0_36] : memref<9x256xf32, #tpu.memory_space<vmem>>, vector<1x256xf32>
    %65 = vector.broadcast %64 : vector<1x256xf32> to vector<16x256xf32>
    %66 = arith.mulf %63, %65 : vector<16x256xf32>
    %c241_i32_37 = arith.constant 241 : i32
    %67 = tpu.dynamic_rotate %46 by %c241_i32_37 dim 1 : vector<16x256xf32>, i32 -> vector<16x256xf32>
    %c6_38 = arith.constant 6 : index
    %c0_39 = arith.constant 0 : index
    %68 = vector.load %arg1[%c6_38, %c0_39] : memref<9x256xf32, #tpu.memory_space<vmem>>, vector<1x256xf32>
    %69 = vector.broadcast %68 : vector<1x256xf32> to vector<16x256xf32>
    %70 = arith.mulf %67, %69 : vector<16x256xf32>
    %c240_i32_40 = arith.constant 240 : i32
    %71 = tpu.dynamic_rotate %46 by %c240_i32_40 dim 1 : vector<16x256xf32>, i32 -> vector<16x256xf32>
    %c7_41 = arith.constant 7 : index
    %c0_42 = arith.constant 0 : index
    %72 = vector.load %arg1[%c7_41, %c0_42] : memref<9x256xf32, #tpu.memory_space<vmem>>, vector<1x256xf32>
    %73 = vector.broadcast %72 : vector<1x256xf32> to vector<16x256xf32>
    %74 = arith.mulf %71, %73 : vector<16x256xf32>
    %c239_i32_43 = arith.constant 239 : i32
    %75 = tpu.dynamic_rotate %46 by %c239_i32_43 dim 1 : vector<16x256xf32>, i32 -> vector<16x256xf32>
    %c8_44 = arith.constant 8 : index
    %c0_45 = arith.constant 0 : index
    %76 = vector.load %arg1[%c8_44, %c0_45] : memref<9x256xf32, #tpu.memory_space<vmem>>, vector<1x256xf32>
    %77 = vector.broadcast %76 : vector<1x256xf32> to vector<16x256xf32>
    %78 = arith.mulf %75, %77 : vector<16x256xf32>
    %79 = tpu.concatenate %50, %54, %58, %62, %46, %66, %70, %74, %78 in 0 : vector<16x256xf32>, vector<16x256xf32>, vector<16x256xf32>, vector<16x256xf32>, vector<16x256xf32>, vector<16x256xf32>, vector<16x256xf32>, vector<16x256xf32>, vector<16x256xf32> -> vector<144x256xf32>
    %c0_46 = arith.constant 0 : index
    %c0_47 = arith.constant 0 : index
    %80 = vector.load %arg7[%c0_46, %c0_47] : memref<16x144xf32, #tpu.memory_space<vmem>>, vector<16x144xf32>
    %cst_48 = arith.constant dense<0.000000e+00> : vector<16x256xf32>
    %81 = tpu.matmul %80, %79, %cst_48 {dimension_numbers = #tpu.dot_dimension_numbers<[1], [0], [0], [1], [0, 0, 1, 1], [], []>} : vector<16x144xf32>, vector<144x256xf32>, vector<16x256xf32> -> vector<16x256xf32>
    %c0_49 = arith.constant 0 : index
    %c0_50 = arith.constant 0 : index
    %82 = vector.load %arg8[%c0_49, %c0_50] : memref<16x1xf32, #tpu.memory_space<vmem>>, vector<16x1xf32>
    %83 = vector.broadcast %82 : vector<16x1xf32> to vector<16x256xf32>
    %84 = arith.addf %81, %83 : vector<16x256xf32>
    %cst_51 = arith.constant 0.000000e+00 : f32
    %85 = vector.broadcast %cst_51 : f32 to vector<16x256xf32>
    %86 = arith.maximumf %84, %85 : vector<16x256xf32>
    %c0_52 = arith.constant 0 : index
    %c0_53 = arith.constant 0 : index
    %87 = vector.load %arg9[%c0_52, %c0_53] : memref<8x16xf32, #tpu.memory_space<vmem>>, vector<8x16xf32>
    %cst_54 = arith.constant dense<0.000000e+00> : vector<8x256xf32>
    %88 = tpu.matmul %87, %86, %cst_54 {dimension_numbers = #tpu.dot_dimension_numbers<[1], [0], [0], [1], [0, 0, 1, 1], [], []>} : vector<8x16xf32>, vector<16x256xf32>, vector<8x256xf32> -> vector<8x256xf32>
    %c0_55 = arith.constant 0 : index
    %c0_56 = arith.constant 0 : index
    %89 = vector.load %arg10[%c0_55, %c0_56] : memref<8x1xf32, #tpu.memory_space<vmem>>, vector<8x1xf32>
    %90 = vector.broadcast %89 : vector<8x1xf32> to vector<8x256xf32>
    %91 = arith.addf %88, %90 : vector<8x256xf32>
    %92 = math.tanh %91 : vector<8x256xf32>
    %c0_57 = arith.constant 0 : index
    %c0_58 = arith.constant 0 : index
    %c0_59 = arith.constant 0 : index
    %93 = vector.load %arg22[%c0_57, %c0_58, %c0_59] : memref<1x8x256xf32, #tpu.memory_space<vmem>>, vector<1x8x256xf32>
    %94 = vector.shape_cast %93 : vector<1x8x256xf32> to vector<8x256xf32>
    %95 = vector.shape_cast %92 : vector<8x256xf32> to vector<1x8x256xf32>
    tpu.vector_store %arg22[%c0_57, %c0_58, %c0_59], %95 {strides = array<i32>} : memref<1x8x256xf32, #tpu.memory_space<vmem>>, vector<1x8x256xf32>,
    %c17_i32_60 = arith.constant 17 : i32
    %96 = tpu.dynamic_rotate %1 by %c17_i32_60 dim 1 : vector<16x256xf32>, i32 -> vector<16x256xf32>
    %c0_61 = arith.constant 0 : index
    %c0_62 = arith.constant 0 : index
    %97 = vector.load %arg1[%c0_61, %c0_62] : memref<9x256xf32, #tpu.memory_space<vmem>>, vector<1x256xf32>
    %98 = vector.broadcast %97 : vector<1x256xf32> to vector<16x256xf32>
    %99 = arith.mulf %96, %98 : vector<16x256xf32>
    %c16_i32_63 = arith.constant 16 : i32
    %100 = tpu.dynamic_rotate %1 by %c16_i32_63 dim 1 : vector<16x256xf32>, i32 -> vector<16x256xf32>
    %c1_64 = arith.constant 1 : index
    %c0_65 = arith.constant 0 : index
    %101 = vector.load %arg1[%c1_64, %c0_65] : memref<9x256xf32, #tpu.memory_space<vmem>>, vector<1x256xf32>
    %102 = vector.broadcast %101 : vector<1x256xf32> to vector<16x256xf32>
    %103 = arith.mulf %100, %102 : vector<16x256xf32>
    %c15_i32_66 = arith.constant 15 : i32
    %104 = tpu.dynamic_rotate %1 by %c15_i32_66 dim 1 : vector<16x256xf32>, i32 -> vector<16x256xf32>
    %c2_67 = arith.constant 2 : index
    %c0_68 = arith.constant 0 : index
    %105 = vector.load %arg1[%c2_67, %c0_68] : memref<9x256xf32, #tpu.memory_space<vmem>>, vector<1x256xf32>
    %106 = vector.broadcast %105 : vector<1x256xf32> to vector<16x256xf32>
    %107 = arith.mulf %104, %106 : vector<16x256xf32>
    %c1_i32_69 = arith.constant 1 : i32
    %108 = tpu.dynamic_rotate %1 by %c1_i32_69 dim 1 : vector<16x256xf32>, i32 -> vector<16x256xf32>
    %c3_70 = arith.constant 3 : index
    %c0_71 = arith.constant 0 : index
    %109 = vector.load %arg1[%c3_70, %c0_71] : memref<9x256xf32, #tpu.memory_space<vmem>>, vector<1x256xf32>
    %110 = vector.broadcast %109 : vector<1x256xf32> to vector<16x256xf32>
    %111 = arith.mulf %108, %110 : vector<16x256xf32>
    %c255_i32_72 = arith.constant 255 : i32
    %112 = tpu.dynamic_rotate %1 by %c255_i32_72 dim 1 : vector<16x256xf32>, i32 -> vector<16x256xf32>
    %c5_73 = arith.constant 5 : index
    %c0_74 = arith.constant 0 : index
    %113 = vector.load %arg1[%c5_73, %c0_74] : memref<9x256xf32, #tpu.memory_space<vmem>>, vector<1x256xf32>
    %114 = vector.broadcast %113 : vector<1x256xf32> to vector<16x256xf32>
    %115 = arith.mulf %112, %114 : vector<16x256xf32>
    %c241_i32_75 = arith.constant 241 : i32
    %116 = tpu.dynamic_rotate %1 by %c241_i32_75 dim 1 : vector<16x256xf32>, i32 -> vector<16x256xf32>
    %c6_76 = arith.constant 6 : index
    %c0_77 = arith.constant 0 : index
    %117 = vector.load %arg1[%c6_76, %c0_77] : memref<9x256xf32, #tpu.memory_space<vmem>>, vector<1x256xf32>
    %118 = vector.broadcast %117 : vector<1x256xf32> to vector<16x256xf32>
    %119 = arith.mulf %116, %118 : vector<16x256xf32>
    %c240_i32_78 = arith.constant 240 : i32
    %120 = tpu.dynamic_rotate %1 by %c240_i32_78 dim 1 : vector<16x256xf32>, i32 -> vector<16x256xf32>
    %c7_79 = arith.constant 7 : index
    %c0_80 = arith.constant 0 : index
    %121 = vector.load %arg1[%c7_79, %c0_80] : memref<9x256xf32, #tpu.memory_space<vmem>>, vector<1x256xf32>
    %122 = vector.broadcast %121 : vector<1x256xf32> to vector<16x256xf32>
    %123 = arith.mulf %120, %122 : vector<16x256xf32>
    %c239_i32_81 = arith.constant 239 : i32
    %124 = tpu.dynamic_rotate %1 by %c239_i32_81 dim 1 : vector<16x256xf32>, i32 -> vector<16x256xf32>
    %c8_82 = arith.constant 8 : index
    %c0_83 = arith.constant 0 : index
    %125 = vector.load %arg1[%c8_82, %c0_83] : memref<9x256xf32, #tpu.memory_space<vmem>>, vector<1x256xf32>
    %126 = vector.broadcast %125 : vector<1x256xf32> to vector<16x256xf32>
    %127 = arith.mulf %124, %126 : vector<16x256xf32>
    %128 = tpu.concatenate %99, %103, %107, %111, %1, %115, %119, %123, %127 in 0 : vector<16x256xf32>, vector<16x256xf32>, vector<16x256xf32>, vector<16x256xf32>, vector<16x256xf32>, vector<16x256xf32>, vector<16x256xf32>, vector<16x256xf32>, vector<16x256xf32> -> vector<144x256xf32>
    %c0_84 = arith.constant 0 : index
    %c0_85 = arith.constant 0 : index
    %129 = vector.load %arg11[%c0_84, %c0_85] : memref<16x144xf32, #tpu.memory_space<vmem>>, vector<16x144xf32>
    %cst_86 = arith.constant dense<0.000000e+00> : vector<16x256xf32>
    %130 = tpu.matmul %129, %128, %cst_86 {dimension_numbers = #tpu.dot_dimension_numbers<[1], [0], [0], [1], [0, 0, 1, 1], [], []>} : vector<16x144xf32>, vector<144x256xf32>, vector<16x256xf32> -> vector<16x256xf32>
    %c0_87 = arith.constant 0 : index
    %c0_88 = arith.constant 0 : index
    %131 = vector.load %arg12[%c0_87, %c0_88] : memref<16x1xf32, #tpu.memory_space<vmem>>, vector<16x1xf32>
    %132 = vector.broadcast %131 : vector<16x1xf32> to vector<16x256xf32>
    %133 = arith.addf %130, %132 : vector<16x256xf32>
    %cst_89 = arith.constant 0.000000e+00 : f32
    %134 = vector.broadcast %cst_89 : f32 to vector<16x256xf32>
    %135 = arith.maximumf %133, %134 : vector<16x256xf32>
    %c0_90 = arith.constant 0 : index
    %c0_91 = arith.constant 0 : index
    %136 = vector.load %arg13[%c0_90, %c0_91] : memref<8x16xf32, #tpu.memory_space<vmem>>, vector<8x16xf32>
    %cst_92 = arith.constant dense<0.000000e+00> : vector<8x256xf32>
    %137 = tpu.matmul %136, %135, %cst_92 {dimension_numbers = #tpu.dot_dimension_numbers<[1], [0], [0], [1], [0, 0, 1, 1], [], []>} : vector<8x16xf32>, vector<16x256xf32>, vector<8x256xf32> -> vector<8x256xf32>
    %c0_93 = arith.constant 0 : index
    %c0_94 = arith.constant 0 : index
    %138 = vector.load %arg14[%c0_93, %c0_94] : memref<8x1xf32, #tpu.memory_space<vmem>>, vector<8x1xf32>
    %139 = vector.broadcast %138 : vector<8x1xf32> to vector<8x256xf32>
    %140 = arith.addf %137, %139 : vector<8x256xf32>
    %141 = math.tanh %140 : vector<8x256xf32>
    %c0_95 = arith.constant 0 : index
    %c0_96 = arith.constant 0 : index
    %c0_97 = arith.constant 0 : index
    %142 = vector.load %arg23[%c0_95, %c0_96, %c0_97] : memref<1x8x256xf32, #tpu.memory_space<vmem>>, vector<1x8x256xf32>
    %143 = vector.shape_cast %142 : vector<1x8x256xf32> to vector<8x256xf32>
    %144 = vector.shape_cast %141 : vector<8x256xf32> to vector<1x8x256xf32>
    tpu.vector_store %arg23[%c0_95, %c0_96, %c0_97], %144 {strides = array<i32>} : memref<1x8x256xf32, #tpu.memory_space<vmem>>, vector<1x8x256xf32>,
    %145 = tpu.concatenate %86, %135 in 0 : vector<16x256xf32>, vector<16x256xf32> -> vector<32x256xf32>
    %c0_98 = arith.constant 0 : index
    %c0_99 = arith.constant 0 : index
    %146 = vector.load %arg15[%c0_98, %c0_99] : memref<16x32xf32, #tpu.memory_space<vmem>>, vector<16x32xf32>
    %cst_100 = arith.constant dense<0.000000e+00> : vector<16x256xf32>
    %147 = tpu.matmul %146, %145, %cst_100 {dimension_numbers = #tpu.dot_dimension_numbers<[1], [0], [0], [1], [0, 0, 1, 1], [], []>} : vector<16x32xf32>, vector<32x256xf32>, vector<16x256xf32> -> vector<16x256xf32>
    %c0_101 = arith.constant 0 : index
    %c0_102 = arith.constant 0 : index
    %148 = vector.load %arg16[%c0_101, %c0_102] : memref<16x1xf32, #tpu.memory_space<vmem>>, vector<16x1xf32>
    %149 = vector.broadcast %148 : vector<16x1xf32> to vector<16x256xf32>
    %150 = arith.addf %147, %149 : vector<16x256xf32>
    %cst_103 = arith.constant 0.000000e+00 : f32
    %151 = vector.broadcast %cst_103 : f32 to vector<16x256xf32>
    %152 = arith.maximumf %150, %151 : vector<16x256xf32>
    %cst_104 = arith.constant dense<0.000000e+00> : vector<16xf32>
    %153 = vector.multi_reduction <add>, %152, %cst_104 [1] : vector<16x256xf32> to vector<16xf32>
    %154 = vector.shape_cast %153 : vector<16xf32> to vector<16x1xf32>
    %cst_105 = arith.constant 2.560000e+02 : f32
    %155 = vector.broadcast %cst_105 : f32 to vector<16x1xf32>
    %156 = arith.divf %154, %155 : vector<16x1xf32>
    %157 = vector.broadcast %156 : vector<16x1xf32> to vector<16x256xf32>
    %158 = arith.subf %152, %157 : vector<16x256xf32>
    %159 = arith.mulf %158, %158 : vector<16x256xf32>
    %cst_106 = arith.constant dense<0.000000e+00> : vector<16xf32>
    %160 = vector.multi_reduction <add>, %159, %cst_106 [1] : vector<16x256xf32> to vector<16xf32>
    %161 = vector.shape_cast %160 : vector<16xf32> to vector<16x1xf32>
    %cst_107 = arith.constant 2.560000e+02 : f32
    %162 = vector.broadcast %cst_107 : f32 to vector<16x1xf32>
    %163 = arith.divf %161, %162 : vector<16x1xf32>
    %164 = vector.broadcast %156 : vector<16x1xf32> to vector<16x256xf32>
    %165 = arith.subf %152, %164 : vector<16x256xf32>
    %cst_108 = arith.constant 9.99999974E-6 : f32
    %166 = vector.broadcast %cst_108 : f32 to vector<16x1xf32>
    %167 = arith.addf %163, %166 : vector<16x1xf32>
    %168 = math.rsqrt %167 : vector<16x1xf32>
    %169 = vector.broadcast %168 : vector<16x1xf32> to vector<16x256xf32>
    %170 = arith.mulf %165, %169 : vector<16x256xf32>
    %c17_i32_109 = arith.constant 17 : i32
    %171 = tpu.dynamic_rotate %5 by %c17_i32_109 dim 1 : vector<8x256xf32>, i32 -> vector<8x256xf32>
    %c0_110 = arith.constant 0 : index
    %c0_111 = arith.constant 0 : index
    %172 = vector.load %arg1[%c0_110, %c0_111] : memref<9x256xf32, #tpu.memory_space<vmem>>, vector<1x256xf32>
    %173 = vector.broadcast %172 : vector<1x256xf32> to vector<8x256xf32>
    %174 = arith.mulf %171, %173 : vector<8x256xf32>
    %c16_i32_112 = arith.constant 16 : i32
    %175 = tpu.dynamic_rotate %5 by %c16_i32_112 dim 1 : vector<8x256xf32>, i32 -> vector<8x256xf32>
    %c1_113 = arith.constant 1 : index
    %c0_114 = arith.constant 0 : index
    %176 = vector.load %arg1[%c1_113, %c0_114] : memref<9x256xf32, #tpu.memory_space<vmem>>, vector<1x256xf32>
    %177 = vector.broadcast %176 : vector<1x256xf32> to vector<8x256xf32>
    %178 = arith.mulf %175, %177 : vector<8x256xf32>
    %c15_i32_115 = arith.constant 15 : i32
    %179 = tpu.dynamic_rotate %5 by %c15_i32_115 dim 1 : vector<8x256xf32>, i32 -> vector<8x256xf32>
    %c2_116 = arith.constant 2 : index
    %c0_117 = arith.constant 0 : index
    %180 = vector.load %arg1[%c2_116, %c0_117] : memref<9x256xf32, #tpu.memory_space<vmem>>, vector<1x256xf32>
    %181 = vector.broadcast %180 : vector<1x256xf32> to vector<8x256xf32>
    %182 = arith.mulf %179, %181 : vector<8x256xf32>
    %c1_i32_118 = arith.constant 1 : i32
    %183 = tpu.dynamic_rotate %5 by %c1_i32_118 dim 1 : vector<8x256xf32>, i32 -> vector<8x256xf32>
    %c3_119 = arith.constant 3 : index
    %c0_120 = arith.constant 0 : index
    %184 = vector.load %arg1[%c3_119, %c0_120] : memref<9x256xf32, #tpu.memory_space<vmem>>, vector<1x256xf32>
    %185 = vector.broadcast %184 : vector<1x256xf32> to vector<8x256xf32>
    %186 = arith.mulf %183, %185 : vector<8x256xf32>
    %c255_i32_121 = arith.constant 255 : i32
    %187 = tpu.dynamic_rotate %5 by %c255_i32_121 dim 1 : vector<8x256xf32>, i32 -> vector<8x256xf32>
    %c5_122 = arith.constant 5 : index
    %c0_123 = arith.constant 0 : index
    %188 = vector.load %arg1[%c5_122, %c0_123] : memref<9x256xf32, #tpu.memory_space<vmem>>, vector<1x256xf32>
    %189 = vector.broadcast %188 : vector<1x256xf32> to vector<8x256xf32>
    %190 = arith.mulf %187, %189 : vector<8x256xf32>
    %c241_i32_124 = arith.constant 241 : i32
    %191 = tpu.dynamic_rotate %5 by %c241_i32_124 dim 1 : vector<8x256xf32>, i32 -> vector<8x256xf32>
    %c6_125 = arith.constant 6 : index
    %c0_126 = arith.constant 0 : index
    %192 = vector.load %arg1[%c6_125, %c0_126] : memref<9x256xf32, #tpu.memory_space<vmem>>, vector<1x256xf32>
    %193 = vector.broadcast %192 : vector<1x256xf32> to vector<8x256xf32>
    %194 = arith.mulf %191, %193 : vector<8x256xf32>
    %c240_i32_127 = arith.constant 240 : i32
    %195 = tpu.dynamic_rotate %5 by %c240_i32_127 dim 1 : vector<8x256xf32>, i32 -> vector<8x256xf32>
    %c7_128 = arith.constant 7 : index
    %c0_129 = arith.constant 0 : index
    %196 = vector.load %arg1[%c7_128, %c0_129] : memref<9x256xf32, #tpu.memory_space<vmem>>, vector<1x256xf32>
    %197 = vector.broadcast %196 : vector<1x256xf32> to vector<8x256xf32>
    %198 = arith.mulf %195, %197 : vector<8x256xf32>
    %c239_i32_130 = arith.constant 239 : i32
    %199 = tpu.dynamic_rotate %5 by %c239_i32_130 dim 1 : vector<8x256xf32>, i32 -> vector<8x256xf32>
    %c8_131 = arith.constant 8 : index
    %c0_132 = arith.constant 0 : index
    %200 = vector.load %arg1[%c8_131, %c0_132] : memref<9x256xf32, #tpu.memory_space<vmem>>, vector<1x256xf32>
    %201 = vector.broadcast %200 : vector<1x256xf32> to vector<8x256xf32>
    %202 = arith.mulf %199, %201 : vector<8x256xf32>
    %203 = tpu.concatenate %174, %178, %182, %186, %5, %190, %194, %198, %202 in 0 : vector<8x256xf32>, vector<8x256xf32>, vector<8x256xf32>, vector<8x256xf32>, vector<8x256xf32>, vector<8x256xf32>, vector<8x256xf32>, vector<8x256xf32>, vector<8x256xf32> -> vector<72x256xf32>
    %c0_133 = arith.constant 0 : index
    %c0_134 = arith.constant 0 : index
    %204 = vector.load %arg17[%c0_133, %c0_134] : memref<128x72xf32, #tpu.memory_space<vmem>>, vector<128x72xf32>
    %cst_135 = arith.constant dense<0.000000e+00> : vector<128x256xf32>
    %205 = tpu.matmul %204, %203, %cst_135 {dimension_numbers = #tpu.dot_dimension_numbers<[1], [0], [0], [1], [0, 0, 1, 1], [], []>} : vector<128x72xf32>, vector<72x256xf32>, vector<128x256xf32> -> vector<128x256xf32>
    %c0_136 = arith.constant 0 : index
    %c0_137 = arith.constant 0 : index
    %206 = vector.load %arg18[%c0_136, %c0_137] : memref<128x1xf32, #tpu.memory_space<vmem>>, vector<128x1xf32>
    %207 = vector.broadcast %206 : vector<128x1xf32> to vector<128x256xf32>
    %208 = arith.addf %205, %207 : vector<128x256xf32>
    %cst_138 = arith.constant 0.000000e+00 : f32
    %209 = vector.broadcast %cst_138 : f32 to vector<128x256xf32>
    %210 = arith.maximumf %208, %209 : vector<128x256xf32>
    %c17_i32_139 = arith.constant 17 : i32
    %211 = tpu.dynamic_rotate %210 by %c17_i32_139 dim 1 : vector<128x256xf32>, i32 -> vector<128x256xf32>
    %c0_140 = arith.constant 0 : index
    %c0_141 = arith.constant 0 : index
    %212 = vector.load %arg1[%c0_140, %c0_141] : memref<9x256xf32, #tpu.memory_space<vmem>>, vector<1x256xf32>
    %213 = vector.broadcast %212 : vector<1x256xf32> to vector<128x256xf32>
    %214 = arith.mulf %211, %213 : vector<128x256xf32>
    %c16_i32_142 = arith.constant 16 : i32
    %215 = tpu.dynamic_rotate %210 by %c16_i32_142 dim 1 : vector<128x256xf32>, i32 -> vector<128x256xf32>
    %c1_143 = arith.constant 1 : index
    %c0_144 = arith.constant 0 : index
    %216 = vector.load %arg1[%c1_143, %c0_144] : memref<9x256xf32, #tpu.memory_space<vmem>>, vector<1x256xf32>
    %217 = vector.broadcast %216 : vector<1x256xf32> to vector<128x256xf32>
    %218 = arith.mulf %215, %217 : vector<128x256xf32>
    %c15_i32_145 = arith.constant 15 : i32
    %219 = tpu.dynamic_rotate %210 by %c15_i32_145 dim 1 : vector<128x256xf32>, i32 -> vector<128x256xf32>
    %c2_146 = arith.constant 2 : index
    %c0_147 = arith.constant 0 : index
    %220 = vector.load %arg1[%c2_146, %c0_147] : memref<9x256xf32, #tpu.memory_space<vmem>>, vector<1x256xf32>
    %221 = vector.broadcast %220 : vector<1x256xf32> to vector<128x256xf32>
    %222 = arith.mulf %219, %221 : vector<128x256xf32>
    %c1_i32_148 = arith.constant 1 : i32
    %223 = tpu.dynamic_rotate %210 by %c1_i32_148 dim 1 : vector<128x256xf32>, i32 -> vector<128x256xf32>
    %c3_149 = arith.constant 3 : index
    %c0_150 = arith.constant 0 : index
    %224 = vector.load %arg1[%c3_149, %c0_150] : memref<9x256xf32, #tpu.memory_space<vmem>>, vector<1x256xf32>
    %225 = vector.broadcast %224 : vector<1x256xf32> to vector<128x256xf32>
    %226 = arith.mulf %223, %225 : vector<128x256xf32>
    %c255_i32_151 = arith.constant 255 : i32
    %227 = tpu.dynamic_rotate %210 by %c255_i32_151 dim 1 : vector<128x256xf32>, i32 -> vector<128x256xf32>
    %c5_152 = arith.constant 5 : index
    %c0_153 = arith.constant 0 : index
    %228 = vector.load %arg1[%c5_152, %c0_153] : memref<9x256xf32, #tpu.memory_space<vmem>>, vector<1x256xf32>
    %229 = vector.broadcast %228 : vector<1x256xf32> to vector<128x256xf32>
    %230 = arith.mulf %227, %229 : vector<128x256xf32>
    %c241_i32_154 = arith.constant 241 : i32
    %231 = tpu.dynamic_rotate %210 by %c241_i32_154 dim 1 : vector<128x256xf32>, i32 -> vector<128x256xf32>
    %c6_155 = arith.constant 6 : index
    %c0_156 = arith.constant 0 : index
    %232 = vector.load %arg1[%c6_155, %c0_156] : memref<9x256xf32, #tpu.memory_space<vmem>>, vector<1x256xf32>
    %233 = vector.broadcast %232 : vector<1x256xf32> to vector<128x256xf32>
    %234 = arith.mulf %231, %233 : vector<128x256xf32>
    %c240_i32_157 = arith.constant 240 : i32
    %235 = tpu.dynamic_rotate %210 by %c240_i32_157 dim 1 : vector<128x256xf32>, i32 -> vector<128x256xf32>
    %c7_158 = arith.constant 7 : index
    %c0_159 = arith.constant 0 : index
    %236 = vector.load %arg1[%c7_158, %c0_159] : memref<9x256xf32, #tpu.memory_space<vmem>>, vector<1x256xf32>
    %237 = vector.broadcast %236 : vector<1x256xf32> to vector<128x256xf32>
    %238 = arith.mulf %235, %237 : vector<128x256xf32>
    %c239_i32_160 = arith.constant 239 : i32
    %239 = tpu.dynamic_rotate %210 by %c239_i32_160 dim 1 : vector<128x256xf32>, i32 -> vector<128x256xf32>
    %c8_161 = arith.constant 8 : index
    %c0_162 = arith.constant 0 : index
    %240 = vector.load %arg1[%c8_161, %c0_162] : memref<9x256xf32, #tpu.memory_space<vmem>>, vector<1x256xf32>
    %241 = vector.broadcast %240 : vector<1x256xf32> to vector<128x256xf32>
    %242 = arith.mulf %239, %241 : vector<128x256xf32>
    %243 = tpu.concatenate %214, %218, %222, %226, %210, %230, %234, %238, %242 in 0 : vector<128x256xf32>, vector<128x256xf32>, vector<128x256xf32>, vector<128x256xf32>, vector<128x256xf32>, vector<128x256xf32>, vector<128x256xf32>, vector<128x256xf32>, vector<128x256xf32> -> vector<1152x256xf32>
    %c0_163 = arith.constant 0 : index
    %c0_164 = arith.constant 0 : index
    %244 = vector.load %arg19[%c0_163, %c0_164] : memref<32x1152xf32, #tpu.memory_space<vmem>>, vector<32x1152xf32>
    %cst_165 = arith.constant dense<0.000000e+00> : vector<32x256xf32>
    %245 = tpu.matmul %244, %243, %cst_165 {dimension_numbers = #tpu.dot_dimension_numbers<[1], [0], [0], [1], [0, 0, 1, 1], [], []>} : vector<32x1152xf32>, vector<1152x256xf32>, vector<32x256xf32> -> vector<32x256xf32>
    %c0_166 = arith.constant 0 : index
    %c0_167 = arith.constant 0 : index
    %246 = vector.load %arg20[%c0_166, %c0_167] : memref<32x1xf32, #tpu.memory_space<vmem>>, vector<32x1xf32>
    %247 = vector.broadcast %246 : vector<32x1xf32> to vector<32x256xf32>
    %248 = arith.addf %245, %247 : vector<32x256xf32>
    %249 = vector.extract_strided_slice %248 {offsets = [0, 0], sizes = [16, 256], strides = [1, 1]} : vector<32x256xf32> to vector<16x256xf32>
    %250 = vector.extract_strided_slice %248 {offsets = [16, 0], sizes = [16, 256], strides = [1, 1]} : vector<32x256xf32> to vector<16x256xf32>
    %cst_168 = arith.constant 1.000000e+00 : f32
    %251 = vector.broadcast %cst_168 : f32 to vector<16x256xf32>
    %252 = arith.addf %251, %249 : vector<16x256xf32>
    %253 = arith.mulf %170, %252 : vector<16x256xf32>
    %254 = arith.addf %253, %250 : vector<16x256xf32>
    %c0_169 = arith.constant 0 : index
    %c0_170 = arith.constant 0 : index
    %c0_171 = arith.constant 0 : index
    %255 = vector.load %arg21[%c0_169, %c0_170, %c0_171] : memref<1x16x256xf32, #tpu.memory_space<vmem>>, vector<1x16x256xf32>
    %256 = vector.shape_cast %255 : vector<1x16x256xf32> to vector<16x256xf32>
    %257 = vector.shape_cast %254 : vector<16x256xf32> to vector<1x16x256xf32>
    tpu.vector_store %arg21[%c0_169, %c0_170, %c0_171], %257 {strides = array<i32>} : memref<1x16x256xf32, #tpu.memory_space<vmem>>, vector<1x16x256xf32>,
    return
  }
  func.func @transform_0(%arg0: i32) -> (i32, i32) {
    %c0_i32 = arith.constant 0 : i32
    %c0_i32_0 = arith.constant 0 : i32
    %c0_i32_1 = arith.constant 0 : i32
    return %c0_i32, %c0_i32_0 : i32, i32
  }
  func.func @transform_1(%arg0: i32) -> (i32, i32, i32) {
    %c0_i32 = arith.constant 0 : i32
    %c0_i32_0 = arith.constant 0 : i32
    %c0_i32_1 = arith.constant 0 : i32
    return %arg0, %c0_i32, %c0_i32_0 : i32, i32, i32
  }
  func.func @transform_2(%arg0: i32) -> (i32, i32, i32) {
    %c0_i32 = arith.constant 0 : i32
    %c0_i32_0 = arith.constant 0 : i32
    %c0_i32_1 = arith.constant 0 : i32
    return %arg0, %c0_i32, %c0_i32_0 : i32, i32, i32
  }
  func.func @transform_3(%arg0: i32) -> (i32, i32, i32) {
    %c0_i32 = arith.constant 0 : i32
    %c0_i32_0 = arith.constant 0 : i32
    %c0_i32_1 = arith.constant 0 : i32
    return %arg0, %c0_i32, %c0_i32_0 : i32, i32, i32
  }
  func.func @transform_4(%arg0: i32) -> (i32, i32) {
    %c0_i32 = arith.constant 0 : i32
    %c0_i32_0 = arith.constant 0 : i32
    %c0_i32_1 = arith.constant 0 : i32
    return %c0_i32, %c0_i32_0 : i32, i32
  }
  func.func @transform_5(%arg0: i32) -> (i32, i32) {
    %c0_i32 = arith.constant 0 : i32
    %c0_i32_0 = arith.constant 0 : i32
    %c0_i32_1 = arith.constant 0 : i32
    return %c0_i32, %c0_i32_0 : i32, i32
  }
  func.func @transform_6(%arg0: i32) -> (i32, i32) {
    %c0_i32 = arith.constant 0 : i32
    %c0_i32_0 = arith.constant 0 : i32
    %c0_i32_1 = arith.constant 0 : i32
    return %c0_i32, %c0_i32_0 : i32, i32
  }
  func.func @transform_7(%arg0: i32) -> (i32, i32) {
    %c0_i32 = arith.constant 0 : i32
    %c0_i32_0 = arith.constant 0 : i32
    %c0_i32_1 = arith.constant 0 : i32
    return %c0_i32, %c0_i32_0 : i32, i32
  }
  func.func @transform_8(%arg0: i32) -> (i32, i32) {
    %c0_i32 = arith.constant 0 : i32
    %c0_i32_0 = arith.constant 0 : i32
    %c0_i32_1 = arith.constant 0 : i32
    return %c0_i32, %c0_i32_0 : i32, i32
  }
  func.func @transform_9(%arg0: i32) -> (i32, i32) {
    %c0_i32 = arith.constant 0 : i32
    %c0_i32_0 = arith.constant 0 : i32
    %c0_i32_1 = arith.constant 0 : i32
    return %c0_i32, %c0_i32_0 : i32, i32
  }
  func.func @transform_10(%arg0: i32) -> (i32, i32) {
    %c0_i32 = arith.constant 0 : i32
    %c0_i32_0 = arith.constant 0 : i32
    %c0_i32_1 = arith.constant 0 : i32
    return %c0_i32, %c0_i32_0 : i32, i32
  }
  func.func @transform_11(%arg0: i32) -> (i32, i32) {
    %c0_i32 = arith.constant 0 : i32
    %c0_i32_0 = arith.constant 0 : i32
    %c0_i32_1 = arith.constant 0 : i32
    return %c0_i32, %c0_i32_0 : i32, i32
  }
  func.func @transform_12(%arg0: i32) -> (i32, i32) {
    %c0_i32 = arith.constant 0 : i32
    %c0_i32_0 = arith.constant 0 : i32
    %c0_i32_1 = arith.constant 0 : i32
    return %c0_i32, %c0_i32_0 : i32, i32
  }
  func.func @transform_13(%arg0: i32) -> (i32, i32) {
    %c0_i32 = arith.constant 0 : i32
    %c0_i32_0 = arith.constant 0 : i32
    %c0_i32_1 = arith.constant 0 : i32
    return %c0_i32, %c0_i32_0 : i32, i32
  }
  func.func @transform_14(%arg0: i32) -> (i32, i32) {
    %c0_i32 = arith.constant 0 : i32
    %c0_i32_0 = arith.constant 0 : i32
    %c0_i32_1 = arith.constant 0 : i32
    return %c0_i32, %c0_i32_0 : i32, i32
  }
  func.func @transform_15(%arg0: i32) -> (i32, i32) {
    %c0_i32 = arith.constant 0 : i32
    %c0_i32_0 = arith.constant 0 : i32
    %c0_i32_1 = arith.constant 0 : i32
    return %c0_i32, %c0_i32_0 : i32, i32
  }
  func.func @transform_16(%arg0: i32) -> (i32, i32) {
    %c0_i32 = arith.constant 0 : i32
    %c0_i32_0 = arith.constant 0 : i32
    %c0_i32_1 = arith.constant 0 : i32
    return %c0_i32, %c0_i32_0 : i32, i32
  }
  func.func @transform_17(%arg0: i32) -> (i32, i32) {
    %c0_i32 = arith.constant 0 : i32
    %c0_i32_0 = arith.constant 0 : i32
    %c0_i32_1 = arith.constant 0 : i32
    return %c0_i32, %c0_i32_0 : i32, i32
  }
  func.func @transform_18(%arg0: i32) -> (i32, i32) {
    %c0_i32 = arith.constant 0 : i32
    %c0_i32_0 = arith.constant 0 : i32
    %c0_i32_1 = arith.constant 0 : i32
    return %c0_i32, %c0_i32_0 : i32, i32
  }
  func.func @transform_19(%arg0: i32) -> (i32, i32) {
    %c0_i32 = arith.constant 0 : i32
    %c0_i32_0 = arith.constant 0 : i32
    %c0_i32_1 = arith.constant 0 : i32
    return %c0_i32, %c0_i32_0 : i32, i32
  }
  func.func @transform_20(%arg0: i32) -> (i32, i32, i32) {
    %c0_i32 = arith.constant 0 : i32
    %c0_i32_0 = arith.constant 0 : i32
    %c0_i32_1 = arith.constant 0 : i32
    return %arg0, %c0_i32, %c0_i32_0 : i32, i32, i32
  }
  func.func @transform_21(%arg0: i32) -> (i32, i32, i32) {
    %c0_i32 = arith.constant 0 : i32
    %c0_i32_0 = arith.constant 0 : i32
    %c0_i32_1 = arith.constant 0 : i32
    return %arg0, %c0_i32, %c0_i32_0 : i32, i32, i32
  }
  func.func @transform_22(%arg0: i32) -> (i32, i32, i32) {
    %c0_i32 = arith.constant 0 : i32
    %c0_i32_0 = arith.constant 0 : i32
    %c0_i32_1 = arith.constant 0 : i32
    return %arg0, %c0_i32, %c0_i32_0 : i32, i32, i32
  }
}

</mosaic_0001>

<llo_original>
// kernel: forward.1
$region0: #{forward.1}
  #allocation0 [shape = 'u32[]', space=smem, size = 0x4, offset = 0x4, fixed_abs, tag = 'smem constant byte address 0x4 - core index']
  #allocation1 [shape = 'u32[72,128]{1,0:T(1,128)}', space=vmem, size = 0x9000, scoped, tag = 'internal scratch']
  %s0 = inlined_call_operand.vmem [shape: f32[9,256], index: 0, kind: input, shape index: {}]
  %s1 = inlined_call_operand.vmem [shape: f32[2,16,256], index: 1, kind: input, shape index: {}]
  %s2 = inlined_call_operand.vmem [shape: f32[2,16,256], index: 2, kind: input, shape index: {}]
  %s3 = inlined_call_operand.vmem [shape: f32[2,8,256], index: 3, kind: input, shape index: {}]
  %s4 = inlined_call_operand.vmem [shape: f32[16,144], index: 4, kind: input, shape index: {}]
  %s5 = inlined_call_operand.vmem [shape: f32[16,1], index: 5, kind: input, shape index: {}]
  %s6 = inlined_call_operand.vmem [shape: f32[16,144], index: 6, kind: input, shape index: {}]
  %s7 = inlined_call_operand.vmem [shape: f32[16,1], index: 7, kind: input, shape index: {}]
  %s8 = inlined_call_operand.vmem [shape: f32[8,16], index: 8, kind: input, shape index: {}]
  %s9 = inlined_call_operand.vmem [shape: f32[8,1], index: 9, kind: input, shape index: {}]
  %s10 = inlined_call_operand.vmem [shape: f32[16,144], index: 10, kind: input, shape index: {}]
  %s11 = inlined_call_operand.vmem [shape: f32[16,1], index: 11, kind: input, shape index: {}]
  %s12 = inlined_call_operand.vmem [shape: f32[8,16], index: 12, kind: input, shape index: {}]
  %s13 = inlined_call_operand.vmem [shape: f32[8,1], index: 13, kind: input, shape index: {}]
  %s14 = inlined_call_operand.vmem [shape: f32[16,32], index: 14, kind: input, shape index: {}]
  %s15 = inlined_call_operand.vmem [shape: f32[16,1], index: 15, kind: input, shape index: {}]
  %s16 = inlined_call_operand.vmem [shape: f32[128,72], index: 16, kind: input, shape index: {}]
  %s17 = inlined_call_operand.vmem [shape: f32[128,1], index: 17, kind: input, shape index: {}]
  %s18 = inlined_call_operand.vmem [shape: f32[32,1152], index: 18, kind: input, shape index: {}]
  %s19 = inlined_call_operand.vmem [shape: f32[32,1], index: 19, kind: input, shape index: {}]
  %s20 = inlined_call_operand.vmem [shape: f32[2,16,256], index: 20, kind: output, shape index: {0}]
  %s21 = inlined_call_operand.vmem [shape: f32[2,8,256], index: 21, kind: output, shape index: {1}]
  %s22 = inlined_call_operand.vmem [shape: f32[2,8,256], index: 22, kind: output, shape index: {2}]
  %23 = xla_tuple %s20, %s21, %s22
  %s24 = sld [smem:[#allocation0]]
  $region129: #{forward.1} parent=0
    _
  %s26 = ssub.s32 1, %s24
  %s27 = scalar_select 0, %s26, %s24
  loop: start=0, step=1, limit=4
  $region2: #{forward.1} parent=0 // loop_pre_header
    _
  $region3: #{forward.1} parent=0 // loop_header
    %s29 = sphi 0, %s33
    %p30 = scmp.ge.s32.totalorder %s29, 4
    %s37 = sphi 0, %s37
    %s39 = sphi 0, %s37
    %s40 = sphi 0, %s39
    %s54 = sphi 0, %s40
    %s60 = sphi 0, %s62
    %s63 = sphi 0, %s60
    %s64 = sphi 0, %s63
    %s80 = sphi 0, %s64
    %s86 = sphi 0, %s88
    %s89 = sphi 0, %s86
    %s90 = sphi 0, %s89
    %s106 = sphi 0, %s90
    %s112 = sphi 0, %s114
    %s115 = sphi 0, %s112
    %s116 = sphi 0, %s115
    %s132 = sphi 0, %s116
    %s136 = sphi 0, %s136
    %s138 = sphi 0, %s136
    %s139 = sphi 0, %s138
    %s153 = sphi 0, %s139
    %s157 = sphi 0, %s157
    %s159 = sphi 0, %s157
    %s160 = sphi 0, %s159
    %s174 = sphi 0, %s160
    %s178 = sphi 0, %s178
    %s180 = sphi 0, %s178
    %s181 = sphi 0, %s180
    %s195 = sphi 0, %s181
    %s199 = sphi 0, %s199
    %s201 = sphi 0, %s199
    %s202 = sphi 0, %s201
    %s216 = sphi 0, %s202
    %s220 = sphi 0, %s220
    %s222 = sphi 0, %s220
    %s223 = sphi 0, %s222
    %s237 = sphi 0, %s223
    %s241 = sphi 0, %s241
    %s243 = sphi 0, %s241
    %s244 = sphi 0, %s243
    %s258 = sphi 0, %s244
    %s262 = sphi 0, %s262
    %s264 = sphi 0, %s262
    %s265 = sphi 0, %s264
    %s279 = sphi 0, %s265
    %s283 = sphi 0, %s283
    %s285 = sphi 0, %s283
    %s286 = sphi 0, %s285
    %s300 = sphi 0, %s286
    %s304 = sphi 0, %s304
    %s306 = sphi 0, %s304
    %s307 = sphi 0, %s306
    %s321 = sphi 0, %s307
    %s325 = sphi 0, %s325
    %s327 = sphi 0, %s325
    %s328 = sphi 0, %s327
    %s342 = sphi 0, %s328
    %s346 = sphi 0, %s346
    %s348 = sphi 0, %s346
    %s349 = sphi 0, %s348
    %s363 = sphi 0, %s349
    %s367 = sphi 0, %s367
    %s369 = sphi 0, %s367
    %s370 = sphi 0, %s369
    %s384 = sphi 0, %s370
    %s388 = sphi 0, %s388
    %s390 = sphi 0, %s388
    %s391 = sphi 0, %s390
    %s405 = sphi 0, %s391
    %s409 = sphi 0, %s409
    %s411 = sphi 0, %s409
    %s412 = sphi 0, %s411
    %s426 = sphi 0, %s412
    %s430 = sphi 0, %s430
    %s432 = sphi 0, %s430
    %s433 = sphi 0, %s432
    %s447 = sphi 0, %s433
    %s451 = sphi 0, %s451
    %s453 = sphi 0, %s451
    %s454 = sphi 0, %s453
    %s468 = sphi 0, %s454
    %s474 = sphi 0, %s476
    %s477 = sphi 0, %s474
    %s478 = sphi 0, %s477
    %s494 = sphi 0, %s478
    %s500 = sphi 0, %s502
    %s503 = sphi 0, %s500
    %s504 = sphi 0, %s503
    %s520 = sphi 0, %s504
    %s526 = sphi 0, %s528
    %s529 = sphi 0, %s526
    %s530 = sphi 0, %s529
    %s546 = sphi 0, %s530
  $region4: #{forward.1} parent=0 // loop_header_branch
    %32 = sbr.rel (%p30) target = $region8
  $region5: #{forward.1} parent=0 // loop_body
    %s34 = ssub.s32 %s29, 1
    %s35 = ssub.s32 %s29, 2
    %s36 = sadd.s32 %s29, 1
    %s38 = sadd.s32 %s37, 1
    %p41 = scmp.eq.s32.totalorder %s29, 1
    %p42 = scmp.ne.s32.totalorder %s37, %s39
    %p43 = scmp.eq.s32.totalorder %s29, 0
    %p44 = por %p42, %p43
    %p45 = scmp.ne.s32.totalorder %s37, %s39
    %p46 = scmp.eq.s32.totalorder %s34, 1
    %p47 = por %p45, %p46
    %p48 = scmp.ne.s32.totalorder %s39, %s40
    %p49 = scmp.eq.s32.totalorder %s34, 0
    %p50 = por %p48, %p49
    %p51 = scmp.ne.s32.totalorder %s39, %s40
    %p52 = scmp.eq.s32.totalorder %s35, 1
    %p53 = por %p51, %p52
    %p55 = scmp.ne.s32.totalorder %s40, %s54
    %p56 = scmp.eq.s32.totalorder %s35, 0
    %p57 = por %p55, %p56
    %s58 = ssub.s32 %s29, %s36
    %p59 = scmp.eq.s32.totalorder %s58, 0
    %s61 = sadd.s32 %s60, 1
    %s62 = scalar_select %p59, %s60, %s61
    %p65 = pneg %p59
    %p66 = scmp.eq.s32.totalorder %s29, 1
    %p67 = por %p65, %p66
    %p68 = scmp.ne.s32.totalorder %s60, %s63
    %p69 = scmp.eq.s32.totalorder %s29, 0
    %p70 = por %p68, %p69
    %p71 = scmp.ne.s32.totalorder %s60, %s63
    %p72 = scmp.eq.s32.totalorder %s34, 1
    %p73 = por %p71, %p72
    %p74 = scmp.ne.s32.totalorder %s63, %s64
    %p75 = scmp.eq.s32.totalorder %s34, 0
    %p76 = por %p74, %p75
    %p77 = scmp.ne.s32.totalorder %s63, %s64
    %p78 = scmp.eq.s32.totalorder %s35, 1
    %p79 = por %p77, %p78
    %p81 = scmp.ne.s32.totalorder %s64, %s80
    %p82 = scmp.eq.s32.totalorder %s35, 0
    %p83 = por %p81, %p82
    %s84 = ssub.s32 %s29, %s36
    %p85 = scmp.eq.s32.totalorder %s84, 0
    %s87 = sadd.s32 %s86, 1
    %s88 = scalar_select %p85, %s86, %s87
    %p91 = pneg %p85
    %p92 = scmp.eq.s32.totalorder %s29, 1
    %p93 = por %p91, %p92
    %p94 = scmp.ne.s32.totalorder %s86, %s89
    %p95 = scmp.eq.s32.totalorder %s29, 0
    %p96 = por %p94, %p95
    %p97 = scmp.ne.s32.totalorder %s86, %s89
    %p98 = scmp.eq.s32.totalorder %s34, 1
    %p99 = por %p97, %p98
    %p100 = scmp.ne.s32.totalorder %s89, %s90
    %p101 = scmp.eq.s32.totalorder %s34, 0
    %p102 = por %p100, %p101
    %p103 = scmp.ne.s32.totalorder %s89, %s90
    %p104 = scmp.eq.s32.totalorder %s35, 1
    %p105 = por %p103, %p104
    %p107 = scmp.ne.s32.totalorder %s90, %s106
    %p108 = scmp.eq.s32.totalorder %s35, 0
    %p109 = por %p107, %p108
    %s110 = ssub.s32 %s29, %s36
    %p111 = scmp.eq.s32.totalorder %s110, 0
    %s113 = sadd.s32 %s112, 1
    %s114 = scalar_select %p111, %s112, %s113
    %p117 = pneg %p111
    %p118 = scmp.eq.s32.totalorder %s29, 1
    %p119 = por %p117, %p118
    %p120 = scmp.ne.s32.totalorder %s112, %s115
    %p121 = scmp.eq.s32.totalorder %s29, 0
    %p122 = por %p120, %p121
    %p123 = scmp.ne.s32.totalorder %s112, %s115
    %p124 = scmp.eq.s32.totalorder %s34, 1
    %p125 = por %p123, %p124
    %p126 = scmp.ne.s32.totalorder %s115, %s116
    %p127 = scmp.eq.s32.totalorder %s34, 0
    %p128 = por %p126, %p127
    %p129 = scmp.ne.s32.totalorder %s115, %s116
    %p130 = scmp.eq.s32.totalorder %s35, 1
    %p131 = por %p129, %p130
    %p133 = scmp.ne.s32.totalorder %s116, %s132
    %p134 = scmp.eq.s32.totalorder %s35, 0
    %p135 = por %p133, %p134
    %s137 = sadd.s32 %s136, 1
    %p140 = scmp.eq.s32.totalorder %s29, 1
    %p141 = scmp.ne.s32.totalorder %s136, %s138
    %p142 = scmp.eq.s32.totalorder %s29, 0
    %p143 = por %p141, %p142
    %p144 = scmp.ne.s32.totalorder %s136, %s138
    %p145 = scmp.eq.s32.totalorder %s34, 1
    %p146 = por %p144, %p145
    %p147 = scmp.ne.s32.totalorder %s138, %s139
    %p148 = scmp.eq.s32.totalorder %s34, 0
    %p149 = por %p147, %p148
    %p150 = scmp.ne.s32.totalorder %s138, %s139
    %p151 = scmp.eq.s32.totalorder %s35, 1
    %p152 = por %p150, %p151
    %p154 = scmp.ne.s32.totalorder %s139, %s153
    %p155 = scmp.eq.s32.totalorder %s35, 0
    %p156 = por %p154, %p155
    %s158 = sadd.s32 %s157, 1
    %p161 = scmp.eq.s32.totalorder %s29, 1
    %p162 = scmp.ne.s32.totalorder %s157, %s159
    %p163 = scmp.eq.s32.totalorder %s29, 0
    %p164 = por %p162, %p163
    %p165 = scmp.ne.s32.totalorder %s157, %s159
    %p166 = scmp.eq.s32.totalorder %s34, 1
    %p167 = por %p165, %p166
    %p168 = scmp.ne.s32.totalorder %s159, %s160
    %p169 = scmp.eq.s32.totalorder %s34, 0
    %p170 = por %p168, %p169
    %p171 = scmp.ne.s32.totalorder %s159, %s160
    %p172 = scmp.eq.s32.totalorder %s35, 1
    %p173 = por %p171, %p172
    %p175 = scmp.ne.s32.totalorder %s160, %s174
    %p176 = scmp.eq.s32.totalorder %s35, 0
    %p177 = por %p175, %p176
    %s179 = sadd.s32 %s178, 1
    %p182 = scmp.eq.s32.totalorder %s29, 1
    %p183 = scmp.ne.s32.totalorder %s178, %s180
    %p184 = scmp.eq.s32.totalorder %s29, 0
    %p185 = por %p183, %p184
    %p186 = scmp.ne.s32.totalorder %s178, %s180
    %p187 = scmp.eq.s32.totalorder %s34, 1
    %p188 = por %p186, %p187
    %p189 = scmp.ne.s32.totalorder %s180, %s181
    %p190 = scmp.eq.s32.totalorder %s34, 0
    %p191 = por %p189, %p190
    %p192 = scmp.ne.s32.totalorder %s180, %s181
    %p193 = scmp.eq.s32.totalorder %s35, 1
    %p194 = por %p192, %p193
    %p196 = scmp.ne.s32.totalorder %s181, %s195
    %p197 = scmp.eq.s32.totalorder %s35, 0
    %p198 = por %p196, %p197
    %s200 = sadd.s32 %s199, 1
    %p203 = scmp.eq.s32.totalorder %s29, 1
    %p204 = scmp.ne.s32.totalorder %s199, %s201
    %p205 = scmp.eq.s32.totalorder %s29, 0
    %p206 = por %p204, %p205
    %p207 = scmp.ne.s32.totalorder %s199, %s201
    %p208 = scmp.eq.s32.totalorder %s34, 1
    %p209 = por %p207, %p208
    %p210 = scmp.ne.s32.totalorder %s201, %s202
    %p211 = scmp.eq.s32.totalorder %s34, 0
    %p212 = por %p210, %p211
    %p213 = scmp.ne.s32.totalorder %s201, %s202
    %p214 = scmp.eq.s32.totalorder %s35, 1
    %p215 = por %p213, %p214
    %p217 = scmp.ne.s32.totalorder %s202, %s216
    %p218 = scmp.eq.s32.totalorder %s35, 0
    %p219 = por %p217, %p218
    %s221 = sadd.s32 %s220, 1
    %p224 = scmp.eq.s32.totalorder %s29, 1
    %p225 = scmp.ne.s32.totalorder %s220, %s222
    %p226 = scmp.eq.s32.totalorder %s29, 0
    %p227 = por %p225, %p226
    %p228 = scmp.ne.s32.totalorder %s220, %s222
    %p229 = scmp.eq.s32.totalorder %s34, 1
    %p230 = por %p228, %p229
    %p231 = scmp.ne.s32.totalorder %s222, %s223
    %p232 = scmp.eq.s32.totalorder %s34, 0
    %p233 = por %p231, %p232
    %p234 = scmp.ne.s32.totalorder %s222, %s223
    %p235 = scmp.eq.s32.totalorder %s35, 1
    %p236 = por %p234, %p235
    %p238 = scmp.ne.s32.totalorder %s223, %s237
    %p239 = scmp.eq.s32.totalorder %s35, 0
    %p240 = por %p238, %p239
    %s242 = sadd.s32 %s241, 1
    %p245 = scmp.eq.s32.totalorder %s29, 1
    %p246 = scmp.ne.s32.totalorder %s241, %s243
    %p247 = scmp.eq.s32.totalorder %s29, 0
    %p248 = por %p246, %p247
    %p249 = scmp.ne.s32.totalorder %s241, %s243
    %p250 = scmp.eq.s32.totalorder %s34, 1
    %p251 = por %p249, %p250
    %p252 = scmp.ne.s32.totalorder %s243, %s244
    %p253 = scmp.eq.s32.totalorder %s34, 0
    %p254 = por %p252, %p253
    %p255 = scmp.ne.s32.totalorder %s243, %s244
    %p256 = scmp.eq.s32.totalorder %s35, 1
    %p257 = por %p255, %p256
    %p259 = scmp.ne.s32.totalorder %s244, %s258
    %p260 = scmp.eq.s32.totalorder %s35, 0
    %p261 = por %p259, %p260
    %s263 = sadd.s32 %s262, 1
    %p266 = scmp.eq.s32.totalorder %s29, 1
    %p267 = scmp.ne.s32.totalorder %s262, %s264
    %p268 = scmp.eq.s32.totalorder %s29, 0
    %p269 = por %p267, %p268
    %p270 = scmp.ne.s32.totalorder %s262, %s264
    %p271 = scmp.eq.s32.totalorder %s34, 1
    %p272 = por %p270, %p271
    %p273 = scmp.ne.s32.totalorder %s264, %s265
    %p274 = scmp.eq.s32.totalorder %s34, 0
    %p275 = por %p273, %p274
    %p276 = scmp.ne.s32.totalorder %s264, %s265
    %p277 = scmp.eq.s32.totalorder %s35, 1
    %p278 = por %p276, %p277
    %p280 = scmp.ne.s32.totalorder %s265, %s279
    %p281 = scmp.eq.s32.totalorder %s35, 0
    %p282 = por %p280, %p281
    %s284 = sadd.s32 %s283, 1
    %p287 = scmp.eq.s32.totalorder %s29, 1
    %p288 = scmp.ne.s32.totalorder %s283, %s285
    %p289 = scmp.eq.s32.totalorder %s29, 0
    %p290 = por %p288, %p289
    %p291 = scmp.ne.s32.totalorder %s283, %s285
    %p292 = scmp.eq.s32.totalorder %s34, 1
    %p293 = por %p291, %p292
    %p294 = scmp.ne.s32.totalorder %s285, %s286
    %p295 = scmp.eq.s32.totalorder %s34, 0
    %p296 = por %p294, %p295
    %p297 = scmp.ne.s32.totalorder %s285, %s286
    %p298 = scmp.eq.s32.totalorder %s35, 1
    %p299 = por %p297, %p298
    %p301 = scmp.ne.s32.totalorder %s286, %s300
    %p302 = scmp.eq.s32.totalorder %s35, 0
    %p303 = por %p301, %p302
    %s305 = sadd.s32 %s304, 1
    %p308 = scmp.eq.s32.totalorder %s29, 1
    %p309 = scmp.ne.s32.totalorder %s304, %s306
    %p310 = scmp.eq.s32.totalorder %s29, 0
    %p311 = por %p309, %p310
    %p312 = scmp.ne.s32.totalorder %s304, %s306
    %p313 = scmp.eq.s32.totalorder %s34, 1
    %p314 = por %p312, %p313
    %p315 = scmp.ne.s32.totalorder %s306, %s307
    %p316 = scmp.eq.s32.totalorder %s34, 0
    %p317 = por %p315, %p316
    %p318 = scmp.ne.s32.totalorder %s306, %s307
    %p319 = scmp.eq.s32.totalorder %s35, 1
    %p320 = por %p318, %p319
    %p322 = scmp.ne.s32.totalorder %s307, %s321
    %p323 = scmp.eq.s32.totalorder %s35, 0
    %p324 = por %p322, %p323
    %s326 = sadd.s32 %s325, 1
    %p329 = scmp.eq.s32.totalorder %s29, 1
    %p330 = scmp.ne.s32.totalorder %s325, %s327
    %p331 = scmp.eq.s32.totalorder %s29, 0
    %p332 = por %p330, %p331
    %p333 = scmp.ne.s32.totalorder %s325, %s327
    %p334 = scmp.eq.s32.totalorder %s34, 1
    %p335 = por %p333, %p334
    %p336 = scmp.ne.s32.totalorder %s327, %s328
    %p337 = scmp.eq.s32.totalorder %s34, 0
    %p338 = por %p336, %p337
    %p339 = scmp.ne.s32.totalorder %s327, %s328
    %p340 = scmp.eq.s32.totalorder %s35, 1
    %p341 = por %p339, %p340
    %p343 = scmp.ne.s32.totalorder %s328, %s342
    %p344 = scmp.eq.s32.totalorder %s35, 0
    %p345 = por %p343, %p344
    %s347 = sadd.s32 %s346, 1
    %p350 = scmp.eq.s32.totalorder %s29, 1
    %p351 = scmp.ne.s32.totalorder %s346, %s348
    %p352 = scmp.eq.s32.totalorder %s29, 0
    %p353 = por %p351, %p352
    %p354 = scmp.ne.s32.totalorder %s346, %s348
    %p355 = scmp.eq.s32.totalorder %s34, 1
    %p356 = por %p354, %p355
    %p357 = scmp.ne.s32.totalorder %s348, %s349
    %p358 = scmp.eq.s32.totalorder %s34, 0
    %p359 = por %p357, %p358
    %p360 = scmp.ne.s32.totalorder %s348, %s349
    %p361 = scmp.eq.s32.totalorder %s35, 1
    %p362 = por %p360, %p361
    %p364 = scmp.ne.s32.totalorder %s349, %s363
    %p365 = scmp.eq.s32.totalorder %s35, 0
    %p366 = por %p364, %p365
    %s368 = sadd.s32 %s367, 1
    %p371 = scmp.eq.s32.totalorder %s29, 1
    %p372 = scmp.ne.s32.totalorder %s367, %s369
    %p373 = scmp.eq.s32.totalorder %s29, 0
    %p374 = por %p372, %p373
    %p375 = scmp.ne.s32.totalorder %s367, %s369
    %p376 = scmp.eq.s32.totalorder %s34, 1
    %p377 = por %p375, %p376
    %p378 = scmp.ne.s32.totalorder %s369, %s370
    %p379 = scmp.eq.s32.totalorder %s34, 0
    %p380 = por %p378, %p379
    %p381 = scmp.ne.s32.totalorder %s369, %s370
    %p382 = scmp.eq.s32.totalorder %s35, 1
    %p383 = por %p381, %p382
    %p385 = scmp.ne.s32.totalorder %s370, %s384
    %p386 = scmp.eq.s32.totalorder %s35, 0
    %p387 = por %p385, %p386
    %s389 = sadd.s32 %s388, 1
    %p392 = scmp.eq.s32.totalorder %s29, 1
    %p393 = scmp.ne.s32.totalorder %s388, %s390
    %p394 = scmp.eq.s32.totalorder %s29, 0
    %p395 = por %p393, %p394
    %p396 = scmp.ne.s32.totalorder %s388, %s390
    %p397 = scmp.eq.s32.totalorder %s34, 1
    %p398 = por %p396, %p397
    %p399 = scmp.ne.s32.totalorder %s390, %s391
    %p400 = scmp.eq.s32.totalorder %s34, 0
    %p401 = por %p399, %p400
    %p402 = scmp.ne.s32.totalorder %s390, %s391
    %p403 = scmp.eq.s32.totalorder %s35, 1
    %p404 = por %p402, %p403
    %p406 = scmp.ne.s32.totalorder %s391, %s405
    %p407 = scmp.eq.s32.totalorder %s35, 0
    %p408 = por %p406, %p407
    %s410 = sadd.s32 %s409, 1
    %p413 = scmp.eq.s32.totalorder %s29, 1
    %p414 = scmp.ne.s32.totalorder %s409, %s411
    %p415 = scmp.eq.s32.totalorder %s29, 0
    %p416 = por %p414, %p415
    %p417 = scmp.ne.s32.totalorder %s409, %s411
    %p418 = scmp.eq.s32.totalorder %s34, 1
    %p419 = por %p417, %p418
    %p420 = scmp.ne.s32.totalorder %s411, %s412
    %p421 = scmp.eq.s32.totalorder %s34, 0
    %p422 = por %p420, %p421
    %p423 = scmp.ne.s32.totalorder %s411, %s412
    %p424 = scmp.eq.s32.totalorder %s35, 1
    %p425 = por %p423, %p424
    %p427 = scmp.ne.s32.totalorder %s412, %s426
    %p428 = scmp.eq.s32.totalorder %s35, 0
    %p429 = por %p427, %p428
    %s431 = sadd.s32 %s430, 1
    %p434 = scmp.eq.s32.totalorder %s29, 1
    %p435 = scmp.ne.s32.totalorder %s430, %s432
    %p436 = scmp.eq.s32.totalorder %s29, 0
    %p437 = por %p435, %p436
    %p438 = scmp.ne.s32.totalorder %s430, %s432
    %p439 = scmp.eq.s32.totalorder %s34, 1
    %p440 = por %p438, %p439
    %p441 = scmp.ne.s32.totalorder %s432, %s433
    %p442 = scmp.eq.s32.totalorder %s34, 0
    %p443 = por %p441, %p442
    %p444 = scmp.ne.s32.totalorder %s432, %s433
    %p445 = scmp.eq.s32.totalorder %s35, 1
    %p446 = por %p444, %p445
    %p448 = scmp.ne.s32.totalorder %s433, %s447
    %p449 = scmp.eq.s32.totalorder %s35, 0
    %p450 = por %p448, %p449
    %s452 = sadd.s32 %s451, 1
    %p455 = scmp.eq.s32.totalorder %s29, 1
    %p456 = scmp.ne.s32.totalorder %s451, %s453
    %p457 = scmp.eq.s32.totalorder %s29, 0
    %p458 = por %p456, %p457
    %p459 = scmp.ne.s32.totalorder %s451, %s453
    %p460 = scmp.eq.s32.totalorder %s34, 1
    %p461 = por %p459, %p460
    %p462 = scmp.ne.s32.totalorder %s453, %s454
    %p463 = scmp.eq.s32.totalorder %s34, 0
    %p464 = por %p462, %p463
    %p465 = scmp.ne.s32.totalorder %s453, %s454
    %p466 = scmp.eq.s32.totalorder %s35, 1
    %p467 = por %p465, %p466
    %p469 = scmp.ne.s32.totalorder %s454, %s468
    %p470 = scmp.eq.s32.totalorder %s35, 0
    %p471 = por %p469, %p470
    %s472 = ssub.s32 %s29, %s36
    %p473 = scmp.eq.s32.totalorder %s472, 0
    %s475 = sadd.s32 %s474, 1
    %s476 = scalar_select %p473, %s474, %s475
    %p479 = pneg %p473
    %p480 = scmp.eq.s32.totalorder %s29, 1
    %p481 = por %p479, %p480
    %p482 = scmp.ne.s32.totalorder %s474, %s477
    %p483 = scmp.eq.s32.totalorder %s29, 0
    %p484 = por %p482, %p483
    %p485 = scmp.ne.s32.totalorder %s474, %s477
    %p486 = scmp.eq.s32.totalorder %s34, 1
    %p487 = por %p485, %p486
    %p488 = scmp.ne.s32.totalorder %s477, %s478
    %p489 = scmp.eq.s32.totalorder %s34, 0
    %p490 = por %p488, %p489
    %p491 = scmp.ne.s32.totalorder %s477, %s478
    %p492 = scmp.eq.s32.totalorder %s35, 1
    %p493 = por %p491, %p492
    %p495 = scmp.ne.s32.totalorder %s478, %s494
    %p496 = scmp.eq.s32.totalorder %s35, 0
    %p497 = por %p495, %p496
    %s498 = ssub.s32 %s29, %s36
    %p499 = scmp.eq.s32.totalorder %s498, 0
    %s501 = sadd.s32 %s500, 1
    %s502 = scalar_select %p499, %s500, %s501
    %p505 = pneg %p499
    %p506 = scmp.eq.s32.totalorder %s29, 1
    %p507 = por %p505, %p506
    %p508 = scmp.ne.s32.totalorder %s500, %s503
    %p509 = scmp.eq.s32.totalorder %s29, 0
    %p510 = por %p508, %p509
    %p511 = scmp.ne.s32.totalorder %s500, %s503
    %p512 = scmp.eq.s32.totalorder %s34, 1
    %p513 = por %p511, %p512
    %p514 = scmp.ne.s32.totalorder %s503, %s504
    %p515 = scmp.eq.s32.totalorder %s34, 0
    %p516 = por %p514, %p515
    %p517 = scmp.ne.s32.totalorder %s503, %s504
    %p518 = scmp.eq.s32.totalorder %s35, 1
    %p519 = por %p517, %p518
    %p521 = scmp.ne.s32.totalorder %s504, %s520
    %p522 = scmp.eq.s32.totalorder %s35, 0
    %p523 = por %p521, %p522
    %s524 = ssub.s32 %s29, %s36
    %p525 = scmp.eq.s32.totalorder %s524, 0
    %s527 = sadd.s32 %s526, 1
    %s528 = scalar_select %p525, %s526, %s527
    %p531 = pneg %p525
    %p532 = scmp.eq.s32.totalorder %s29, 1
    %p533 = por %p531, %p532
    %p534 = scmp.ne.s32.totalorder %s526, %s529
    %p535 = scmp.eq.s32.totalorder %s29, 0
    %p536 = por %p534, %p535
    %p537 = scmp.ne.s32.totalorder %s526, %s529
    %p538 = scmp.eq.s32.totalorder %s34, 1
    %p539 = por %p537, %p538
    %p540 = scmp.ne.s32.totalorder %s529, %s530
    %p541 = scmp.eq.s32.totalorder %s34, 0
    %p542 = por %p540, %p541
    %p543 = scmp.ne.s32.totalorder %s529, %s530
    %p544 = scmp.eq.s32.totalorder %s35, 1
    %p545 = por %p543, %p544
    %p547 = scmp.ne.s32.totalorder %s530, %s546
    %p548 = scmp.eq.s32.totalorder %s35, 0
    %p549 = por %p547, %p548
    %p550 = scmp.le.s32.totalorder 1, %s29
    %p551 = scmp.lt.s32.totalorder %s29, 3
    %p552 = pnand %p550, %p551
    %p553 = pneg %p552
    // Predicated region
    $region9: #{forward.1} parent=5 // pred_check
      _
    $region10: #{forward.1} parent=5 // pred_check_branch
      %555 = sbr.rel (%p552) target = $region12
    $region11: #{forward.1} parent=5 // pred_region
      %s556 = ssub.s32 %s29, 1
      // Predicated region
      $region13: #{forward.1} parent=11 // pred_check
        %p557 = pneg %p50
      $region14: #{forward.1} parent=11 // pred_check_branch
        %559 = sbr.rel (%p557) target = $region16
      $region15: #{forward.1} parent=11 // pred_region
        _
      $region16: #{forward.1} parent=11 // pred_fallthru
        _
      // Predicated region
      $region17: #{forward.1} parent=11 // pred_check
        %p560 = pneg %p149
      $region18: #{forward.1} parent=11 // pred_check_branch
        %562 = sbr.rel (%p560) target = $region20
      $region19: #{forward.1} parent=11 // pred_region
        _
      $region20: #{forward.1} parent=11 // pred_fallthru
        _
      // Predicated region
      $region21: #{forward.1} parent=11 // pred_check
        %p563 = pneg %p170
      $region22: #{forward.1} parent=11 // pred_check_branch
        %565 = sbr.rel (%p563) target = $region24
      $region23: #{forward.1} parent=11 // pred_region
        _
      $region24: #{forward.1} parent=11 // pred_fallthru
        _
      // Predicated region
      $region25: #{forward.1} parent=11 // pred_check
        %p566 = pneg %p191
      $region26: #{forward.1} parent=11 // pred_check_branch
        %568 = sbr.rel (%p566) target = $region28
      $region27: #{forward.1} parent=11 // pred_region
        _
      $region28: #{forward.1} parent=11 // pred_fallthru
        _
      // Predicated region
      $region29: #{forward.1} parent=11 // pred_check
        %p569 = pneg %p212
      $region30: #{forward.1} parent=11 // pred_check_branch
        %571 = sbr.rel (%p569) target = $region32
      $region31: #{forward.1} parent=11 // pred_region
        _
      $region32: #{forward.1} parent=11 // pred_fallthru
        _
      // Predicated region
      $region33: #{forward.1} parent=11 // pred_check
        %p572 = pneg %p233
      $region34: #{forward.1} parent=11 // pred_check_branch
        %574 = sbr.rel (%p572) target = $region36
      $region35: #{forward.1} parent=11 // pred_region
        _
      $region36: #{forward.1} parent=11 // pred_fallthru
        _
      // Predicated region
      $region37: #{forward.1} parent=11 // pred_check
        %p575 = pneg %p254
      $region38: #{forward.1} parent=11 // pred_check_branch
        %577 = sbr.rel (%p575) target = $region40
      $region39: #{forward.1} parent=11 // pred_region
        _
      $region40: #{forward.1} parent=11 // pred_fallthru
        _
      // Predicated region
      $region41: #{forward.1} parent=11 // pred_check
        %p578 = pneg %p275
      $region42: #{forward.1} parent=11 // pred_check_branch
        %580 = sbr.rel (%p578) target = $region44
      $region43: #{forward.1} parent=11 // pred_region
        _
      $region44: #{forward.1} parent=11 // pred_fallthru
        _
      // Predicated region
      $region45: #{forward.1} parent=11 // pred_check
        %p581 = pneg %p296
      $region46: #{forward.1} parent=11 // pred_check_branch
        %583 = sbr.rel (%p581) target = $region48
      $region47: #{forward.1} parent=11 // pred_region
        _
      $region48: #{forward.1} parent=11 // pred_fallthru
        _
      // Predicated region
      $region49: #{forward.1} parent=11 // pred_check
        %p584 = pneg %p317
      $region50: #{forward.1} parent=11 // pred_check_branch
        %586 = sbr.rel (%p584) target = $region52
      $region51: #{forward.1} parent=11 // pred_region
        _
      $region52: #{forward.1} parent=11 // pred_fallthru
        _
      // Predicated region
      $region53: #{forward.1} parent=11 // pred_check
        %p587 = pneg %p338
      $region54: #{forward.1} parent=11 // pred_check_branch
        %589 = sbr.rel (%p587) target = $region56
      $region55: #{forward.1} parent=11 // pred_region
        _
      $region56: #{forward.1} parent=11 // pred_fallthru
        _
      // Predicated region
      $region57: #{forward.1} parent=11 // pred_check
        %p590 = pneg %p359
      $region58: #{forward.1} parent=11 // pred_check_branch
        %592 = sbr.rel (%p590) target = $region60
      $region59: #{forward.1} parent=11 // pred_region
        _
      $region60: #{forward.1} parent=11 // pred_fallthru
        _
      // Predicated region
      $region61: #{forward.1} parent=11 // pred_check
        %p593 = pneg %p380
      $region62: #{forward.1} parent=11 // pred_check_branch
        %595 = sbr.rel (%p593) target = $region64
      $region63: #{forward.1} parent=11 // pred_region
        _
      $region64: #{forward.1} parent=11 // pred_fallthru
        _
      // Predicated region
      $region65: #{forward.1} parent=11 // pred_check
        %p596 = pneg %p401
      $region66: #{forward.1} parent=11 // pred_check_branch
        %598 = sbr.rel (%p596) target = $region68
      $region67: #{forward.1} parent=11 // pred_region
        _
      $region68: #{forward.1} parent=11 // pred_fallthru
        _
      // Predicated region
      $region69: #{forward.1} parent=11 // pred_check
        %p599 = pneg %p422
      $region70: #{forward.1} parent=11 // pred_check_branch
        %601 = sbr.rel (%p599) target = $region72
      $region71: #{forward.1} parent=11 // pred_region
        _
      $region72: #{forward.1} parent=11 // pred_fallthru
        _
      // Predicated region
      $region73: #{forward.1} parent=11 // pred_check
        %p602 = pneg %p443
      $region74: #{forward.1} parent=11 // pred_check_branch
        %604 = sbr.rel (%p602) target = $region76
      $region75: #{forward.1} parent=11 // pred_region
        _
      $region76: #{forward.1} parent=11 // pred_fallthru
        _
      // Predicated region
      $region77: #{forward.1} parent=11 // pred_check
        %p605 = pneg %p464
      $region78: #{forward.1} parent=11 // pred_check_branch
        %607 = sbr.rel (%p605) target = $region80
      $region79: #{forward.1} parent=11 // pred_region
        _
      $region80: #{forward.1} parent=11 // pred_fallthru
        _
    $region12: #{forward.1} parent=5 // pred_fallthru
      _
    %p608 = scmp.lt.s32.totalorder %s29, 2
    // Predicated region
    $region81: #{forward.1} parent=5 // pred_check
      %p609 = pneg %p608
    $region82: #{forward.1} parent=5 // pred_check_branch
      %611 = sbr.rel (%p609) target = $region84
    $region83: #{forward.1} parent=5 // pred_region
      // Predicated region
      $region85: #{forward.1} parent=83 // pred_check
        %p612 = pneg %p70
      $region86: #{forward.1} parent=83 // pred_check_branch
        %614 = sbr.rel (%p612) target = $region88
      $region87: #{forward.1} parent=83 // pred_region
        %p615 = scmp.lt.s32.totalorder %s29, 1
        %s616 = scalar_select %p615, %s29, 1
        %s617 = smul.addr %s616, 4
        %s618 = smul.addr %s617, 8
        %s619 = scalar_lea.vmem %s1, %s618
      $region88: #{forward.1} parent=83 // pred_fallthru
        _
      // Predicated region
      $region89: #{forward.1} parent=83 // pred_check
        %p620 = pneg %p96
      $region90: #{forward.1} parent=83 // pred_check_branch
        %622 = sbr.rel (%p620) target = $region92
      $region91: #{forward.1} parent=83 // pred_region
        %p623 = scmp.lt.s32.totalorder %s29, 1
        %s624 = scalar_select %p623, %s29, 1
        %s625 = smul.addr %s624, 4
        %s626 = smul.addr %s625, 8
        %s627 = scalar_lea.vmem %s2, %s626
      $region92: #{forward.1} parent=83 // pred_fallthru
        _
      // Predicated region
      $region93: #{forward.1} parent=83 // pred_check
        %p628 = pneg %p122
      $region94: #{forward.1} parent=83 // pred_check_branch
        %630 = sbr.rel (%p628) target = $region96
      $region95: #{forward.1} parent=83 // pred_region
        %p631 = scmp.lt.s32.totalorder %s29, 1
        %s632 = scalar_select %p631, %s29, 1
        %s633 = smul.addr %s632, 2
        %s634 = smul.addr %s633, 8
        %s635 = scalar_lea.vmem %s3, %s634
      $region96: #{forward.1} parent=83 // pred_fallthru
        _
    $region84: #{forward.1} parent=5 // pred_fallthru
      _
    %p636 = scmp.le.s32.totalorder 1, %s29
    %p637 = scmp.lt.s32.totalorder %s29, 3
    %p638 = pnand %p636, %p637
    %p639 = pneg %p638
    // Predicated region
    $region97: #{forward.1} parent=5 // pred_check
      _
    $region98: #{forward.1} parent=5 // pred_check_branch
      %641 = sbr.rel (%p638) target = $region100
    $region99: #{forward.1} parent=5 // pred_region
      %s642 = ssub.s32 %s29, 1
      %p643 = pneg %p50
      %p644 = pneg %p47
      %p645 = scmp.lt.s32.totalorder %s34, 1
      %s646 = scalar_select %p645, %s34, 1
      %s647 = smul.addr %s646, 4
      %s648 = smul.addr %s647, 8
      %s649 = scalar_lea.vmem %s1, %s648
      %p650 = pneg %p76
      %p651 = pneg %p73
      %p652 = scmp.lt.s32.totalorder %s34, 1
      %s653 = scalar_select %p652, %s34, 1
      %s654 = smul.addr %s653, 4
      %s655 = smul.addr %s654, 8
      %s656 = scalar_lea.vmem %s2, %s655
      %p657 = pneg %p102
      %p658 = pneg %p99
      %p659 = scmp.lt.s32.totalorder %s34, 1
      %s660 = scalar_select %p659, %s34, 1
      %s661 = smul.addr %s660, 2
      %s662 = smul.addr %s661, 8
      %s663 = scalar_lea.vmem %s3, %s662
      %p664 = pneg %p128
      %p665 = pneg %p125
      %p666 = pneg %p149
      %p667 = pneg %p146
      %p668 = pneg %p170
      %p669 = pneg %p167
      %p670 = pneg %p191
      %p671 = pneg %p188
      %p672 = pneg %p212
      %p673 = pneg %p209
      %p674 = pneg %p233
      %p675 = pneg %p230
      %p676 = pneg %p254
      %p677 = pneg %p251
      %p678 = pneg %p275
      %p679 = pneg %p272
      %p680 = pneg %p296
      %p681 = pneg %p293
      %p682 = pneg %p317
      %p683 = pneg %p314
      %p684 = pneg %p338
      %p685 = pneg %p335
      %p686 = pneg %p359
      %p687 = pneg %p356
      %p688 = pneg %p380
      %p689 = pneg %p377
      %p690 = pneg %p401
      %p691 = pneg %p398
      %p692 = pneg %p422
      %p693 = pneg %p419
      %p694 = pneg %p443
      %p695 = pneg %p440
      %p696 = pneg %p464
      %p697 = pneg %p461
      %p698 = pneg %p490
      %p699 = pneg %p487
      %p700 = scmp.lt.s32.totalorder %s34, 1
      %s701 = scalar_select %p700, %s34, 1
      %s702 = smul.addr %s701, 4
      %s703 = smul.addr %s702, 8
      %s704 = scalar_lea.vmem %s20, %s703
      %p705 = pneg %p516
      %p706 = pneg %p513
      %p707 = scmp.lt.s32.totalorder %s34, 1
      %s708 = scalar_select %p707, %s34, 1
      %s709 = smul.addr %s708, 2
      %s710 = smul.addr %s709, 8
      %s711 = scalar_lea.vmem %s21, %s710
      %p712 = pneg %p542
      %p713 = pneg %p539
      %p714 = scmp.lt.s32.totalorder %s34, 1
      %s715 = scalar_select %p714, %s34, 1
      %s716 = smul.addr %s715, 2
      %s717 = smul.addr %s716, 8
      %s718 = scalar_lea.vmem %s22, %s717
      %p719 = scmp.lt.s32.totalorder %s34, 1
      %s720 = scalar_select %p719, %s34, 1
      %s721 = smul.addr %s720, 4
      %s722 = smul.addr %s721, 8
      %s723 = scalar_lea.vmem %s1, %s722
      %p724 = scmp.lt.s32.totalorder %s34, 1
      %s725 = scalar_select %p724, %s34, 1
      %s726 = smul.addr %s725, 4
      %s727 = smul.addr %s726, 8
      %s728 = scalar_lea.vmem %s2, %s727
      %p729 = scmp.lt.s32.totalorder %s34, 1
      %s730 = scalar_select %p729, %s34, 1
      %s731 = smul.addr %s730, 2
      %s732 = smul.addr %s731, 8
      %s733 = scalar_lea.vmem %s3, %s732
      %p734 = scmp.lt.s32.totalorder %s34, 1
      %s735 = scalar_select %p734, %s34, 1
      %s736 = smul.addr %s735, 4
      %s737 = smul.addr %s736, 8
      %s738 = scalar_lea.vmem %s20, %s737
      %p739 = scmp.lt.s32.totalorder %s34, 1
      %s740 = scalar_select %p739, %s34, 1
      %s741 = smul.addr %s740, 2
      %s742 = smul.addr %s741, 8
      %s743 = scalar_lea.vmem %s21, %s742
      %p744 = scmp.lt.s32.totalorder %s34, 1
      %s745 = scalar_select %p744, %s34, 1
      %s746 = smul.addr %s745, 2
      %s747 = smul.addr %s746, 8
      %s748 = scalar_lea.vmem %s22, %s747
      %v749 = vld [vmem:[%s723] sm:$0xff]
      %v750 = vld [vmem:[%s723 + $0x8] sm:$0xff]
      %v751 = vld [vmem:[%s723 + $0x10] sm:$0xff]
      %v752 = vld [vmem:[%s723 + $0x18] sm:$0xff]
      %v753 = vld [vmem:[%s728] sm:$0xff]
      %v754 = vld [vmem:[%s728 + $0x8] sm:$0xff]
      %v755 = vld [vmem:[%s728 + $0x10] sm:$0xff]
      %v756 = vld [vmem:[%s728 + $0x18] sm:$0xff]
      %v757 = vld [vmem:[%s733] sm:$0xff]
      %v758 = vld [vmem:[%s733 + $0x8] sm:$0xff]
      %v759 = vadd.f32 %v749, %v753
      %v760 = vadd.f32 %v750, %v754
      %v761 = vadd.f32 %v751, %v755
      %v762 = vadd.f32 %v752, %v756
      %763 = vrot.lane.b32.xlu0 %v759, 17
      %v764 = vpop.permute.xlu0 %763
      %765 = vrot.lane.b32.xlu0 %v761, 17
      %v766 = vpop.permute.xlu0 %765
      %767 = vrot.lane.b32.xlu0 %v760, 17
      %v768 = vpop.permute.xlu0 %767
      %769 = vrot.lane.b32.xlu0 %v762, 17
      %v770 = vpop.permute.xlu0 %769
      %v771 = vlaneseq
      %v772 = vand.u32 %v771, 127
      %vm773 = vcmp.lt.s32.totalorder %v772, 17
      %v774 = vsel %vm773, %v764, %v768
      %v775 = vsel %vm773, %v766, %v770
      %v776 = vsel %vm773, %v768, %v764
      %v777 = vsel %vm773, %v770, %v766
      %v778 = vld [vmem:[%s0] ss:$8 sm:$0x3]
      %v780 = vperm.slane %v778, 0
      %v781 = vperm.slane %v778, 1
      %v784 = vmul.f32 %v776, %v780
      %v785 = vmul.f32 %v774, %v781
      %v786 = vmul.f32 %v777, %v780
      %v787 = vmul.f32 %v775, %v781
      %788 = vrot.lane.b32.xlu0 %v759, 16
      %v789 = vpop.permute.xlu0 %788
      %790 = vrot.lane.b32.xlu0 %v761, 16
      %v791 = vpop.permute.xlu0 %790
      %792 = vrot.lane.b32.xlu0 %v760, 16
      %v793 = vpop.permute.xlu0 %792
      %794 = vrot.lane.b32.xlu0 %v762, 16
      %v795 = vpop.permute.xlu0 %794
      %vm796 = vcmp.lt.s32.totalorder %v772, 16
      %v797 = vsel %vm796, %v789, %v793
      %v798 = vsel %vm796, %v791, %v795
      %v799 = vsel %vm796, %v793, %v789
      %v800 = vsel %vm796, %v795, %v791
      %s801 = scalar_lea.vmem %s0, 1
      %v802 = vld [vmem:[%s801] ss:$8 sm:$0x3]
      %v804 = vperm.slane %v802, 0
      %v805 = vperm.slane %v802, 1
      %v808 = vmul.f32 %v799, %v804
      %v809 = vmul.f32 %v797, %v805
      %v810 = vmul.f32 %v800, %v804
      %v811 = vmul.f32 %v798, %v805
      %812 = vrot.lane.b32.xlu0 %v759, 15
      %v813 = vpop.permute.xlu0 %812
      %814 = vrot.lane.b32.xlu0 %v761, 15
      %v815 = vpop.permute.xlu0 %814
      %816 = vrot.lane.b32.xlu0 %v760, 15
      %v817 = vpop.permute.xlu0 %816
      %818 = vrot.lane.b32.xlu0 %v762, 15
      %v819 = vpop.permute.xlu0 %818
      %vm820 = vcmp.lt.s32.totalorder %v772, 15
      %v821 = vsel %vm820, %v813, %v817
      %v822 = vsel %vm820, %v815, %v819
      %v823 = vsel %vm820, %v817, %v813
      %v824 = vsel %vm820, %v819, %v815
      %s825 = scalar_lea.vmem %s0, 2
      %v826 = vld [vmem:[%s825] ss:$8 sm:$0x3]
      %v828 = vperm.slane %v826, 0
      %v829 = vperm.slane %v826, 1
      %v832 = vmul.f32 %v823, %v828
      %v833 = vmul.f32 %v821, %v829
      %v834 = vmul.f32 %v824, %v828
      %v835 = vmul.f32 %v822, %v829
      %836 = vrot.lane.b32.xlu0 %v759, 1
      %v837 = vpop.permute.xlu0 %836
      %838 = vrot.lane.b32.xlu0 %v761, 1
      %v839 = vpop.permute.xlu0 %838
      %840 = vrot.lane.b32.xlu0 %v760, 1
      %v841 = vpop.permute.xlu0 %840
      %842 = vrot.lane.b32.xlu0 %v762, 1
      %v843 = vpop.permute.xlu0 %842
      %vm844 = vcmp.lt.s32.totalorder %v772, 1
      %v845 = vsel %vm844, %v837, %v841
      %v846 = vsel %vm844, %v839, %v843
      %v847 = vsel %vm844, %v841, %v837
      %v848 = vsel %vm844, %v843, %v839
      %s849 = scalar_lea.vmem %s0, 3
      %v850 = vld [vmem:[%s849] ss:$8 sm:$0x3]
      %v852 = vperm.slane %v850, 0
      %v853 = vperm.slane %v850, 1
      %v856 = vmul.f32 %v847, %v852
      %v857 = vmul.f32 %v845, %v853
      %v858 = vmul.f32 %v848, %v852
      %v859 = vmul.f32 %v846, %v853
      %860 = vrot.lane.b32.xlu0 %v759, 127
      %v861 = vpop.permute.xlu0 %860
      %862 = vrot.lane.b32.xlu0 %v761, 127
      %v863 = vpop.permute.xlu0 %862
      %864 = vrot.lane.b32.xlu0 %v760, 127
      %v865 = vpop.permute.xlu0 %864
      %866 = vrot.lane.b32.xlu0 %v762, 127
      %v867 = vpop.permute.xlu0 %866
      %vm868 = vcmp.lt.s32.totalorder %v772, 127
      %v869 = vsel %vm868, %v861, %v865
      %v870 = vsel %vm868, %v863, %v867
      %v871 = vsel %vm868, %v865, %v861
      %v872 = vsel %vm868, %v867, %v863
      %s873 = scalar_lea.vmem %s0, 5
      %v874 = vld [vmem:[%s873] ss:$8 sm:$0x3]
      %v876 = vperm.slane %v874, 0
      %v877 = vperm.slane %v874, 1
      %v880 = vmul.f32 %v869, %v876
      %v881 = vmul.f32 %v871, %v877
      %v882 = vmul.f32 %v870, %v876
      %v883 = vmul.f32 %v872, %v877
      %884 = vrot.lane.b32.xlu0 %v759, 113
      %v885 = vpop.permute.xlu0 %884
      %886 = vrot.lane.b32.xlu0 %v761, 113
      %v887 = vpop.permute.xlu0 %886
      %888 = vrot.lane.b32.xlu0 %v760, 113
      %v889 = vpop.permute.xlu0 %888
      %890 = vrot.lane.b32.xlu0 %v762, 113
      %v891 = vpop.permute.xlu0 %890
      %vm892 = vcmp.lt.s32.totalorder %v772, 113
      %v893 = vsel %vm892, %v885, %v889
      %v894 = vsel %vm892, %v887, %v891
      %v895 = vsel %vm892, %v889, %v885
      %v896 = vsel %vm892, %v891, %v887
      %s897 = scalar_lea.vmem %s0, 6
      %v898 = vld [vmem:[%s897] ss:$8 sm:$0x3]
      %v900 = vperm.slane %v898, 0
      %v901 = vperm.slane %v898, 1
      %v904 = vmul.f32 %v893, %v900
      %v905 = vmul.f32 %v895, %v901
      %v906 = vmul.f32 %v894, %v900
      %v907 = vmul.f32 %v896, %v901
      %908 = vrot.lane.b32.xlu0 %v759, 112
      %v909 = vpop.permute.xlu0 %908
      %910 = vrot.lane.b32.xlu0 %v761, 112
      %v911 = vpop.permute.xlu0 %910
      %912 = vrot.lane.b32.xlu0 %v760, 112
      %v913 = vpop.permute.xlu0 %912
      %914 = vrot.lane.b32.xlu0 %v762, 112
      %v915 = vpop.permute.xlu0 %914
      %vm916 = vcmp.lt.s32.totalorder %v772, 112
      %v917 = vsel %vm916, %v909, %v913
      %v918 = vsel %vm916, %v911, %v915
      %v919 = vsel %vm916, %v913, %v909
      %v920 = vsel %vm916, %v915, %v911
      %s921 = scalar_lea.vmem %s0, 7
      %v922 = vld [vmem:[%s921] ss:$8 sm:$0x3]
      %v924 = vperm.slane %v922, 0
      %v925 = vperm.slane %v922, 1
      %v928 = vmul.f32 %v917, %v924
      %v929 = vmul.f32 %v919, %v925
      %v930 = vmul.f32 %v918, %v924
      %v931 = vmul.f32 %v920, %v925
      %932 = vrot.lane.b32.xlu0 %v759, 111
      %v933 = vpop.permute.xlu0 %932
      %934 = vrot.lane.b32.xlu0 %v761, 111
      %v935 = vpop.permute.xlu0 %934
      %936 = vrot.lane.b32.xlu0 %v760, 111
      %v937 = vpop.permute.xlu0 %936
      %938 = vrot.lane.b32.xlu0 %v762, 111
      %v939 = vpop.permute.xlu0 %938
      %vm940 = vcmp.lt.s32.totalorder %v772, 111
      %v941 = vsel %vm940, %v933, %v937
      %v942 = vsel %vm940, %v935, %v939
      %v943 = vsel %vm940, %v937, %v933
      %v944 = vsel %vm940, %v939, %v935
      %s945 = scalar_lea.vmem %s0, 16
      %v946 = vld [vmem:[%s945] ss:$8 sm:$0x3]
      %v948 = vperm.slane %v946, 0
      %v949 = vperm.slane %v946, 1
      %v952 = vmul.f32 %v941, %v948
      %v953 = vmul.f32 %v943, %v949
      %v954 = vmul.f32 %v942, %v948
      %v955 = vmul.f32 %v944, %v949
      %v956 = vld [vmem:[%s4] sm:$0xff]
      %v957 = vld [vmem:[%s4 + $0x8] sm:$0xff]
      %v958 = vld [vmem:[%s4 + $0x10] sm:$0xff]
      %v959 = vld [vmem:[%s4 + $0x18] sm:$0xff]
      %v960 = vld [vmem:[%s5] sm:$0xff]
      %v961 = vld [vmem:[%s5 + $0x8] sm:$0xff]
      %963 = vset.pattern.permute.xlu0 0
      %964 = vperm.xlu0 %963, %v960
      %v965 = vpop.permute.xlu0 %964
      %968 = vset.pattern.permute.xlu0 0
      %969 = vperm.xlu0 %968, %v961
      %v970 = vpop.permute.xlu0 %969
      %vm972 = vcmask 130048
      %v974 = vsel %vm972, %v957, 0
      %v977 = vsel %vm972, %v959, 0
      %979 = vmatpush.msra.mxu0 %v930
      %980 = vmatpush.msra.mxu0 %v928
      %981 = vmatpush.msra.mxu0 %v906
      %982 = vmatpush.msra.mxu0 %v904
      %983 = vmatpush.msra.mxu0 %v882
      %984 = vmatpush.msra.mxu0 %v880
      %985 = vmatpush.msra.mxu0 %v761
      %986 = vmatpush.msra.mxu0 %v759
      %987 = vmatpush.msra.mxu0 %v858
      %988 = vmatpush.msra.mxu0 %v856
      %989 = vmatpush.msra.mxu0 %v834
      %990 = vmatpush.msra.mxu0 %v832
      %991 = vmatpush.msra.mxu0 %v810
      %992 = vmatpush.msra.mxu0 %v808
      %993 = vmatpush.msra.mxu0 %v786
      %994 = vmatpush.msra.mxu0 %v784
      %995 = vmatmul.f32.gmra.mxu0 %v956
      %v996 = vpop.f32.mrf.mxu0
      %v997 = vadd.f32 %v965, %v996
      %998 = vmatmul.f32.gmra.mxu0 %v958
      %v999 = vpop.f32.mrf.mxu0
      %v1000 = vadd.f32 %v970, %v999
      %1001 = vdwg.mxu0
      %1002 = vmatpush.msra.mxu0 0.0
      %1003 = vmatpush.msra.mxu0 0.0
      %1004 = vmatpush.msra.mxu0 0.0
      %1005 = vmatpush.msra.mxu0 0.0
      %1006 = vmatpush.msra.mxu0 0.0
      %1007 = vmatpush.msra.mxu0 0.0
      %1008 = vmatpush.msra.mxu0 0.0
      %1009 = vmatpush.msra.mxu0 0.0
      %1010 = vmatpush.msra.mxu0 0.0
      %1011 = vmatpush.msra.mxu0 0.0
      %1012 = vmatpush.msra.mxu0 0.0
      %1013 = vmatpush.msra.mxu0 0.0
      %1014 = vmatpush.msra.mxu0 0.0
      %1015 = vmatpush.msra.mxu0 0.0
      %1016 = vmatpush.msra.mxu0 %v954
      %1017 = vmatpush.msra.mxu0 %v952
      %1018 = vmatmul.f32.gmra.mxu0 %v974
      %v1019 = vpop.f32.mrf.mxu0
      %v1020 = vadd.f32 %v997, %v1019
      %1021 = vmatmul.f32.gmra.mxu0 %v977
      %v1022 = vpop.f32.mrf.mxu0
      %v1023 = vadd.f32 %v1000, %v1022
      %1024 = vdwg.mxu0
      %1025 = vmatpush.msra.mxu0 %v931
      %1026 = vmatpush.msra.mxu0 %v929
      %1027 = vmatpush.msra.mxu0 %v907
      %1028 = vmatpush.msra.mxu0 %v905
      %1029 = vmatpush.msra.mxu0 %v883
      %1030 = vmatpush.msra.mxu0 %v881
      %1031 = vmatpush.msra.mxu0 %v762
      %1032 = vmatpush.msra.mxu0 %v760
      %1033 = vmatpush.msra.mxu0 %v859
      %1034 = vmatpush.msra.mxu0 %v857
      %1035 = vmatpush.msra.mxu0 %v835
      %1036 = vmatpush.msra.mxu0 %v833
      %1037 = vmatpush.msra.mxu0 %v811
      %1038 = vmatpush.msra.mxu0 %v809
      %1039 = vmatpush.msra.mxu0 %v787
      %1040 = vmatpush.msra.mxu0 %v785
      %1041 = vmatmul.f32.gmra.mxu0 %v956
      %v1042 = vpop.f32.mrf.mxu0
      %v1043 = vadd.f32 %v965, %v1042
      %1044 = vmatmul.f32.gmra.mxu0 %v958
      %v1045 = vpop.f32.mrf.mxu0
      %v1046 = vadd.f32 %v970, %v1045
      %1047 = vdwg.mxu0
      %1048 = vmatpush.msra.mxu0 0.0
      %1049 = vmatpush.msra.mxu0 0.0
      %1050 = vmatpush.msra.mxu0 0.0
      %1051 = vmatpush.msra.mxu0 0.0
      %1052 = vmatpush.msra.mxu0 0.0
      %1053 = vmatpush.msra.mxu0 0.0
      %1054 = vmatpush.msra.mxu0 0.0
      %1055 = vmatpush.msra.mxu0 0.0
      %1056 = vmatpush.msra.mxu0 0.0
      %1057 = vmatpush.msra.mxu0 0.0
      %1058 = vmatpush.msra.mxu0 0.0
      %1059 = vmatpush.msra.mxu0 0.0
      %1060 = vmatpush.msra.mxu0 0.0
      %1061 = vmatpush.msra.mxu0 0.0
      %1062 = vmatpush.msra.mxu0 %v955
      %1063 = vmatpush.msra.mxu0 %v953
      %1064 = vmatmul.f32.gmra.mxu0 %v974
      %v1065 = vpop.f32.mrf.mxu0
      %v1066 = vadd.f32 %v1043, %v1065
      %1067 = vmatmul.f32.gmra.mxu0 %v977
      %v1068 = vpop.f32.mrf.mxu0
      %v1069 = vadd.f32 %v1046, %v1068
      %1070 = vdwg.mxu0
      %v1071 = vmax.f32 %v1020, 0.0
      %v1072 = vmax.f32 %v1066, 0.0
      %v1073 = vmax.f32 %v1023, 0.0
      %v1074 = vmax.f32 %v1069, 0.0
      %1075 = vrot.lane.b32.xlu0 %v1071, 17
      %v1076 = vpop.permute.xlu0 %1075
      %1077 = vrot.lane.b32.xlu0 %v1073, 17
      %v1078 = vpop.permute.xlu0 %1077
      %1079 = vrot.lane.b32.xlu0 %v1072, 17
      %v1080 = vpop.permute.xlu0 %1079
      %1081 = vrot.lane.b32.xlu0 %v1074, 17
      %v1082 = vpop.permute.xlu0 %1081
      %v1083 = vsel %vm773, %v1076, %v1080
      %v1084 = vsel %vm773, %v1078, %v1082
      %v1085 = vsel %vm773, %v1080, %v1076
      %v1086 = vsel %vm773, %v1082, %v1078
      %v1087 = vmul.f32 %v1085, %v780
      %v1088 = vmul.f32 %v1083, %v781
      %v1089 = vmul.f32 %v1086, %v780
      %v1090 = vmul.f32 %v1084, %v781
      %1091 = vrot.lane.b32.xlu0 %v1071, 16
      %v1092 = vpop.permute.xlu0 %1091
      %1093 = vrot.lane.b32.xlu0 %v1073, 16
      %v1094 = vpop.permute.xlu0 %1093
      %1095 = vrot.lane.b32.xlu0 %v1072, 16
      %v1096 = vpop.permute.xlu0 %1095
      %1097 = vrot.lane.b32.xlu0 %v1074, 16
      %v1098 = vpop.permute.xlu0 %1097
      %v1099 = vsel %vm796, %v1092, %v1096
      %v1100 = vsel %vm796, %v1094, %v1098
      %v1101 = vsel %vm796, %v1096, %v1092
      %v1102 = vsel %vm796, %v1098, %v1094
      %v1103 = vmul.f32 %v1101, %v804
      %v1104 = vmul.f32 %v1099, %v805
      %v1105 = vmul.f32 %v1102, %v804
      %v1106 = vmul.f32 %v1100, %v805
      %1107 = vrot.lane.b32.xlu0 %v1071, 15
      %v1108 = vpop.permute.xlu0 %1107
      %1109 = vrot.lane.b32.xlu0 %v1073, 15
      %v1110 = vpop.permute.xlu0 %1109
      %1111 = vrot.lane.b32.xlu0 %v1072, 15
      %v1112 = vpop.permute.xlu0 %1111
      %1113 = vrot.lane.b32.xlu0 %v1074, 15
      %v1114 = vpop.permute.xlu0 %1113
      %v1115 = vsel %vm820, %v1108, %v1112
      %v1116 = vsel %vm820, %v1110, %v1114
      %v1117 = vsel %vm820, %v1112, %v1108
      %v1118 = vsel %vm820, %v1114, %v1110
      %v1119 = vmul.f32 %v1117, %v828
      %v1120 = vmul.f32 %v1115, %v829
      %v1121 = vmul.f32 %v1118, %v828
      %v1122 = vmul.f32 %v1116, %v829
      %1123 = vrot.lane.b32.xlu0 %v1071, 1
      %v1124 = vpop.permute.xlu0 %1123
      %1125 = vrot.lane.b32.xlu0 %v1073, 1
      %v1126 = vpop.permute.xlu0 %1125
      %1127 = vrot.lane.b32.xlu0 %v1072, 1
      %v1128 = vpop.permute.xlu0 %1127
      %1129 = vrot.lane.b32.xlu0 %v1074, 1
      %v1130 = vpop.permute.xlu0 %1129
      %v1131 = vsel %vm844, %v1124, %v1128
      %v1132 = vsel %vm844, %v1126, %v1130
      %v1133 = vsel %vm844, %v1128, %v1124
      %v1134 = vsel %vm844, %v1130, %v1126
      %v1135 = vmul.f32 %v1133, %v852
      %v1136 = vmul.f32 %v1131, %v853
      %v1137 = vmul.f32 %v1134, %v852
      %v1138 = vmul.f32 %v1132, %v853
      %1139 = vrot.lane.b32.xlu0 %v1071, 127
      %v1140 = vpop.permute.xlu0 %1139
      %1141 = vrot.lane.b32.xlu0 %v1073, 127
      %v1142 = vpop.permute.xlu0 %1141
      %1143 = vrot.lane.b32.xlu0 %v1072, 127
      %v1144 = vpop.permute.xlu0 %1143
      %1145 = vrot.lane.b32.xlu0 %v1074, 127
      %v1146 = vpop.permute.xlu0 %1145
      %v1147 = vsel %vm868, %v1140, %v1144
      %v1148 = vsel %vm868, %v1142, %v1146
      %v1149 = vsel %vm868, %v1144, %v1140
      %v1150 = vsel %vm868, %v1146, %v1142
      %v1151 = vmul.f32 %v1147, %v876
      %v1152 = vmul.f32 %v1149, %v877
      %v1153 = vmul.f32 %v1148, %v876
      %v1154 = vmul.f32 %v1150, %v877
      %1155 = vrot.lane.b32.xlu0 %v1071, 113
      %v1156 = vpop.permute.xlu0 %1155
      %1157 = vrot.lane.b32.xlu0 %v1073, 113
      %v1158 = vpop.permute.xlu0 %1157
      %1159 = vrot.lane.b32.xlu0 %v1072, 113
      %v1160 = vpop.permute.xlu0 %1159
      %1161 = vrot.lane.b32.xlu0 %v1074, 113
      %v1162 = vpop.permute.xlu0 %1161
      %v1163 = vsel %vm892, %v1156, %v1160
      %v1164 = vsel %vm892, %v1158, %v1162
      %v1165 = vsel %vm892, %v1160, %v1156
      %v1166 = vsel %vm892, %v1162, %v1158
      %v1167 = vmul.f32 %v1163, %v900
      %v1168 = vmul.f32 %v1165, %v901
      %v1169 = vmul.f32 %v1164, %v900
      %v1170 = vmul.f32 %v1166, %v901
      %1171 = vrot.lane.b32.xlu0 %v1071, 112
      %v1172 = vpop.permute.xlu0 %1171
      %1173 = vrot.lane.b32.xlu0 %v1073, 112
      %v1174 = vpop.permute.xlu0 %1173
      %1175 = vrot.lane.b32.xlu0 %v1072, 112
      %v1176 = vpop.permute.xlu0 %1175
      %1177 = vrot.lane.b32.xlu0 %v1074, 112
      %v1178 = vpop.permute.xlu0 %1177
      %v1179 = vsel %vm916, %v1172, %v1176
      %v1180 = vsel %vm916, %v1174, %v1178
      %v1181 = vsel %vm916, %v1176, %v1172
      %v1182 = vsel %vm916, %v1178, %v1174
      %v1183 = vmul.f32 %v1179, %v924
      %v1184 = vmul.f32 %v1181, %v925
      %v1185 = vmul.f32 %v1180, %v924
      %v1186 = vmul.f32 %v1182, %v925
      %1187 = vrot.lane.b32.xlu0 %v1071, 111
      %v1188 = vpop.permute.xlu0 %1187
      %1189 = vrot.lane.b32.xlu0 %v1073, 111
      %v1190 = vpop.permute.xlu0 %1189
      %1191 = vrot.lane.b32.xlu0 %v1072, 111
      %v1192 = vpop.permute.xlu0 %1191
      %1193 = vrot.lane.b32.xlu0 %v1074, 111
      %v1194 = vpop.permute.xlu0 %1193
      %v1195 = vsel %vm940, %v1188, %v1192
      %v1196 = vsel %vm940, %v1190, %v1194
      %v1197 = vsel %vm940, %v1192, %v1188
      %v1198 = vsel %vm940, %v1194, %v1190
      %v1199 = vmul.f32 %v1195, %v948
      %v1200 = vmul.f32 %v1197, %v949
      %v1201 = vmul.f32 %v1196, %v948
      %v1202 = vmul.f32 %v1198, %v949
      %v1203 = vld [vmem:[%s6] sm:$0xff]
      %v1204 = vld [vmem:[%s6 + $0x8] sm:$0xff]
      %v1205 = vld [vmem:[%s6 + $0x10] sm:$0xff]
      %v1206 = vld [vmem:[%s6 + $0x18] sm:$0xff]
      %v1207 = vld [vmem:[%s7] sm:$0xff]
      %v1208 = vld [vmem:[%s7 + $0x8] sm:$0xff]
      %1210 = vset.pattern.permute.xlu0 0
      %1211 = vperm.xlu0 %1210, %v1207
      %v1212 = vpop.permute.xlu0 %1211
      %1215 = vset.pattern.permute.xlu0 0
      %1216 = vperm.xlu0 %1215, %v1208
      %v1217 = vpop.permute.xlu0 %1216
      %v1220 = vsel %vm972, %v1204, 0
      %v1223 = vsel %vm972, %v1206, 0
      %1225 = vmatpush.msra.mxu0 %v1185
      %1226 = vmatpush.msra.mxu0 %v1183
      %1227 = vmatpush.msra.mxu0 %v1169
      %1228 = vmatpush.msra.mxu0 %v1167
      %1229 = vmatpush.msra.mxu0 %v1153
      %1230 = vmatpush.msra.mxu0 %v1151
      %1231 = vmatpush.msra.mxu0 %v1073
      %1232 = vmatpush.msra.mxu0 %v1071
      %1233 = vmatpush.msra.mxu0 %v1137
      %1234 = vmatpush.msra.mxu0 %v1135
      %1235 = vmatpush.msra.mxu0 %v1121
      %1236 = vmatpush.msra.mxu0 %v1119
      %1237 = vmatpush.msra.mxu0 %v1105
      %1238 = vmatpush.msra.mxu0 %v1103
      %1239 = vmatpush.msra.mxu0 %v1089
      %1240 = vmatpush.msra.mxu0 %v1087
      %1241 = vmatmul.f32.gmra.mxu0 %v1203
      %v1242 = vpop.f32.mrf.mxu0
      %v1243 = vadd.f32 %v1212, %v1242
      %1244 = vmatmul.f32.gmra.mxu0 %v1205
      %v1245 = vpop.f32.mrf.mxu0
      %v1246 = vadd.f32 %v1217, %v1245
      %1247 = vdwg.mxu0
      %1248 = vmatpush.msra.mxu0 0.0
      %1249 = vmatpush.msra.mxu0 0.0
      %1250 = vmatpush.msra.mxu0 0.0
      %1251 = vmatpush.msra.mxu0 0.0
      %1252 = vmatpush.msra.mxu0 0.0
      %1253 = vmatpush.msra.mxu0 0.0
      %1254 = vmatpush.msra.mxu0 0.0
      %1255 = vmatpush.msra.mxu0 0.0
      %1256 = vmatpush.msra.mxu0 0.0
      %1257 = vmatpush.msra.mxu0 0.0
      %1258 = vmatpush.msra.mxu0 0.0
      %1259 = vmatpush.msra.mxu0 0.0
      %1260 = vmatpush.msra.mxu0 0.0
      %1261 = vmatpush.msra.mxu0 0.0
      %1262 = vmatpush.msra.mxu0 %v1201
      %1263 = vmatpush.msra.mxu0 %v1199
      %1264 = vmatmul.f32.gmra.mxu0 %v1220
      %v1265 = vpop.f32.mrf.mxu0
      %v1266 = vadd.f32 %v1243, %v1265
      %1267 = vmatmul.f32.gmra.mxu0 %v1223
      %v1268 = vpop.f32.mrf.mxu0
      %v1269 = vadd.f32 %v1246, %v1268
      %1270 = vdwg.mxu0
      %1271 = vmatpush.msra.mxu0 %v1186
      %1272 = vmatpush.msra.mxu0 %v1184
      %1273 = vmatpush.msra.mxu0 %v1170
      %1274 = vmatpush.msra.mxu0 %v1168
      %1275 = vmatpush.msra.mxu0 %v1154
      %1276 = vmatpush.msra.mxu0 %v1152
      %1277 = vmatpush.msra.mxu0 %v1074
      %1278 = vmatpush.msra.mxu0 %v1072
      %1279 = vmatpush.msra.mxu0 %v1138
      %1280 = vmatpush.msra.mxu0 %v1136
      %1281 = vmatpush.msra.mxu0 %v1122
      %1282 = vmatpush.msra.mxu0 %v1120
      %1283 = vmatpush.msra.mxu0 %v1106
      %1284 = vmatpush.msra.mxu0 %v1104
      %1285 = vmatpush.msra.mxu0 %v1090
      %1286 = vmatpush.msra.mxu0 %v1088
      %1287 = vmatmul.f32.gmra.mxu0 %v1203
      %v1288 = vpop.f32.mrf.mxu0
      %v1289 = vadd.f32 %v1212, %v1288
      %1290 = vmatmul.f32.gmra.mxu0 %v1205
      %v1291 = vpop.f32.mrf.mxu0
      %v1292 = vadd.f32 %v1217, %v1291
      %1293 = vdwg.mxu0
      %1294 = vmatpush.msra.mxu0 0.0
      %1295 = vmatpush.msra.mxu0 0.0
      %1296 = vmatpush.msra.mxu0 0.0
      %1297 = vmatpush.msra.mxu0 0.0
      %1298 = vmatpush.msra.mxu0 0.0
      %1299 = vmatpush.msra.mxu0 0.0
      %1300 = vmatpush.msra.mxu0 0.0
      %1301 = vmatpush.msra.mxu0 0.0
      %1302 = vmatpush.msra.mxu0 0.0
      %1303 = vmatpush.msra.mxu0 0.0
      %1304 = vmatpush.msra.mxu0 0.0
      %1305 = vmatpush.msra.mxu0 0.0
      %1306 = vmatpush.msra.mxu0 0.0
      %1307 = vmatpush.msra.mxu0 0.0
      %1308 = vmatpush.msra.mxu0 %v1202
      %1309 = vmatpush.msra.mxu0 %v1200
      %1310 = vmatmul.f32.gmra.mxu0 %v1220
      %v1311 = vpop.f32.mrf.mxu0
      %v1312 = vadd.f32 %v1289, %v1311
      %1313 = vmatmul.f32.gmra.mxu0 %v1223
      %v1314 = vpop.f32.mrf.mxu0
      %v1315 = vadd.f32 %v1292, %v1314
      %1316 = vdwg.mxu0
      %v1317 = vmax.f32 %v1266, 0.0
      %v1318 = vmax.f32 %v1312, 0.0
      %v1319 = vmax.f32 %v1269, 0.0
      %v1320 = vmax.f32 %v1315, 0.0
      %v1321 = vld [vmem:[%s8] sm:$0xff]
      %v1322 = vld [vmem:[%s9] sm:$0xff]
      %1324 = vset.pattern.permute.xlu0 0
      %1325 = vperm.xlu0 %1324, %v1322
      %v1326 = vpop.permute.xlu0 %1325
      %v1329 = vsel %vm972, %v1321, 0
      %1331 = vmatpush.msra.mxu0 0.0
      %1332 = vmatpush.msra.mxu0 0.0
      %1333 = vmatpush.msra.mxu0 0.0
      %1334 = vmatpush.msra.mxu0 0.0
      %1335 = vmatpush.msra.mxu0 0.0
      %1336 = vmatpush.msra.mxu0 0.0
      %1337 = vmatpush.msra.mxu0 0.0
      %1338 = vmatpush.msra.mxu0 0.0
      %1339 = vmatpush.msra.mxu0 0.0
      %1340 = vmatpush.msra.mxu0 0.0
      %1341 = vmatpush.msra.mxu0 0.0
      %1342 = vmatpush.msra.mxu0 0.0
      %1343 = vmatpush.msra.mxu0 0.0
      %1344 = vmatpush.msra.mxu0 0.0
      %1345 = vmatpush.msra.mxu0 %v1319
      %1346 = vmatpush.msra.mxu0 %v1317
      %1347 = vmatmul.f32.gmra.mxu0 %v1329
      %v1348 = vpop.f32.mrf.mxu0
      %v1349 = vadd.f32 %v1326, %v1348
      %1350 = vdwg.mxu0
      %1351 = vmatpush.msra.mxu0 0.0
      %1352 = vmatpush.msra.mxu0 0.0
      %1353 = vmatpush.msra.mxu0 0.0
      %1354 = vmatpush.msra.mxu0 0.0
      %1355 = vmatpush.msra.mxu0 0.0
      %1356 = vmatpush.msra.mxu0 0.0
      %1357 = vmatpush.msra.mxu0 0.0
      %1358 = vmatpush.msra.mxu0 0.0
      %1359 = vmatpush.msra.mxu0 0.0
      %1360 = vmatpush.msra.mxu0 0.0
      %1361 = vmatpush.msra.mxu0 0.0
      %1362 = vmatpush.msra.mxu0 0.0
      %1363 = vmatpush.msra.mxu0 0.0
      %1364 = vmatpush.msra.mxu0 0.0
      %1365 = vmatpush.msra.mxu0 %v1320
      %1366 = vmatpush.msra.mxu0 %v1318
      %1367 = vmatmul.f32.gmra.mxu0 %v1329
      %v1368 = vpop.f32.mrf.mxu0
      %v1369 = vadd.f32 %v1326, %v1368
      %1370 = vdwg.mxu0
      %v1371 = vtanh.pop %v1349
      %v1372 = vtanh.pop %v1369
      %1373 = vst [vmem:[%s743] sm:$0xff] %v1371
      %1374 = vst [vmem:[%s743 + $0x8] sm:$0xff] %v1372
      %1375 = vrot.lane.b32.xlu0 %v749, 17
      %v1376 = vpop.permute.xlu0 %1375
      %1377 = vrot.lane.b32.xlu0 %v751, 17
      %v1378 = vpop.permute.xlu0 %1377
      %1379 = vrot.lane.b32.xlu0 %v750, 17
      %v1380 = vpop.permute.xlu0 %1379
      %1381 = vrot.lane.b32.xlu0 %v752, 17
      %v1382 = vpop.permute.xlu0 %1381
      %v1383 = vsel %vm773, %v1376, %v1380
      %v1384 = vsel %vm773, %v1378, %v1382
      %v1385 = vsel %vm773, %v1380, %v1376
      %v1386 = vsel %vm773, %v1382, %v1378
      %v1387 = vld [vmem:[%s0] ss:$8 sm:$0x3]
      %v1389 = vperm.slane %v1387, 0
      %v1390 = vperm.slane %v1387, 1
      %v1393 = vmul.f32 %v1385, %v1389
      %v1394 = vmul.f32 %v1383, %v1390
      %v1395 = vmul.f32 %v1386, %v1389
      %v1396 = vmul.f32 %v1384, %v1390
      %1397 = vrot.lane.b32.xlu0 %v749, 16
      %v1398 = vpop.permute.xlu0 %1397
      %1399 = vrot.lane.b32.xlu0 %v751, 16
      %v1400 = vpop.permute.xlu0 %1399
      %1401 = vrot.lane.b32.xlu0 %v750, 16
      %v1402 = vpop.permute.xlu0 %1401
      %1403 = vrot.lane.b32.xlu0 %v752, 16
      %v1404 = vpop.permute.xlu0 %1403
      %v1405 = vsel %vm796, %v1398, %v1402
      %v1406 = vsel %vm796, %v1400, %v1404
      %v1407 = vsel %vm796, %v1402, %v1398
      %v1408 = vsel %vm796, %v1404, %v1400
      %v1409 = vld [vmem:[%s801] ss:$8 sm:$0x3]
      %v1411 = vperm.slane %v1409, 0
      %v1412 = vperm.slane %v1409, 1
      %v1415 = vmul.f32 %v1407, %v1411
      %v1416 = vmul.f32 %v1405, %v1412
      %v1417 = vmul.f32 %v1408, %v1411
      %v1418 = vmul.f32 %v1406, %v1412
      %1419 = vrot.lane.b32.xlu0 %v749, 15
      %v1420 = vpop.permute.xlu0 %1419
      %1421 = vrot.lane.b32.xlu0 %v751, 15
      %v1422 = vpop.permute.xlu0 %1421
      %1423 = vrot.lane.b32.xlu0 %v750, 15
      %v1424 = vpop.permute.xlu0 %1423
      %1425 = vrot.lane.b32.xlu0 %v752, 15
      %v1426 = vpop.permute.xlu0 %1425
      %v1427 = vsel %vm820, %v1420, %v1424
      %v1428 = vsel %vm820, %v1422, %v1426
      %v1429 = vsel %vm820, %v1424, %v1420
      %v1430 = vsel %vm820, %v1426, %v1422
      %v1431 = vld [vmem:[%s825] ss:$8 sm:$0x3]
      %v1433 = vperm.slane %v1431, 0
      %v1434 = vperm.slane %v1431, 1
      %v1437 = vmul.f32 %v1429, %v1433
      %v1438 = vmul.f32 %v1427, %v1434
      %v1439 = vmul.f32 %v1430, %v1433
      %v1440 = vmul.f32 %v1428, %v1434
      %1441 = vrot.lane.b32.xlu0 %v749, 1
      %v1442 = vpop.permute.xlu0 %1441
      %1443 = vrot.lane.b32.xlu0 %v751, 1
      %v1444 = vpop.permute.xlu0 %1443
      %1445 = vrot.lane.b32.xlu0 %v750, 1
      %v1446 = vpop.permute.xlu0 %1445
      %1447 = vrot.lane.b32.xlu0 %v752, 1
      %v1448 = vpop.permute.xlu0 %1447
      %v1449 = vsel %vm844, %v1442, %v1446
      %v1450 = vsel %vm844, %v1444, %v1448
      %v1451 = vsel %vm844, %v1446, %v1442
      %v1452 = vsel %vm844, %v1448, %v1444
      %v1453 = vld [vmem:[%s849] ss:$8 sm:$0x3]
      %v1455 = vperm.slane %v1453, 0
      %v1456 = vperm.slane %v1453, 1
      %v1459 = vmul.f32 %v1451, %v1455
      %v1460 = vmul.f32 %v1449, %v1456
      %v1461 = vmul.f32 %v1452, %v1455
      %v1462 = vmul.f32 %v1450, %v1456
      %1463 = vrot.lane.b32.xlu0 %v749, 127
      %v1464 = vpop.permute.xlu0 %1463
      %1465 = vrot.lane.b32.xlu0 %v751, 127
      %v1466 = vpop.permute.xlu0 %1465
      %1467 = vrot.lane.b32.xlu0 %v750, 127
      %v1468 = vpop.permute.xlu0 %1467
      %1469 = vrot.lane.b32.xlu0 %v752, 127
      %v1470 = vpop.permute.xlu0 %1469
      %v1471 = vsel %vm868, %v1464, %v1468
      %v1472 = vsel %vm868, %v1466, %v1470
      %v1473 = vsel %vm868, %v1468, %v1464
      %v1474 = vsel %vm868, %v1470, %v1466
      %v1475 = vld [vmem:[%s873] ss:$8 sm:$0x3]
      %v1477 = vperm.slane %v1475, 0
      %v1478 = vperm.slane %v1475, 1
      %v1481 = vmul.f32 %v1471, %v1477
      %v1482 = vmul.f32 %v1473, %v1478
      %v1483 = vmul.f32 %v1472, %v1477
      %v1484 = vmul.f32 %v1474, %v1478
      %1485 = vrot.lane.b32.xlu0 %v749, 113
      %v1486 = vpop.permute.xlu0 %1485
      %1487 = vrot.lane.b32.xlu0 %v751, 113
      %v1488 = vpop.permute.xlu0 %1487
      %1489 = vrot.lane.b32.xlu0 %v750, 113
      %v1490 = vpop.permute.xlu0 %1489
      %1491 = vrot.lane.b32.xlu0 %v752, 113
      %v1492 = vpop.permute.xlu0 %1491
      %v1493 = vsel %vm892, %v1486, %v1490
      %v1494 = vsel %vm892, %v1488, %v1492
      %v1495 = vsel %vm892, %v1490, %v1486
      %v1496 = vsel %vm892, %v1492, %v1488
      %v1497 = vld [vmem:[%s897] ss:$8 sm:$0x3]
      %v1499 = vperm.slane %v1497, 0
      %v1500 = vperm.slane %v1497, 1
      %v1503 = vmul.f32 %v1493, %v1499
      %v1504 = vmul.f32 %v1495, %v1500
      %v1505 = vmul.f32 %v1494, %v1499
      %v1506 = vmul.f32 %v1496, %v1500
      %1507 = vrot.lane.b32.xlu0 %v749, 112
      %v1508 = vpop.permute.xlu0 %1507
      %1509 = vrot.lane.b32.xlu0 %v751, 112
      %v1510 = vpop.permute.xlu0 %1509
      %1511 = vrot.lane.b32.xlu0 %v750, 112
      %v1512 = vpop.permute.xlu0 %1511
      %1513 = vrot.lane.b32.xlu0 %v752, 112
      %v1514 = vpop.permute.xlu0 %1513
      %v1515 = vsel %vm916, %v1508, %v1512
      %v1516 = vsel %vm916, %v1510, %v1514
      %v1517 = vsel %vm916, %v1512, %v1508
      %v1518 = vsel %vm916, %v1514, %v1510
      %v1519 = vld [vmem:[%s921] ss:$8 sm:$0x3]
      %v1521 = vperm.slane %v1519, 0
      %v1522 = vperm.slane %v1519, 1
      %v1525 = vmul.f32 %v1515, %v1521
      %v1526 = vmul.f32 %v1517, %v1522
      %v1527 = vmul.f32 %v1516, %v1521
      %v1528 = vmul.f32 %v1518, %v1522
      %1529 = vrot.lane.b32.xlu0 %v749, 111
      %v1530 = vpop.permute.xlu0 %1529
      %1531 = vrot.lane.b32.xlu0 %v751, 111
      %v1532 = vpop.permute.xlu0 %1531
      %1533 = vrot.lane.b32.xlu0 %v750, 111
      %v1534 = vpop.permute.xlu0 %1533
      %1535 = vrot.lane.b32.xlu0 %v752, 111
      %v1536 = vpop.permute.xlu0 %1535
      %v1537 = vsel %vm940, %v1530, %v1534
      %v1538 = vsel %vm940, %v1532, %v1536
      %v1539 = vsel %vm940, %v1534, %v1530
      %v1540 = vsel %vm940, %v1536, %v1532
      %v1541 = vld [vmem:[%s945] ss:$8 sm:$0x3]
      %v1543 = vperm.slane %v1541, 0
      %v1544 = vperm.slane %v1541, 1
      %v1547 = vmul.f32 %v1537, %v1543
      %v1548 = vmul.f32 %v1539, %v1544
      %v1549 = vmul.f32 %v1538, %v1543
      %v1550 = vmul.f32 %v1540, %v1544
      %v1551 = vld [vmem:[%s10] sm:$0xff]
      %v1552 = vld [vmem:[%s10 + $0x8] sm:$0xff]
      %v1553 = vld [vmem:[%s10 + $0x10] sm:$0xff]
      %v1554 = vld [vmem:[%s10 + $0x18] sm:$0xff]
      %v1555 = vld [vmem:[%s11] sm:$0xff]
      %v1556 = vld [vmem:[%s11 + $0x8] sm:$0xff]
      %1558 = vset.pattern.permute.xlu0 0
      %1559 = vperm.xlu0 %1558, %v1555
      %v1560 = vpop.permute.xlu0 %1559
      %1563 = vset.pattern.permute.xlu0 0
      %1564 = vperm.xlu0 %1563, %v1556
      %v1565 = vpop.permute.xlu0 %1564
      %v1568 = vsel %vm972, %v1552, 0
      %v1571 = vsel %vm972, %v1554, 0
      %1573 = vmatpush.msra.mxu0 %v1527
      %1574 = vmatpush.msra.mxu0 %v1525
      %1575 = vmatpush.msra.mxu0 %v1505
      %1576 = vmatpush.msra.mxu0 %v1503
      %1577 = vmatpush.msra.mxu0 %v1483
      %1578 = vmatpush.msra.mxu0 %v1481
      %1579 = vmatpush.msra.mxu0 %v751
      %1580 = vmatpush.msra.mxu0 %v749
      %1581 = vmatpush.msra.mxu0 %v1461
      %1582 = vmatpush.msra.mxu0 %v1459
      %1583 = vmatpush.msra.mxu0 %v1439
      %1584 = vmatpush.msra.mxu0 %v1437
      %1585 = vmatpush.msra.mxu0 %v1417
      %1586 = vmatpush.msra.mxu0 %v1415
      %1587 = vmatpush.msra.mxu0 %v1395
      %1588 = vmatpush.msra.mxu0 %v1393
      %1589 = vmatmul.f32.gmra.mxu0 %v1551
      %v1590 = vpop.f32.mrf.mxu0
      %v1591 = vadd.f32 %v1560, %v1590
      %1592 = vmatmul.f32.gmra.mxu0 %v1553
      %v1593 = vpop.f32.mrf.mxu0
      %v1594 = vadd.f32 %v1565, %v1593
      %1595 = vdwg.mxu0
      %1596 = vmatpush.msra.mxu0 0.0
      %1597 = vmatpush.msra.mxu0 0.0
      %1598 = vmatpush.msra.mxu0 0.0
      %1599 = vmatpush.msra.mxu0 0.0
      %1600 = vmatpush.msra.mxu0 0.0
      %1601 = vmatpush.msra.mxu0 0.0
      %1602 = vmatpush.msra.mxu0 0.0
      %1603 = vmatpush.msra.mxu0 0.0
      %1604 = vmatpush.msra.mxu0 0.0
      %1605 = vmatpush.msra.mxu0 0.0
      %1606 = vmatpush.msra.mxu0 0.0
      %1607 = vmatpush.msra.mxu0 0.0
      %1608 = vmatpush.msra.mxu0 0.0
      %1609 = vmatpush.msra.mxu0 0.0
      %1610 = vmatpush.msra.mxu0 %v1549
      %1611 = vmatpush.msra.mxu0 %v1547
      %1612 = vmatmul.f32.gmra.mxu0 %v1568
      %v1613 = vpop.f32.mrf.mxu0
      %v1614 = vadd.f32 %v1591, %v1613
      %1615 = vmatmul.f32.gmra.mxu0 %v1571
      %v1616 = vpop.f32.mrf.mxu0
      %v1617 = vadd.f32 %v1594, %v1616
      %1618 = vdwg.mxu0
      %1619 = vmatpush.msra.mxu0 %v1528
      %1620 = vmatpush.msra.mxu0 %v1526
      %1621 = vmatpush.msra.mxu0 %v1506
      %1622 = vmatpush.msra.mxu0 %v1504
      %1623 = vmatpush.msra.mxu0 %v1484
      %1624 = vmatpush.msra.mxu0 %v1482
      %1625 = vmatpush.msra.mxu0 %v752
      %1626 = vmatpush.msra.mxu0 %v750
      %1627 = vmatpush.msra.mxu0 %v1462
      %1628 = vmatpush.msra.mxu0 %v1460
      %1629 = vmatpush.msra.mxu0 %v1440
      %1630 = vmatpush.msra.mxu0 %v1438
      %1631 = vmatpush.msra.mxu0 %v1418
      %1632 = vmatpush.msra.mxu0 %v1416
      %1633 = vmatpush.msra.mxu0 %v1396
      %1634 = vmatpush.msra.mxu0 %v1394
      %1635 = vmatmul.f32.gmra.mxu0 %v1551
      %v1636 = vpop.f32.mrf.mxu0
      %v1637 = vadd.f32 %v1560, %v1636
      %1638 = vmatmul.f32.gmra.mxu0 %v1553
      %v1639 = vpop.f32.mrf.mxu0
      %v1640 = vadd.f32 %v1565, %v1639
      %1641 = vdwg.mxu0
      %1642 = vmatpush.msra.mxu0 0.0
      %1643 = vmatpush.msra.mxu0 0.0
      %1644 = vmatpush.msra.mxu0 0.0
      %1645 = vmatpush.msra.mxu0 0.0
      %1646 = vmatpush.msra.mxu0 0.0
      %1647 = vmatpush.msra.mxu0 0.0
      %1648 = vmatpush.msra.mxu0 0.0
      %1649 = vmatpush.msra.mxu0 0.0
      %1650 = vmatpush.msra.mxu0 0.0
      %1651 = vmatpush.msra.mxu0 0.0
      %1652 = vmatpush.msra.mxu0 0.0
      %1653 = vmatpush.msra.mxu0 0.0
      %1654 = vmatpush.msra.mxu0 0.0
      %1655 = vmatpush.msra.mxu0 0.0
      %1656 = vmatpush.msra.mxu0 %v1550
      %1657 = vmatpush.msra.mxu0 %v1548
      %1658 = vmatmul.f32.gmra.mxu0 %v1568
      %v1659 = vpop.f32.mrf.mxu0
      %v1660 = vadd.f32 %v1637, %v1659
      %1661 = vmatmul.f32.gmra.mxu0 %v1571
      %v1662 = vpop.f32.mrf.mxu0
      %v1663 = vadd.f32 %v1640, %v1662
      %1664 = vdwg.mxu0
      %v1665 = vmax.f32 %v1614, 0.0
      %v1666 = vmax.f32 %v1660, 0.0
      %v1667 = vmax.f32 %v1617, 0.0
      %v1668 = vmax.f32 %v1663, 0.0
      %v1669 = vld [vmem:[%s12] sm:$0xff]
      %v1670 = vld [vmem:[%s13] sm:$0xff]
      %1672 = vset.pattern.permute.xlu0 0
      %1673 = vperm.xlu0 %1672, %v1670
      %v1674 = vpop.permute.xlu0 %1673
      %v1677 = vsel %vm972, %v1669, 0
      %1679 = vmatpush.msra.mxu0 0.0
      %1680 = vmatpush.msra.mxu0 0.0
      %1681 = vmatpush.msra.mxu0 0.0
      %1682 = vmatpush.msra.mxu0 0.0
      %1683 = vmatpush.msra.mxu0 0.0
      %1684 = vmatpush.msra.mxu0 0.0
      %1685 = vmatpush.msra.mxu0 0.0
      %1686 = vmatpush.msra.mxu0 0.0
      %1687 = vmatpush.msra.mxu0 0.0
      %1688 = vmatpush.msra.mxu0 0.0
      %1689 = vmatpush.msra.mxu0 0.0
      %1690 = vmatpush.msra.mxu0 0.0
      %1691 = vmatpush.msra.mxu0 0.0
      %1692 = vmatpush.msra.mxu0 0.0
      %1693 = vmatpush.msra.mxu0 %v1667
      %1694 = vmatpush.msra.mxu0 %v1665
      %1695 = vmatmul.f32.gmra.mxu0 %v1677
      %v1696 = vpop.f32.mrf.mxu0
      %v1697 = vadd.f32 %v1674, %v1696
      %1698 = vdwg.mxu0
      %1699 = vmatpush.msra.mxu0 0.0
      %1700 = vmatpush.msra.mxu0 0.0
      %1701 = vmatpush.msra.mxu0 0.0
      %1702 = vmatpush.msra.mxu0 0.0
      %1703 = vmatpush.msra.mxu0 0.0
      %1704 = vmatpush.msra.mxu0 0.0
      %1705 = vmatpush.msra.mxu0 0.0
      %1706 = vmatpush.msra.mxu0 0.0
      %1707 = vmatpush.msra.mxu0 0.0
      %1708 = vmatpush.msra.mxu0 0.0
      %1709 = vmatpush.msra.mxu0 0.0
      %1710 = vmatpush.msra.mxu0 0.0
      %1711 = vmatpush.msra.mxu0 0.0
      %1712 = vmatpush.msra.mxu0 0.0
      %1713 = vmatpush.msra.mxu0 %v1668
      %1714 = vmatpush.msra.mxu0 %v1666
      %1715 = vmatmul.f32.gmra.mxu0 %v1677
      %v1716 = vpop.f32.mrf.mxu0
      %v1717 = vadd.f32 %v1674, %v1716
      %1718 = vdwg.mxu0
      %v1719 = vtanh.pop %v1697
      %v1720 = vtanh.pop %v1717
      %1721 = vst [vmem:[%s748] sm:$0xff] %v1719
      %1722 = vst [vmem:[%s748 + $0x8] sm:$0xff] %v1720
      %v1723 = vld [vmem:[%s14] sm:$0xff]
      %v1724 = vld [vmem:[%s14 + $0x8] sm:$0xff]
      %v1725 = vld [vmem:[%s15] sm:$0xff]
      %v1726 = vld [vmem:[%s15 + $0x8] sm:$0xff]
      %1728 = vset.pattern.permute.xlu0 0
      %1729 = vperm.xlu0 %1728, %v1725
      %v1730 = vpop.permute.xlu0 %1729
      %1733 = vset.pattern.permute.xlu0 0
      %1734 = vperm.xlu0 %1733, %v1726
      %v1735 = vpop.permute.xlu0 %1734
      %vm1737 = vcmask 261120
      %v1739 = vsel %vm1737, %v1723, 0
      %v1742 = vsel %vm1737, %v1724, 0
      %1744 = vmatpush.msra.mxu0 0.0
      %1745 = vmatpush.msra.mxu0 0.0
      %1746 = vmatpush.msra.mxu0 0.0
      %1747 = vmatpush.msra.mxu0 0.0
      %1748 = vmatpush.msra.mxu0 0.0
      %1749 = vmatpush.msra.mxu0 0.0
      %1750 = vmatpush.msra.mxu0 0.0
      %1751 = vmatpush.msra.mxu0 0.0
      %1752 = vmatpush.msra.mxu0 0.0
      %1753 = vmatpush.msra.mxu0 0.0
      %1754 = vmatpush.msra.mxu0 0.0
      %1755 = vmatpush.msra.mxu0 0.0
      %1756 = vmatpush.msra.mxu0 %v1667
      %1757 = vmatpush.msra.mxu0 %v1665
      %1758 = vmatpush.msra.mxu0 %v1319
      %1759 = vmatpush.msra.mxu0 %v1317
      %1760 = vmatmul.f32.gmra.mxu0 %v1739
      %v1761 = vpop.f32.mrf.mxu0
      %v1762 = vadd.f32 %v1730, %v1761
      %1763 = vmatmul.f32.gmra.mxu0 %v1742
      %v1764 = vpop.f32.mrf.mxu0
      %v1765 = vadd.f32 %v1735, %v1764
      %1766 = vdwg.mxu0
      %1767 = vmatpush.msra.mxu0 0.0
      %1768 = vmatpush.msra.mxu0 0.0
      %1769 = vmatpush.msra.mxu0 0.0
      %1770 = vmatpush.msra.mxu0 0.0
      %1771 = vmatpush.msra.mxu0 0.0
      %1772 = vmatpush.msra.mxu0 0.0
      %1773 = vmatpush.msra.mxu0 0.0
      %1774 = vmatpush.msra.mxu0 0.0
      %1775 = vmatpush.msra.mxu0 0.0
      %1776 = vmatpush.msra.mxu0 0.0
      %1777 = vmatpush.msra.mxu0 0.0
      %1778 = vmatpush.msra.mxu0 0.0
      %1779 = vmatpush.msra.mxu0 %v1668
      %1780 = vmatpush.msra.mxu0 %v1666
      %1781 = vmatpush.msra.mxu0 %v1320
      %1782 = vmatpush.msra.mxu0 %v1318
      %1783 = vmatmul.f32.gmra.mxu0 %v1739
      %v1784 = vpop.f32.mrf.mxu0
      %v1785 = vadd.f32 %v1730, %v1784
      %1786 = vmatmul.f32.gmra.mxu0 %v1742
      %v1787 = vpop.f32.mrf.mxu0
      %v1788 = vadd.f32 %v1735, %v1787
      %1789 = vdwg.mxu0
      %v1790 = vmax.f32 %v1762, 0.0
      %v1791 = vmax.f32 %v1785, 0.0
      %v1792 = vmax.f32 %v1765, 0.0
      %v1793 = vmax.f32 %v1788, 0.0
      %v1794 = vadd.f32 %v1790, %v1791
      %1795 = vadd.xlane.f32.xlu0 %v1794
      %v1796 = vpop.xlane.xlu0 %1795
      %v1797 = vadd.f32 %v1792, %v1793
      %1798 = vadd.xlane.f32.xlu0 %v1797
      %v1799 = vpop.xlane.xlu0 %1798
      %v1800 = vrcp.pop 256.0
      %v1801 = vmul.f32 256.0, %v1800
      %v1802 = vsub.f32 1.0, %v1801
      %v1803 = vmul.f32 %v1800, %v1802
      %v1804 = vadd.f32 %v1800, %v1803
      %vm1805 = vweird.f32 %v1800
      %v1806 = vsel %vm1805, %v1800, %v1804
      %v1807 = vmul.f32 %v1796, %v1806
      %v1808 = vmul.f32 %v1799, %v1806
      %v1809 = vsub.f32 %v1790, %v1807
      %v1810 = vsub.f32 %v1791, %v1807
      %v1811 = vsub.f32 %v1792, %v1808
      %v1812 = vsub.f32 %v1793, %v1808
      %v1813 = vmul.f32 %v1809, %v1809
      %v1814 = vmul.f32 %v1810, %v1810
      %v1815 = vmul.f32 %v1811, %v1811
      %v1816 = vmul.f32 %v1812, %v1812
      %v1817 = vadd.f32 %v1813, %v1814
      %1818 = vadd.xlane.f32.xlu0 %v1817
      %v1819 = vpop.xlane.xlu0 %1818
      %v1820 = vadd.f32 %v1815, %v1816
      %1821 = vadd.xlane.f32.xlu0 %v1820
      %v1822 = vpop.xlane.xlu0 %1821
      %v1823 = vmul.f32 %v1819, %v1806
      %v1824 = vmul.f32 %v1822, %v1806
      %v1825 = vadd.f32 %v1823, 1e-05
      %v1826 = vadd.f32 %v1824, 1e-05
      %v1827 = vrsqrt.pop %v1825
      %v1828 = vmul.f32 %v1827, %v1825
      %v1829 = vmul.f32 %v1828, %v1827
      %v1830 = vmul.f32 0.5, %v1829
      %v1831 = vsub.f32 1.5, %v1830
      %v1832 = vmul.f32 %v1827, %v1831
      %vm1833 = vweird.f32 %v1825
      %vm1834 = vweird.f32 %v1827
      %vm1835 = vmor %vm1833, %vm1834
      %v1836 = vsel %vm1835, %v1827, %v1832
      %v1837 = vrsqrt.pop %v1826
      %v1838 = vmul.f32 %v1837, %v1826
      %v1839 = vmul.f32 %v1838, %v1837
      %v1840 = vmul.f32 0.5, %v1839
      %v1841 = vsub.f32 1.5, %v1840
      %v1842 = vmul.f32 %v1837, %v1841
      %vm1843 = vweird.f32 %v1826
      %vm1844 = vweird.f32 %v1837
      %vm1845 = vmor %vm1843, %vm1844
      %v1846 = vsel %vm1845, %v1837, %v1842
      %v1847 = vmul.f32 %v1809, %v1836
      %v1848 = vmul.f32 %v1810, %v1836
      %v1849 = vmul.f32 %v1811, %v1846
      %v1850 = vmul.f32 %v1812, %v1846
      %1851 = vrot.lane.b32.xlu0 %v757, 17
      %v1852 = vpop.permute.xlu0 %1851
      %1853 = vrot.lane.b32.xlu0 %v758, 17
      %v1854 = vpop.permute.xlu0 %1853
      %v1855 = vsel %vm773, %v1852, %v1854
      %v1856 = vsel %vm773, %v1854, %v1852
      %v1857 = vld [vmem:[%s0] ss:$8 sm:$0x3]
      %v1859 = vperm.slane %v1857, 0
      %v1860 = vperm.slane %v1857, 1
      %v1863 = vmul.f32 %v1856, %v1859
      %v1864 = vmul.f32 %v1855, %v1860
      %1865 = vrot.lane.b32.xlu0 %v757, 16
      %v1866 = vpop.permute.xlu0 %1865
      %1867 = vrot.lane.b32.xlu0 %v758, 16
      %v1868 = vpop.permute.xlu0 %1867
      %v1869 = vsel %vm796, %v1866, %v1868
      %v1870 = vsel %vm796, %v1868, %v1866
      %v1871 = vld [vmem:[%s801] ss:$8 sm:$0x3]
      %v1873 = vperm.slane %v1871, 0
      %v1874 = vperm.slane %v1871, 1
      %v1877 = vmul.f32 %v1870, %v1873
      %v1878 = vmul.f32 %v1869, %v1874
      %1879 = vrot.lane.b32.xlu0 %v757, 15
      %v1880 = vpop.permute.xlu0 %1879
      %1881 = vrot.lane.b32.xlu0 %v758, 15
      %v1882 = vpop.permute.xlu0 %1881
      %v1883 = vsel %vm820, %v1880, %v1882
      %v1884 = vsel %vm820, %v1882, %v1880
      %v1885 = vld [vmem:[%s825] ss:$8 sm:$0x3]
      %v1887 = vperm.slane %v1885, 0
      %v1888 = vperm.slane %v1885, 1
      %v1891 = vmul.f32 %v1884, %v1887
      %v1892 = vmul.f32 %v1883, %v1888
      %1893 = vrot.lane.b32.xlu0 %v757, 1
      %v1894 = vpop.permute.xlu0 %1893
      %1895 = vrot.lane.b32.xlu0 %v758, 1
      %v1896 = vpop.permute.xlu0 %1895
      %v1897 = vsel %vm844, %v1894, %v1896
      %v1898 = vsel %vm844, %v1896, %v1894
      %v1899 = vld [vmem:[%s849] ss:$8 sm:$0x3]
      %v1901 = vperm.slane %v1899, 0
      %v1902 = vperm.slane %v1899, 1
      %v1905 = vmul.f32 %v1898, %v1901
      %v1906 = vmul.f32 %v1897, %v1902
      %1907 = vrot.lane.b32.xlu0 %v757, 127
      %v1908 = vpop.permute.xlu0 %1907
      %1909 = vrot.lane.b32.xlu0 %v758, 127
      %v1910 = vpop.permute.xlu0 %1909
      %v1911 = vsel %vm868, %v1908, %v1910
      %v1912 = vsel %vm868, %v1910, %v1908
      %v1913 = vld [vmem:[%s873] ss:$8 sm:$0x3]
      %v1915 = vperm.slane %v1913, 0
      %v1916 = vperm.slane %v1913, 1
      %v1919 = vmul.f32 %v1911, %v1915
      %v1920 = vmul.f32 %v1912, %v1916
      %1921 = vrot.lane.b32.xlu0 %v757, 113
      %v1922 = vpop.permute.xlu0 %1921
      %1923 = vrot.lane.b32.xlu0 %v758, 113
      %v1924 = vpop.permute.xlu0 %1923
      %v1925 = vsel %vm892, %v1922, %v1924
      %v1926 = vsel %vm892, %v1924, %v1922
      %v1927 = vld [vmem:[%s897] ss:$8 sm:$0x3]
      %v1929 = vperm.slane %v1927, 0
      %v1930 = vperm.slane %v1927, 1
      %v1933 = vmul.f32 %v1925, %v1929
      %v1934 = vmul.f32 %v1926, %v1930
      %1935 = vrot.lane.b32.xlu0 %v757, 112
      %v1936 = vpop.permute.xlu0 %1935
      %1937 = vrot.lane.b32.xlu0 %v758, 112
      %v1938 = vpop.permute.xlu0 %1937
      %v1939 = vsel %vm916, %v1936, %v1938
      %v1940 = vsel %vm916, %v1938, %v1936
      %v1941 = vld [vmem:[%s921] ss:$8 sm:$0x3]
      %v1943 = vperm.slane %v1941, 0
      %v1944 = vperm.slane %v1941, 1
      %v1947 = vmul.f32 %v1939, %v1943
      %v1948 = vmul.f32 %v1940, %v1944
      %1949 = vrot.lane.b32.xlu0 %v757, 111
      %v1950 = vpop.permute.xlu0 %1949
      %1951 = vrot.lane.b32.xlu0 %v758, 111
      %v1952 = vpop.permute.xlu0 %1951
      %v1953 = vsel %vm940, %v1950, %v1952
      %v1954 = vsel %vm940, %v1952, %v1950
      %v1955 = vld [vmem:[%s945] ss:$8 sm:$0x3]
      %v1957 = vperm.slane %v1955, 0
      %v1958 = vperm.slane %v1955, 1
      %v1961 = vmul.f32 %v1953, %v1957
      %v1962 = vmul.f32 %v1954, %v1958
      %v1963 = vld [vmem:[%s16] sm:$0xff]
      %v1964 = vld [vmem:[%s16 + $0x8] sm:$0xff]
      %v1965 = vld [vmem:[%s16 + $0x10] sm:$0xff]
      %v1966 = vld [vmem:[%s16 + $0x18] sm:$0xff]
      %v1967 = vld [vmem:[%s16 + $0x20] sm:$0xff]
      %v1968 = vld [vmem:[%s16 + $0x28] sm:$0xff]
      %v1969 = vld [vmem:[%s16 + $0x30] sm:$0xff]
      %v1970 = vld [vmem:[%s16 + $0x38] sm:$0xff]
      %v1971 = vld [vmem:[%s16 + $0x40] sm:$0xff]
      %v1972 = vld [vmem:[%s16 + $0x48] sm:$0xff]
      %v1973 = vld [vmem:[%s16 + $0x50] sm:$0xff]
      %v1974 = vld [vmem:[%s16 + $0x58] sm:$0xff]
      %v1975 = vld [vmem:[%s16 + $0x60] sm:$0xff]
      %v1976 = vld [vmem:[%s16 + $0x68] sm:$0xff]
      %v1977 = vld [vmem:[%s16 + $0x70] sm:$0xff]
      %v1978 = vld [vmem:[%s16 + $0x78] sm:$0xff]
      %v1979 = vld [vmem:[%s17] sm:$0xff]
      %v1980 = vld [vmem:[%s17 + $0x8] sm:$0xff]
      %v1981 = vld [vmem:[%s17 + $0x10] sm:$0xff]
      %v1982 = vld [vmem:[%s17 + $0x18] sm:$0xff]
      %v1983 = vld [vmem:[%s17 + $0x20] sm:$0xff]
      %v1984 = vld [vmem:[%s17 + $0x28] sm:$0xff]
      %v1985 = vld [vmem:[%s17 + $0x30] sm:$0xff]
      %v1986 = vld [vmem:[%s17 + $0x38] sm:$0xff]
      %v1987 = vld [vmem:[%s17 + $0x40] sm:$0xff]
      %v1988 = vld [vmem:[%s17 + $0x48] sm:$0xff]
      %v1989 = vld [vmem:[%s17 + $0x50] sm:$0xff]
      %v1990 = vld [vmem:[%s17 + $0x58] sm:$0xff]
      %v1991 = vld [vmem:[%s17 + $0x60] sm:$0xff]
      %v1992 = vld [vmem:[%s17 + $0x68] sm:$0xff]
      %v1993 = vld [vmem:[%s17 + $0x70] sm:$0xff]
      %v1994 = vld [vmem:[%s17 + $0x78] sm:$0xff]
      %1996 = vset.pattern.permute.xlu0 0
      %1997 = vperm.xlu0 %1996, %v1979
      %v1998 = vpop.permute.xlu0 %1997
      %2001 = vset.pattern.permute.xlu0 0
      %2002 = vperm.xlu0 %2001, %v1980
      %v2003 = vpop.permute.xlu0 %2002
      %2006 = vset.pattern.permute.xlu0 0
      %2007 = vperm.xlu0 %2006, %v1981
      %v2008 = vpop.permute.xlu0 %2007
      %2011 = vset.pattern.permute.xlu0 0
      %2012 = vperm.xlu0 %2011, %v1982
      %v2013 = vpop.permute.xlu0 %2012
      %2016 = vset.pattern.permute.xlu0 0
      %2017 = vperm.xlu0 %2016, %v1983
      %v2018 = vpop.permute.xlu0 %2017
      %2021 = vset.pattern.permute.xlu0 0
      %2022 = vperm.xlu0 %2021, %v1984
      %v2023 = vpop.permute.xlu0 %2022
      %2026 = vset.pattern.permute.xlu0 0
      %2027 = vperm.xlu0 %2026, %v1985
      %v2028 = vpop.permute.xlu0 %2027
      %2031 = vset.pattern.permute.xlu0 0
      %2032 = vperm.xlu0 %2031, %v1986
      %v2033 = vpop.permute.xlu0 %2032
      %2036 = vset.pattern.permute.xlu0 0
      %2037 = vperm.xlu0 %2036, %v1987
      %v2038 = vpop.permute.xlu0 %2037
      %2041 = vset.pattern.permute.xlu0 0
      %2042 = vperm.xlu0 %2041, %v1988
      %v2043 = vpop.permute.xlu0 %2042
      %2046 = vset.pattern.permute.xlu0 0
      %2047 = vperm.xlu0 %2046, %v1989
      %v2048 = vpop.permute.xlu0 %2047
      %2051 = vset.pattern.permute.xlu0 0
      %2052 = vperm.xlu0 %2051, %v1990
      %v2053 = vpop.permute.xlu0 %2052
      %2056 = vset.pattern.permute.xlu0 0
      %2057 = vperm.xlu0 %2056, %v1991
      %v2058 = vpop.permute.xlu0 %2057
      %2061 = vset.pattern.permute.xlu0 0
      %2062 = vperm.xlu0 %2061, %v1992
      %v2063 = vpop.permute.xlu0 %2062
      %2066 = vset.pattern.permute.xlu0 0
      %2067 = vperm.xlu0 %2066, %v1993
      %v2068 = vpop.permute.xlu0 %2067
      %2071 = vset.pattern.permute.xlu0 0
      %2072 = vperm.xlu0 %2071, %v1994
      %v2073 = vpop.permute.xlu0 %2072
      %vm2075 = vcmask 588800
      %v2077 = vsel %vm2075, %v1963, 0
      %v2080 = vsel %vm2075, %v1964, 0
      %v2083 = vsel %vm2075, %v1965, 0
      %v2086 = vsel %vm2075, %v1966, 0
      %v2089 = vsel %vm2075, %v1967, 0
      %v2092 = vsel %vm2075, %v1968, 0
      %v2095 = vsel %vm2075, %v1969, 0
      %v2098 = vsel %vm2075, %v1970, 0
      %v2101 = vsel %vm2075, %v1971, 0
      %v2104 = vsel %vm2075, %v1972, 0
      %v2107 = vsel %vm2075, %v1973, 0
      %v2110 = vsel %vm2075, %v1974, 0
      %v2113 = vsel %vm2075, %v1975, 0
      %v2116 = vsel %vm2075, %v1976, 0
      %v2119 = vsel %vm2075, %v1977, 0
      %v2122 = vsel %vm2075, %v1978, 0
      %2124 = vmatpush.msra.mxu0 0.0
      %2125 = vmatpush.msra.mxu0 0.0
      %2126 = vmatpush.msra.mxu0 0.0
      %2127 = vmatpush.msra.mxu0 0.0
      %2128 = vmatpush.msra.mxu0 0.0
      %2129 = vmatpush.msra.mxu0 0.0
      %2130 = vmatpush.msra.mxu0 0.0
      %2131 = vmatpush.msra.mxu0 %v1961
      %2132 = vmatpush.msra.mxu0 %v1947
      %2133 = vmatpush.msra.mxu0 %v1933
      %2134 = vmatpush.msra.mxu0 %v1919
      %2135 = vmatpush.msra.mxu0 %v757
      %2136 = vmatpush.msra.mxu0 %v1905
      %2137 = vmatpush.msra.mxu0 %v1891
      %2138 = vmatpush.msra.mxu0 %v1877
      %2139 = vmatpush.msra.mxu0 %v1863
      %2140 = vmatmul.f32.gmra.mxu0 %v2077
      %v2141 = vpop.f32.mrf.mxu0
      %v2142 = vadd.f32 %v1998, %v2141
      %2143 = vmatmul.f32.gmra.mxu0 %v2080
      %v2144 = vpop.f32.mrf.mxu0
      %v2145 = vadd.f32 %v2003, %v2144
      %2146 = vmatmul.f32.gmra.mxu0 %v2083
      %v2147 = vpop.f32.mrf.mxu0
      %v2148 = vadd.f32 %v2008, %v2147
      %2149 = vmatmul.f32.gmra.mxu0 %v2086
      %v2150 = vpop.f32.mrf.mxu0
      %v2151 = vadd.f32 %v2013, %v2150
      %2152 = vmatmul.f32.gmra.mxu0 %v2089
      %v2153 = vpop.f32.mrf.mxu0
      %v2154 = vadd.f32 %v2018, %v2153
      %2155 = vmatmul.f32.gmra.mxu0 %v2092
      %v2156 = vpop.f32.mrf.mxu0
      %v2157 = vadd.f32 %v2023, %v2156
      %2158 = vmatmul.f32.gmra.mxu0 %v2095
      %v2159 = vpop.f32.mrf.mxu0
      %v2160 = vadd.f32 %v2028, %v2159
      %2161 = vmatmul.f32.gmra.mxu0 %v2098
      %v2162 = vpop.f32.mrf.mxu0
      %v2163 = vadd.f32 %v2033, %v2162
      %2164 = vmatmul.f32.gmra.mxu0 %v2101
      %v2165 = vpop.f32.mrf.mxu0
      %v2166 = vadd.f32 %v2038, %v2165
      %2167 = vmatmul.f32.gmra.mxu0 %v2104
      %v2168 = vpop.f32.mrf.mxu0
      %v2169 = vadd.f32 %v2043, %v2168
      %2170 = vmatmul.f32.gmra.mxu0 %v2107
      %v2171 = vpop.f32.mrf.mxu0
      %v2172 = vadd.f32 %v2048, %v2171
      %2173 = vmatmul.f32.gmra.mxu0 %v2110
      %v2174 = vpop.f32.mrf.mxu0
      %v2175 = vadd.f32 %v2053, %v2174
      %2176 = vmatmul.f32.gmra.mxu0 %v2113
      %v2177 = vpop.f32.mrf.mxu0
      %v2178 = vadd.f32 %v2058, %v2177
      %2179 = vmatmul.f32.gmra.mxu0 %v2116
      %v2180 = vpop.f32.mrf.mxu0
      %v2181 = vadd.f32 %v2063, %v2180
      %2182 = vmatmul.f32.gmra.mxu0 %v2119
      %v2183 = vpop.f32.mrf.mxu0
      %v2184 = vadd.f32 %v2068, %v2183
      %2185 = vmatmul.f32.gmra.mxu0 %v2122
      %v2186 = vpop.f32.mrf.mxu0
      %v2187 = vadd.f32 %v2073, %v2186
      %2188 = vdwg.mxu0
      %2189 = vmatpush.msra.mxu0 0.0
      %2190 = vmatpush.msra.mxu0 0.0
      %2191 = vmatpush.msra.mxu0 0.0
      %2192 = vmatpush.msra.mxu0 0.0
      %2193 = vmatpush.msra.mxu0 0.0
      %2194 = vmatpush.msra.mxu0 0.0
      %2195 = vmatpush.msra.mxu0 0.0
      %2196 = vmatpush.msra.mxu0 %v1962
      %2197 = vmatpush.msra.mxu0 %v1948
      %2198 = vmatpush.msra.mxu0 %v1934
      %2199 = vmatpush.msra.mxu0 %v1920
      %2200 = vmatpush.msra.mxu0 %v758
      %2201 = vmatpush.msra.mxu0 %v1906
      %2202 = vmatpush.msra.mxu0 %v1892
      %2203 = vmatpush.msra.mxu0 %v1878
      %2204 = vmatpush.msra.mxu0 %v1864
      %2205 = vmatmul.f32.gmra.mxu0 %v2077
      %v2206 = vpop.f32.mrf.mxu0
      %v2207 = vadd.f32 %v1998, %v2206
      %2208 = vmatmul.f32.gmra.mxu0 %v2080
      %v2209 = vpop.f32.mrf.mxu0
      %v2210 = vadd.f32 %v2003, %v2209
      %2211 = vmatmul.f32.gmra.mxu0 %v2083
      %v2212 = vpop.f32.mrf.mxu0
      %v2213 = vadd.f32 %v2008, %v2212
      %2214 = vmatmul.f32.gmra.mxu0 %v2086
      %v2215 = vpop.f32.mrf.mxu0
      %v2216 = vadd.f32 %v2013, %v2215
      %2217 = vmatmul.f32.gmra.mxu0 %v2089
      %v2218 = vpop.f32.mrf.mxu0
      %v2219 = vadd.f32 %v2018, %v2218
      %2220 = vmatmul.f32.gmra.mxu0 %v2092
      %v2221 = vpop.f32.mrf.mxu0
      %v2222 = vadd.f32 %v2023, %v2221
      %2223 = vmatmul.f32.gmra.mxu0 %v2095
      %v2224 = vpop.f32.mrf.mxu0
      %v2225 = vadd.f32 %v2028, %v2224
      %2226 = vmatmul.f32.gmra.mxu0 %v2098
      %v2227 = vpop.f32.mrf.mxu0
      %v2228 = vadd.f32 %v2033, %v2227
      %2229 = vmatmul.f32.gmra.mxu0 %v2101
      %v2230 = vpop.f32.mrf.mxu0
      %v2231 = vadd.f32 %v2038, %v2230
      %2232 = vmatmul.f32.gmra.mxu0 %v2104
      %v2233 = vpop.f32.mrf.mxu0
      %v2234 = vadd.f32 %v2043, %v2233
      %2235 = vmatmul.f32.gmra.mxu0 %v2107
      %v2236 = vpop.f32.mrf.mxu0
      %v2237 = vadd.f32 %v2048, %v2236
      %2238 = vmatmul.f32.gmra.mxu0 %v2110
      %v2239 = vpop.f32.mrf.mxu0
      %v2240 = vadd.f32 %v2053, %v2239
      %2241 = vmatmul.f32.gmra.mxu0 %v2113
      %v2242 = vpop.f32.mrf.mxu0
      %v2243 = vadd.f32 %v2058, %v2242
      %2244 = vmatmul.f32.gmra.mxu0 %v2116
      %v2245 = vpop.f32.mrf.mxu0
      %v2246 = vadd.f32 %v2063, %v2245
      %2247 = vmatmul.f32.gmra.mxu0 %v2119
      %v2248 = vpop.f32.mrf.mxu0
      %v2249 = vadd.f32 %v2068, %v2248
      %2250 = vmatmul.f32.gmra.mxu0 %v2122
      %v2251 = vpop.f32.mrf.mxu0
      %v2252 = vadd.f32 %v2073, %v2251
      %2253 = vdwg.mxu0
      %v2254 = vmax.f32 %v2142, 0.0
      %v2255 = vmax.f32 %v2207, 0.0
      %v2256 = vmax.f32 %v2145, 0.0
      %v2257 = vmax.f32 %v2210, 0.0
      %v2258 = vmax.f32 %v2148, 0.0
      %v2259 = vmax.f32 %v2213, 0.0
      %v2260 = vmax.f32 %v2151, 0.0
      %v2261 = vmax.f32 %v2216, 0.0
      %v2262 = vmax.f32 %v2154, 0.0
      %v2263 = vmax.f32 %v2219, 0.0
      %v2264 = vmax.f32 %v2157, 0.0
      %v2265 = vmax.f32 %v2222, 0.0
      %v2266 = vmax.f32 %v2160, 0.0
      %v2267 = vmax.f32 %v2225, 0.0
      %v2268 = vmax.f32 %v2163, 0.0
      %v2269 = vmax.f32 %v2228, 0.0
      %v2270 = vmax.f32 %v2166, 0.0
      %v2271 = vmax.f32 %v2231, 0.0
      %v2272 = vmax.f32 %v2169, 0.0
      %v2273 = vmax.f32 %v2234, 0.0
      %v2274 = vmax.f32 %v2172, 0.0
      %v2275 = vmax.f32 %v2237, 0.0
      %v2276 = vmax.f32 %v2175, 0.0
      %v2277 = vmax.f32 %v2240, 0.0
      %v2278 = vmax.f32 %v2178, 0.0
      %v2279 = vmax.f32 %v2243, 0.0
      %v2280 = vmax.f32 %v2181, 0.0
      %v2281 = vmax.f32 %v2246, 0.0
      %v2282 = vmax.f32 %v2184, 0.0
      %v2283 = vmax.f32 %v2249, 0.0
      %v2284 = vmax.f32 %v2187, 0.0
      %v2285 = vmax.f32 %v2252, 0.0
      %2286 = vrot.lane.b32.xlu0 %v2254, 17
      %v2287 = vpop.permute.xlu0 %2286
      %2288 = vrot.lane.b32.xlu0 %v2256, 17
      %v2289 = vpop.permute.xlu0 %2288
      %2290 = vrot.lane.b32.xlu0 %v2258, 17
      %v2291 = vpop.permute.xlu0 %2290
      %2292 = vrot.lane.b32.xlu0 %v2260, 17
      %v2293 = vpop.permute.xlu0 %2292
      %2294 = vrot.lane.b32.xlu0 %v2262, 17
      %v2295 = vpop.permute.xlu0 %2294
      %2296 = vrot.lane.b32.xlu0 %v2264, 17
      %v2297 = vpop.permute.xlu0 %2296
      %2298 = vrot.lane.b32.xlu0 %v2266, 17
      %v2299 = vpop.permute.xlu0 %2298
      %2300 = vrot.lane.b32.xlu0 %v2268, 17
      %v2301 = vpop.permute.xlu0 %2300
      %2302 = vrot.lane.b32.xlu0 %v2270, 17
      %v2303 = vpop.permute.xlu0 %2302
      %2304 = vrot.lane.b32.xlu0 %v2272, 17
      %v2305 = vpop.permute.xlu0 %2304
      %2306 = vrot.lane.b32.xlu0 %v2274, 17
      %v2307 = vpop.permute.xlu0 %2306
      %2308 = vrot.lane.b32.xlu0 %v2276, 17
      %v2309 = vpop.permute.xlu0 %2308
      %2310 = vrot.lane.b32.xlu0 %v2278, 17
      %v2311 = vpop.permute.xlu0 %2310
      %2312 = vrot.lane.b32.xlu0 %v2280, 17
      %v2313 = vpop.permute.xlu0 %2312
      %2314 = vrot.lane.b32.xlu0 %v2282, 17
      %v2315 = vpop.permute.xlu0 %2314
      %2316 = vrot.lane.b32.xlu0 %v2284, 17
      %v2317 = vpop.permute.xlu0 %2316
      %2318 = vrot.lane.b32.xlu0 %v2255, 17
      %v2319 = vpop.permute.xlu0 %2318
      %2320 = vrot.lane.b32.xlu0 %v2257, 17
      %v2321 = vpop.permute.xlu0 %2320
      %2322 = vrot.lane.b32.xlu0 %v2259, 17
      %v2323 = vpop.permute.xlu0 %2322
      %2324 = vrot.lane.b32.xlu0 %v2261, 17
      %v2325 = vpop.permute.xlu0 %2324
      %2326 = vrot.lane.b32.xlu0 %v2263, 17
      %v2327 = vpop.permute.xlu0 %2326
      %2328 = vrot.lane.b32.xlu0 %v2265, 17
      %v2329 = vpop.permute.xlu0 %2328
      %2330 = vrot.lane.b32.xlu0 %v2267, 17
      %v2331 = vpop.permute.xlu0 %2330
      %2332 = vrot.lane.b32.xlu0 %v2269, 17
      %v2333 = vpop.permute.xlu0 %2332
      %2334 = vrot.lane.b32.xlu0 %v2271, 17
      %v2335 = vpop.permute.xlu0 %2334
      %2336 = vrot.lane.b32.xlu0 %v2273, 17
      %v2337 = vpop.permute.xlu0 %2336
      %2338 = vrot.lane.b32.xlu0 %v2275, 17
      %v2339 = vpop.permute.xlu0 %2338
      %2340 = vrot.lane.b32.xlu0 %v2277, 17
      %v2341 = vpop.permute.xlu0 %2340
      %2342 = vrot.lane.b32.xlu0 %v2279, 17
      %v2343 = vpop.permute.xlu0 %2342
      %2344 = vrot.lane.b32.xlu0 %v2281, 17
      %v2345 = vpop.permute.xlu0 %2344
      %2346 = vrot.lane.b32.xlu0 %v2283, 17
      %v2347 = vpop.permute.xlu0 %2346
      %2348 = vrot.lane.b32.xlu0 %v2285, 17
      %v2349 = vpop.permute.xlu0 %2348
      %v2350 = vsel %vm773, %v2287, %v2319
      %v2351 = vsel %vm773, %v2289, %v2321
      %v2352 = vsel %vm773, %v2291, %v2323
      %v2353 = vsel %vm773, %v2293, %v2325
      %v2354 = vsel %vm773, %v2295, %v2327
      %v2355 = vsel %vm773, %v2297, %v2329
      %v2356 = vsel %vm773, %v2299, %v2331
      %v2357 = vsel %vm773, %v2301, %v2333
      %v2358 = vsel %vm773, %v2303, %v2335
      %v2359 = vsel %vm773, %v2305, %v2337
      %v2360 = vsel %vm773, %v2307, %v2339
      %v2361 = vsel %vm773, %v2309, %v2341
      %v2362 = vsel %vm773, %v2311, %v2343
      %v2363 = vsel %vm773, %v2313, %v2345
      %v2364 = vsel %vm773, %v2315, %v2347
      %v2365 = vsel %vm773, %v2317, %v2349
      %v2366 = vsel %vm773, %v2319, %v2287
      %v2367 = vsel %vm773, %v2321, %v2289
      %v2368 = vsel %vm773, %v2323, %v2291
      %v2369 = vsel %vm773, %v2325, %v2293
      %v2370 = vsel %vm773, %v2327, %v2295
      %v2371 = vsel %vm773, %v2329, %v2297
      %v2372 = vsel %vm773, %v2331, %v2299
      %v2373 = vsel %vm773, %v2333, %v2301
      %v2374 = vsel %vm773, %v2335, %v2303
      %v2375 = vsel %vm773, %v2337, %v2305
      %v2376 = vsel %vm773, %v2339, %v2307
      %v2377 = vsel %vm773, %v2341, %v2309
      %v2378 = vsel %vm773, %v2343, %v2311
      %v2379 = vsel %vm773, %v2345, %v2313
      %v2380 = vsel %vm773, %v2347, %v2315
      %v2381 = vsel %vm773, %v2349, %v2317
      %v2382 = vmul.f32 %v2366, %v1859
      %v2383 = vmul.f32 %v2350, %v1860
      %v2384 = vmul.f32 %v2367, %v1859
      %v2385 = vmul.f32 %v2351, %v1860
      %v2386 = vmul.f32 %v2368, %v1859
      %v2387 = vmul.f32 %v2352, %v1860
      %v2388 = vmul.f32 %v2369, %v1859
      %v2389 = vmul.f32 %v2353, %v1860
      %v2390 = vmul.f32 %v2370, %v1859
      %v2391 = vmul.f32 %v2354, %v1860
      %v2392 = vmul.f32 %v2371, %v1859
      %v2393 = vmul.f32 %v2355, %v1860
      %v2394 = vmul.f32 %v2372, %v1859
      %v2395 = vmul.f32 %v2356, %v1860
      %v2396 = vmul.f32 %v2373, %v1859
      %v2397 = vmul.f32 %v2357, %v1860
      %v2398 = vmul.f32 %v2374, %v1859
      %v2399 = vmul.f32 %v2358, %v1860
      %v2400 = vmul.f32 %v2375, %v1859
      %v2401 = vmul.f32 %v2359, %v1860
      %v2402 = vmul.f32 %v2376, %v1859
      %v2403 = vmul.f32 %v2360, %v1860
      %v2404 = vmul.f32 %v2377, %v1859
      %v2405 = vmul.f32 %v2361, %v1860
      %v2406 = vmul.f32 %v2378, %v1859
      %v2407 = vmul.f32 %v2362, %v1860
      %v2408 = vmul.f32 %v2379, %v1859
      %v2409 = vmul.f32 %v2363, %v1860
      %v2410 = vmul.f32 %v2380, %v1859
      %v2411 = vmul.f32 %v2364, %v1860
      %v2412 = vmul.f32 %v2381, %v1859
      %v2413 = vmul.f32 %v2365, %v1860
      %2414 = vrot.lane.b32.xlu0 %v2254, 16
      %v2415 = vpop.permute.xlu0 %2414
      %2416 = vrot.lane.b32.xlu0 %v2256, 16
      %v2417 = vpop.permute.xlu0 %2416
      %2418 = vrot.lane.b32.xlu0 %v2258, 16
      %v2419 = vpop.permute.xlu0 %2418
      %2420 = vrot.lane.b32.xlu0 %v2260, 16
      %v2421 = vpop.permute.xlu0 %2420
      %2422 = vrot.lane.b32.xlu0 %v2262, 16
      %v2423 = vpop.permute.xlu0 %2422
      %2424 = vrot.lane.b32.xlu0 %v2264, 16
      %v2425 = vpop.permute.xlu0 %2424
      %2426 = vrot.lane.b32.xlu0 %v2266, 16
      %v2427 = vpop.permute.xlu0 %2426
      %2428 = vrot.lane.b32.xlu0 %v2268, 16
      %v2429 = vpop.permute.xlu0 %2428
      %2430 = vrot.lane.b32.xlu0 %v2270, 16
      %v2431 = vpop.permute.xlu0 %2430
      %2432 = vrot.lane.b32.xlu0 %v2272, 16
      %v2433 = vpop.permute.xlu0 %2432
      %2434 = vrot.lane.b32.xlu0 %v2274, 16
      %v2435 = vpop.permute.xlu0 %2434
      %2436 = vrot.lane.b32.xlu0 %v2276, 16
      %v2437 = vpop.permute.xlu0 %2436
      %2438 = vrot.lane.b32.xlu0 %v2278, 16
      %v2439 = vpop.permute.xlu0 %2438
      %2440 = vrot.lane.b32.xlu0 %v2280, 16
      %v2441 = vpop.permute.xlu0 %2440
      %2442 = vrot.lane.b32.xlu0 %v2282, 16
      %v2443 = vpop.permute.xlu0 %2442
      %2444 = vrot.lane.b32.xlu0 %v2284, 16
      %v2445 = vpop.permute.xlu0 %2444
      %2446 = vrot.lane.b32.xlu0 %v2255, 16
      %v2447 = vpop.permute.xlu0 %2446
      %2448 = vrot.lane.b32.xlu0 %v2257, 16
      %v2449 = vpop.permute.xlu0 %2448
      %2450 = vrot.lane.b32.xlu0 %v2259, 16
      %v2451 = vpop.permute.xlu0 %2450
      %2452 = vrot.lane.b32.xlu0 %v2261, 16
      %v2453 = vpop.permute.xlu0 %2452
      %2454 = vrot.lane.b32.xlu0 %v2263, 16
      %v2455 = vpop.permute.xlu0 %2454
      %2456 = vrot.lane.b32.xlu0 %v2265, 16
      %v2457 = vpop.permute.xlu0 %2456
      %2458 = vrot.lane.b32.xlu0 %v2267, 16
      %v2459 = vpop.permute.xlu0 %2458
      %2460 = vrot.lane.b32.xlu0 %v2269, 16
      %v2461 = vpop.permute.xlu0 %2460
      %2462 = vrot.lane.b32.xlu0 %v2271, 16
      %v2463 = vpop.permute.xlu0 %2462
      %2464 = vrot.lane.b32.xlu0 %v2273, 16
      %v2465 = vpop.permute.xlu0 %2464
      %2466 = vrot.lane.b32.xlu0 %v2275, 16
      %v2467 = vpop.permute.xlu0 %2466
      %2468 = vrot.lane.b32.xlu0 %v2277, 16
      %v2469 = vpop.permute.xlu0 %2468
      %2470 = vrot.lane.b32.xlu0 %v2279, 16
      %v2471 = vpop.permute.xlu0 %2470
      %2472 = vrot.lane.b32.xlu0 %v2281, 16
      %v2473 = vpop.permute.xlu0 %2472
      %2474 = vrot.lane.b32.xlu0 %v2283, 16
      %v2475 = vpop.permute.xlu0 %2474
      %2476 = vrot.lane.b32.xlu0 %v2285, 16
      %v2477 = vpop.permute.xlu0 %2476
      %v2478 = vsel %vm796, %v2415, %v2447
      %v2479 = vsel %vm796, %v2417, %v2449
      %v2480 = vsel %vm796, %v2419, %v2451
      %v2481 = vsel %vm796, %v2421, %v2453
      %v2482 = vsel %vm796, %v2423, %v2455
      %v2483 = vsel %vm796, %v2425, %v2457
      %v2484 = vsel %vm796, %v2427, %v2459
      %v2485 = vsel %vm796, %v2429, %v2461
      %v2486 = vsel %vm796, %v2431, %v2463
      %v2487 = vsel %vm796, %v2433, %v2465
      %v2488 = vsel %vm796, %v2435, %v2467
      %v2489 = vsel %vm796, %v2437, %v2469
      %v2490 = vsel %vm796, %v2439, %v2471
      %v2491 = vsel %vm796, %v2441, %v2473
      %v2492 = vsel %vm796, %v2443, %v2475
      %v2493 = vsel %vm796, %v2445, %v2477
      %v2494 = vsel %vm796, %v2447, %v2415
      %v2495 = vsel %vm796, %v2449, %v2417
      %v2496 = vsel %vm796, %v2451, %v2419
      %v2497 = vsel %vm796, %v2453, %v2421
      %v2498 = vsel %vm796, %v2455, %v2423
      %v2499 = vsel %vm796, %v2457, %v2425
      %v2500 = vsel %vm796, %v2459, %v2427
      %v2501 = vsel %vm796, %v2461, %v2429
      %v2502 = vsel %vm796, %v2463, %v2431
      %v2503 = vsel %vm796, %v2465, %v2433
      %v2504 = vsel %vm796, %v2467, %v2435
      %v2505 = vsel %vm796, %v2469, %v2437
      %v2506 = vsel %vm796, %v2471, %v2439
      %v2507 = vsel %vm796, %v2473, %v2441
      %v2508 = vsel %vm796, %v2475, %v2443
      %v2509 = vsel %vm796, %v2477, %v2445
      %v2510 = vmul.f32 %v2494, %v1873
      %v2511 = vmul.f32 %v2478, %v1874
      %v2512 = vmul.f32 %v2495, %v1873
      %v2513 = vmul.f32 %v2479, %v1874
      %v2514 = vmul.f32 %v2496, %v1873
      %v2515 = vmul.f32 %v2480, %v1874
      %v2516 = vmul.f32 %v2497, %v1873
      %v2517 = vmul.f32 %v2481, %v1874
      %v2518 = vmul.f32 %v2498, %v1873
      %v2519 = vmul.f32 %v2482, %v1874
      %v2520 = vmul.f32 %v2499, %v1873
      %v2521 = vmul.f32 %v2483, %v1874
      %v2522 = vmul.f32 %v2500, %v1873
      %v2523 = vmul.f32 %v2484, %v1874
      %v2524 = vmul.f32 %v2501, %v1873
      %v2525 = vmul.f32 %v2485, %v1874
      %v2526 = vmul.f32 %v2502, %v1873
      %v2527 = vmul.f32 %v2486, %v1874
      %v2528 = vmul.f32 %v2503, %v1873
      %v2529 = vmul.f32 %v2487, %v1874
      %v2530 = vmul.f32 %v2504, %v1873
      %v2531 = vmul.f32 %v2488, %v1874
      %v2532 = vmul.f32 %v2505, %v1873
      %v2533 = vmul.f32 %v2489, %v1874
      %v2534 = vmul.f32 %v2506, %v1873
      %v2535 = vmul.f32 %v2490, %v1874
      %v2536 = vmul.f32 %v2507, %v1873
      %v2537 = vmul.f32 %v2491, %v1874
      %v2538 = vmul.f32 %v2508, %v1873
      %v2539 = vmul.f32 %v2492, %v1874
      %v2540 = vmul.f32 %v2509, %v1873
      %v2541 = vmul.f32 %v2493, %v1874
      %2542 = vrot.lane.b32.xlu0 %v2254, 15
      %v2543 = vpop.permute.xlu0 %2542
      %2544 = vrot.lane.b32.xlu0 %v2256, 15
      %v2545 = vpop.permute.xlu0 %2544
      %2546 = vrot.lane.b32.xlu0 %v2258, 15
      %v2547 = vpop.permute.xlu0 %2546
      %2548 = vrot.lane.b32.xlu0 %v2260, 15
      %v2549 = vpop.permute.xlu0 %2548
      %2550 = vrot.lane.b32.xlu0 %v2262, 15
      %v2551 = vpop.permute.xlu0 %2550
      %2552 = vrot.lane.b32.xlu0 %v2264, 15
      %v2553 = vpop.permute.xlu0 %2552
      %2554 = vrot.lane.b32.xlu0 %v2266, 15
      %v2555 = vpop.permute.xlu0 %2554
      %2556 = vrot.lane.b32.xlu0 %v2268, 15
      %v2557 = vpop.permute.xlu0 %2556
      %2558 = vrot.lane.b32.xlu0 %v2270, 15
      %v2559 = vpop.permute.xlu0 %2558
      %2560 = vrot.lane.b32.xlu0 %v2272, 15
      %v2561 = vpop.permute.xlu0 %2560
      %2562 = vrot.lane.b32.xlu0 %v2274, 15
      %v2563 = vpop.permute.xlu0 %2562
      %2564 = vrot.lane.b32.xlu0 %v2276, 15
      %v2565 = vpop.permute.xlu0 %2564
      %2566 = vrot.lane.b32.xlu0 %v2278, 15
      %v2567 = vpop.permute.xlu0 %2566
      %2568 = vrot.lane.b32.xlu0 %v2280, 15
      %v2569 = vpop.permute.xlu0 %2568
      %2570 = vrot.lane.b32.xlu0 %v2282, 15
      %v2571 = vpop.permute.xlu0 %2570
      %2572 = vrot.lane.b32.xlu0 %v2284, 15
      %v2573 = vpop.permute.xlu0 %2572
      %2574 = vrot.lane.b32.xlu0 %v2255, 15
      %v2575 = vpop.permute.xlu0 %2574
      %2576 = vrot.lane.b32.xlu0 %v2257, 15
      %v2577 = vpop.permute.xlu0 %2576
      %2578 = vrot.lane.b32.xlu0 %v2259, 15
      %v2579 = vpop.permute.xlu0 %2578
      %2580 = vrot.lane.b32.xlu0 %v2261, 15
      %v2581 = vpop.permute.xlu0 %2580
      %2582 = vrot.lane.b32.xlu0 %v2263, 15
      %v2583 = vpop.permute.xlu0 %2582
      %2584 = vrot.lane.b32.xlu0 %v2265, 15
      %v2585 = vpop.permute.xlu0 %2584
      %2586 = vrot.lane.b32.xlu0 %v2267, 15
      %v2587 = vpop.permute.xlu0 %2586
      %2588 = vrot.lane.b32.xlu0 %v2269, 15
      %v2589 = vpop.permute.xlu0 %2588
      %2590 = vrot.lane.b32.xlu0 %v2271, 15
      %v2591 = vpop.permute.xlu0 %2590
      %2592 = vrot.lane.b32.xlu0 %v2273, 15
      %v2593 = vpop.permute.xlu0 %2592
      %2594 = vrot.lane.b32.xlu0 %v2275, 15
      %v2595 = vpop.permute.xlu0 %2594
      %2596 = vrot.lane.b32.xlu0 %v2277, 15
      %v2597 = vpop.permute.xlu0 %2596
      %2598 = vrot.lane.b32.xlu0 %v2279, 15
      %v2599 = vpop.permute.xlu0 %2598
      %2600 = vrot.lane.b32.xlu0 %v2281, 15
      %v2601 = vpop.permute.xlu0 %2600
      %2602 = vrot.lane.b32.xlu0 %v2283, 15
      %v2603 = vpop.permute.xlu0 %2602
      %2604 = vrot.lane.b32.xlu0 %v2285, 15
      %v2605 = vpop.permute.xlu0 %2604
      %v2606 = vsel %vm820, %v2543, %v2575
      %v2607 = vsel %vm820, %v2545, %v2577
      %v2608 = vsel %vm820, %v2547, %v2579
      %v2609 = vsel %vm820, %v2549, %v2581
      %v2610 = vsel %vm820, %v2551, %v2583
      %v2611 = vsel %vm820, %v2553, %v2585
      %v2612 = vsel %vm820, %v2555, %v2587
      %v2613 = vsel %vm820, %v2557, %v2589
      %v2614 = vsel %vm820, %v2559, %v2591
      %v2615 = vsel %vm820, %v2561, %v2593
      %v2616 = vsel %vm820, %v2563, %v2595
      %v2617 = vsel %vm820, %v2565, %v2597
      %v2618 = vsel %vm820, %v2567, %v2599
      %v2619 = vsel %vm820, %v2569, %v2601
      %v2620 = vsel %vm820, %v2571, %v2603
      %v2621 = vsel %vm820, %v2573, %v2605
      %v2622 = vsel %vm820, %v2575, %v2543
      %v2623 = vsel %vm820, %v2577, %v2545
      %v2624 = vsel %vm820, %v2579, %v2547
      %v2625 = vsel %vm820, %v2581, %v2549
      %v2626 = vsel %vm820, %v2583, %v2551
      %v2627 = vsel %vm820, %v2585, %v2553
      %v2628 = vsel %vm820, %v2587, %v2555
      %v2629 = vsel %vm820, %v2589, %v2557
      %v2630 = vsel %vm820, %v2591, %v2559
      %v2631 = vsel %vm820, %v2593, %v2561
      %v2632 = vsel %vm820, %v2595, %v2563
      %v2633 = vsel %vm820, %v2597, %v2565
      %v2634 = vsel %vm820, %v2599, %v2567
      %v2635 = vsel %vm820, %v2601, %v2569
      %v2636 = vsel %vm820, %v2603, %v2571
      %v2637 = vsel %vm820, %v2605, %v2573
      %v2638 = vmul.f32 %v2622, %v1887
      %v2639 = vmul.f32 %v2606, %v1888
      %v2640 = vmul.f32 %v2623, %v1887
      %v2641 = vmul.f32 %v2607, %v1888
      %v2642 = vmul.f32 %v2624, %v1887
      %v2643 = vmul.f32 %v2608, %v1888
      %v2644 = vmul.f32 %v2625, %v1887
      %v2645 = vmul.f32 %v2609, %v1888
      %v2646 = vmul.f32 %v2626, %v1887
      %v2647 = vmul.f32 %v2610, %v1888
      %v2648 = vmul.f32 %v2627, %v1887
      %v2649 = vmul.f32 %v2611, %v1888
      %v2650 = vmul.f32 %v2628, %v1887
      %v2651 = vmul.f32 %v2612, %v1888
      %v2652 = vmul.f32 %v2629, %v1887
      %v2653 = vmul.f32 %v2613, %v1888
      %v2654 = vmul.f32 %v2630, %v1887
      %v2655 = vmul.f32 %v2614, %v1888
      %v2656 = vmul.f32 %v2631, %v1887
      %v2657 = vmul.f32 %v2615, %v1888
      %v2658 = vmul.f32 %v2632, %v1887
      %v2659 = vmul.f32 %v2616, %v1888
      %v2660 = vmul.f32 %v2633, %v1887
      %v2661 = vmul.f32 %v2617, %v1888
      %v2662 = vmul.f32 %v2634, %v1887
      %v2663 = vmul.f32 %v2618, %v1888
      %v2664 = vmul.f32 %v2635, %v1887
      %v2665 = vmul.f32 %v2619, %v1888
      %v2666 = vmul.f32 %v2636, %v1887
      %v2667 = vmul.f32 %v2620, %v1888
      %v2668 = vmul.f32 %v2637, %v1887
      %v2669 = vmul.f32 %v2621, %v1888
      %2670 = vrot.lane.b32.xlu0 %v2254, 1
      %v2671 = vpop.permute.xlu0 %2670
      %2672 = vrot.lane.b32.xlu0 %v2256, 1
      %v2673 = vpop.permute.xlu0 %2672
      %2674 = vrot.lane.b32.xlu0 %v2258, 1
      %v2675 = vpop.permute.xlu0 %2674
      %2676 = vrot.lane.b32.xlu0 %v2260, 1
      %v2677 = vpop.permute.xlu0 %2676
      %2678 = vrot.lane.b32.xlu0 %v2262, 1
      %v2679 = vpop.permute.xlu0 %2678
      %2680 = vrot.lane.b32.xlu0 %v2264, 1
      %v2681 = vpop.permute.xlu0 %2680
      %2682 = vrot.lane.b32.xlu0 %v2266, 1
      %v2683 = vpop.permute.xlu0 %2682
      %2684 = vrot.lane.b32.xlu0 %v2268, 1
      %v2685 = vpop.permute.xlu0 %2684
      %2686 = vrot.lane.b32.xlu0 %v2270, 1
      %v2687 = vpop.permute.xlu0 %2686
      %2688 = vrot.lane.b32.xlu0 %v2272, 1
      %v2689 = vpop.permute.xlu0 %2688
      %2690 = vrot.lane.b32.xlu0 %v2274, 1
      %v2691 = vpop.permute.xlu0 %2690
      %2692 = vrot.lane.b32.xlu0 %v2276, 1
      %v2693 = vpop.permute.xlu0 %2692
      %2694 = vrot.lane.b32.xlu0 %v2278, 1
      %v2695 = vpop.permute.xlu0 %2694
      %2696 = vrot.lane.b32.xlu0 %v2280, 1
      %v2697 = vpop.permute.xlu0 %2696
      %2698 = vrot.lane.b32.xlu0 %v2282, 1
      %v2699 = vpop.permute.xlu0 %2698
      %2700 = vrot.lane.b32.xlu0 %v2284, 1
      %v2701 = vpop.permute.xlu0 %2700
      %2702 = vrot.lane.b32.xlu0 %v2255, 1
      %v2703 = vpop.permute.xlu0 %2702
      %2704 = vrot.lane.b32.xlu0 %v2257, 1
      %v2705 = vpop.permute.xlu0 %2704
      %2706 = vrot.lane.b32.xlu0 %v2259, 1
      %v2707 = vpop.permute.xlu0 %2706
      %2708 = vrot.lane.b32.xlu0 %v2261, 1
      %v2709 = vpop.permute.xlu0 %2708
      %2710 = vrot.lane.b32.xlu0 %v2263, 1
      %v2711 = vpop.permute.xlu0 %2710
      %2712 = vrot.lane.b32.xlu0 %v2265, 1
      %v2713 = vpop.permute.xlu0 %2712
      %2714 = vrot.lane.b32.xlu0 %v2267, 1
      %v2715 = vpop.permute.xlu0 %2714
      %2716 = vrot.lane.b32.xlu0 %v2269, 1
      %v2717 = vpop.permute.xlu0 %2716
      %2718 = vrot.lane.b32.xlu0 %v2271, 1
      %v2719 = vpop.permute.xlu0 %2718
      %2720 = vrot.lane.b32.xlu0 %v2273, 1
      %v2721 = vpop.permute.xlu0 %2720
      %2722 = vrot.lane.b32.xlu0 %v2275, 1
      %v2723 = vpop.permute.xlu0 %2722
      %2724 = vrot.lane.b32.xlu0 %v2277, 1
      %v2725 = vpop.permute.xlu0 %2724
      %2726 = vrot.lane.b32.xlu0 %v2279, 1
      %v2727 = vpop.permute.xlu0 %2726
      %2728 = vrot.lane.b32.xlu0 %v2281, 1
      %v2729 = vpop.permute.xlu0 %2728
      %2730 = vrot.lane.b32.xlu0 %v2283, 1
      %v2731 = vpop.permute.xlu0 %2730
      %2732 = vrot.lane.b32.xlu0 %v2285, 1
      %v2733 = vpop.permute.xlu0 %2732
      %v2734 = vsel %vm844, %v2671, %v2703
      %v2735 = vsel %vm844, %v2673, %v2705
      %v2736 = vsel %vm844, %v2675, %v2707
      %v2737 = vsel %vm844, %v2677, %v2709
      %v2738 = vsel %vm844, %v2679, %v2711
      %v2739 = vsel %vm844, %v2681, %v2713
      %v2740 = vsel %vm844, %v2683, %v2715
      %v2741 = vsel %vm844, %v2685, %v2717
      %v2742 = vsel %vm844, %v2687, %v2719
      %v2743 = vsel %vm844, %v2689, %v2721
      %v2744 = vsel %vm844, %v2691, %v2723
      %v2745 = vsel %vm844, %v2693, %v2725
      %v2746 = vsel %vm844, %v2695, %v2727
      %v2747 = vsel %vm844, %v2697, %v2729
      %v2748 = vsel %vm844, %v2699, %v2731
      %v2749 = vsel %vm844, %v2701, %v2733
      %v2750 = vsel %vm844, %v2703, %v2671
      %v2751 = vsel %vm844, %v2705, %v2673
      %v2752 = vsel %vm844, %v2707, %v2675
      %v2753 = vsel %vm844, %v2709, %v2677
      %v2754 = vsel %vm844, %v2711, %v2679
      %v2755 = vsel %vm844, %v2713, %v2681
      %v2756 = vsel %vm844, %v2715, %v2683
      %v2757 = vsel %vm844, %v2717, %v2685
      %v2758 = vsel %vm844, %v2719, %v2687
      %v2759 = vsel %vm844, %v2721, %v2689
      %v2760 = vsel %vm844, %v2723, %v2691
      %v2761 = vsel %vm844, %v2725, %v2693
      %v2762 = vsel %vm844, %v2727, %v2695
      %v2763 = vsel %vm844, %v2729, %v2697
      %v2764 = vsel %vm844, %v2731, %v2699
      %v2765 = vsel %vm844, %v2733, %v2701
      %v2766 = vmul.f32 %v2750, %v1901
      %v2767 = vmul.f32 %v2734, %v1902
      %v2768 = vmul.f32 %v2751, %v1901
      %v2769 = vmul.f32 %v2735, %v1902
      %v2770 = vmul.f32 %v2752, %v1901
      %v2771 = vmul.f32 %v2736, %v1902
      %v2772 = vmul.f32 %v2753, %v1901
      %v2773 = vmul.f32 %v2737, %v1902
      %v2774 = vmul.f32 %v2754, %v1901
      %v2775 = vmul.f32 %v2738, %v1902
      %v2776 = vmul.f32 %v2755, %v1901
      %v2777 = vmul.f32 %v2739, %v1902
      %v2778 = vmul.f32 %v2756, %v1901
      %v2779 = vmul.f32 %v2740, %v1902
      %v2780 = vmul.f32 %v2757, %v1901
      %v2781 = vmul.f32 %v2741, %v1902
      %v2782 = vmul.f32 %v2758, %v1901
      %v2783 = vmul.f32 %v2742, %v1902
      %v2784 = vmul.f32 %v2759, %v1901
      %v2785 = vmul.f32 %v2743, %v1902
      %v2786 = vmul.f32 %v2760, %v1901
      %v2787 = vmul.f32 %v2744, %v1902
      %v2788 = vmul.f32 %v2761, %v1901
      %v2789 = vmul.f32 %v2745, %v1902
      %v2790 = vmul.f32 %v2762, %v1901
      %v2791 = vmul.f32 %v2746, %v1902
      %v2792 = vmul.f32 %v2763, %v1901
      %v2793 = vmul.f32 %v2747, %v1902
      %v2794 = vmul.f32 %v2764, %v1901
      %v2795 = vmul.f32 %v2748, %v1902
      %v2796 = vmul.f32 %v2765, %v1901
      %v2797 = vmul.f32 %v2749, %v1902
      %2798 = vrot.lane.b32.xlu0 %v2254, 127
      %v2799 = vpop.permute.xlu0 %2798
      %2800 = vrot.lane.b32.xlu0 %v2256, 127
      %v2801 = vpop.permute.xlu0 %2800
      %2802 = vrot.lane.b32.xlu0 %v2258, 127
      %v2803 = vpop.permute.xlu0 %2802
      %2804 = vrot.lane.b32.xlu0 %v2260, 127
      %v2805 = vpop.permute.xlu0 %2804
      %2806 = vrot.lane.b32.xlu0 %v2262, 127
      %v2807 = vpop.permute.xlu0 %2806
      %2808 = vrot.lane.b32.xlu0 %v2264, 127
      %v2809 = vpop.permute.xlu0 %2808
      %2810 = vrot.lane.b32.xlu0 %v2266, 127
      %v2811 = vpop.permute.xlu0 %2810
      %2812 = vrot.lane.b32.xlu0 %v2268, 127
      %v2813 = vpop.permute.xlu0 %2812
      %2814 = vrot.lane.b32.xlu0 %v2270, 127
      %v2815 = vpop.permute.xlu0 %2814
      %2816 = vrot.lane.b32.xlu0 %v2272, 127
      %v2817 = vpop.permute.xlu0 %2816
      %2818 = vrot.lane.b32.xlu0 %v2274, 127
      %v2819 = vpop.permute.xlu0 %2818
      %2820 = vrot.lane.b32.xlu0 %v2276, 127
      %v2821 = vpop.permute.xlu0 %2820
      %2822 = vrot.lane.b32.xlu0 %v2278, 127
      %v2823 = vpop.permute.xlu0 %2822
      %2824 = vrot.lane.b32.xlu0 %v2280, 127
      %v2825 = vpop.permute.xlu0 %2824
      %2826 = vrot.lane.b32.xlu0 %v2282, 127
      %v2827 = vpop.permute.xlu0 %2826
      %2828 = vrot.lane.b32.xlu0 %v2284, 127
      %v2829 = vpop.permute.xlu0 %2828
      %2830 = vrot.lane.b32.xlu0 %v2255, 127
      %v2831 = vpop.permute.xlu0 %2830
      %2832 = vrot.lane.b32.xlu0 %v2257, 127
      %v2833 = vpop.permute.xlu0 %2832
      %2834 = vrot.lane.b32.xlu0 %v2259, 127
      %v2835 = vpop.permute.xlu0 %2834
      %2836 = vrot.lane.b32.xlu0 %v2261, 127
      %v2837 = vpop.permute.xlu0 %2836
      %2838 = vrot.lane.b32.xlu0 %v2263, 127
      %v2839 = vpop.permute.xlu0 %2838
      %2840 = vrot.lane.b32.xlu0 %v2265, 127
      %v2841 = vpop.permute.xlu0 %2840
      %2842 = vrot.lane.b32.xlu0 %v2267, 127
      %v2843 = vpop.permute.xlu0 %2842
      %2844 = vrot.lane.b32.xlu0 %v2269, 127
      %v2845 = vpop.permute.xlu0 %2844
      %2846 = vrot.lane.b32.xlu0 %v2271, 127
      %v2847 = vpop.permute.xlu0 %2846
      %2848 = vrot.lane.b32.xlu0 %v2273, 127
      %v2849 = vpop.permute.xlu0 %2848
      %2850 = vrot.lane.b32.xlu0 %v2275, 127
      %v2851 = vpop.permute.xlu0 %2850
      %2852 = vrot.lane.b32.xlu0 %v2277, 127
      %v2853 = vpop.permute.xlu0 %2852
      %2854 = vrot.lane.b32.xlu0 %v2279, 127
      %v2855 = vpop.permute.xlu0 %2854
      %2856 = vrot.lane.b32.xlu0 %v2281, 127
      %v2857 = vpop.permute.xlu0 %2856
      %2858 = vrot.lane.b32.xlu0 %v2283, 127
      %v2859 = vpop.permute.xlu0 %2858
      %2860 = vrot.lane.b32.xlu0 %v2285, 127
      %v2861 = vpop.permute.xlu0 %2860
      %v2862 = vsel %vm868, %v2799, %v2831
      %v2863 = vsel %vm868, %v2801, %v2833
      %v2864 = vsel %vm868, %v2803, %v2835
      %v2865 = vsel %vm868, %v2805, %v2837
      %v2866 = vsel %vm868, %v2807, %v2839
      %v2867 = vsel %vm868, %v2809, %v2841
      %v2868 = vsel %vm868, %v2811, %v2843
      %v2869 = vsel %vm868, %v2813, %v2845
      %v2870 = vsel %vm868, %v2815, %v2847
      %v2871 = vsel %vm868, %v2817, %v2849
      %v2872 = vsel %vm868, %v2819, %v2851
      %v2873 = vsel %vm868, %v2821, %v2853
      %v2874 = vsel %vm868, %v2823, %v2855
      %v2875 = vsel %vm868, %v2825, %v2857
      %v2876 = vsel %vm868, %v2827, %v2859
      %v2877 = vsel %vm868, %v2829, %v2861
      %v2878 = vsel %vm868, %v2831, %v2799
      %v2879 = vsel %vm868, %v2833, %v2801
      %v2880 = vsel %vm868, %v2835, %v2803
      %v2881 = vsel %vm868, %v2837, %v2805
      %v2882 = vsel %vm868, %v2839, %v2807
      %v2883 = vsel %vm868, %v2841, %v2809
      %v2884 = vsel %vm868, %v2843, %v2811
      %v2885 = vsel %vm868, %v2845, %v2813
      %v2886 = vsel %vm868, %v2847, %v2815
      %v2887 = vsel %vm868, %v2849, %v2817
      %v2888 = vsel %vm868, %v2851, %v2819
      %v2889 = vsel %vm868, %v2853, %v2821
      %v2890 = vsel %vm868, %v2855, %v2823
      %v2891 = vsel %vm868, %v2857, %v2825
      %v2892 = vsel %vm868, %v2859, %v2827
      %v2893 = vsel %vm868, %v2861, %v2829
      %v2894 = vmul.f32 %v2862, %v1915
      %v2895 = vmul.f32 %v2878, %v1916
      %v2896 = vmul.f32 %v2863, %v1915
      %v2897 = vmul.f32 %v2879, %v1916
      %v2898 = vmul.f32 %v2864, %v1915
      %v2899 = vmul.f32 %v2880, %v1916
      %v2900 = vmul.f32 %v2865, %v1915
      %v2901 = vmul.f32 %v2881, %v1916
      %v2902 = vmul.f32 %v2866, %v1915
      %v2903 = vmul.f32 %v2882, %v1916
      %v2904 = vmul.f32 %v2867, %v1915
      %v2905 = vmul.f32 %v2883, %v1916
      %v2906 = vmul.f32 %v2868, %v1915
      %v2907 = vmul.f32 %v2884, %v1916
      %v2908 = vmul.f32 %v2869, %v1915
      %v2909 = vmul.f32 %v2885, %v1916
      %v2910 = vmul.f32 %v2870, %v1915
      %v2911 = vmul.f32 %v2886, %v1916
      %v2912 = vmul.f32 %v2871, %v1915
      %v2913 = vmul.f32 %v2887, %v1916
      %v2914 = vmul.f32 %v2872, %v1915
      %v2915 = vmul.f32 %v2888, %v1916
      %v2916 = vmul.f32 %v2873, %v1915
      %v2917 = vmul.f32 %v2889, %v1916
      %v2918 = vmul.f32 %v2874, %v1915
      %v2919 = vmul.f32 %v2890, %v1916
      %v2920 = vmul.f32 %v2875, %v1915
      %v2921 = vmul.f32 %v2891, %v1916
      %v2922 = vmul.f32 %v2876, %v1915
      %v2923 = vmul.f32 %v2892, %v1916
      %v2924 = vmul.f32 %v2877, %v1915
      %v2925 = vmul.f32 %v2893, %v1916
      %2926 = vrot.lane.b32.xlu0 %v2254, 113
      %v2927 = vpop.permute.xlu0 %2926
      %2928 = vrot.lane.b32.xlu0 %v2256, 113
      %v2929 = vpop.permute.xlu0 %2928
      %2930 = vrot.lane.b32.xlu0 %v2258, 113
      %v2931 = vpop.permute.xlu0 %2930
      %2932 = vrot.lane.b32.xlu0 %v2260, 113
      %v2933 = vpop.permute.xlu0 %2932
      %2934 = vrot.lane.b32.xlu0 %v2262, 113
      %v2935 = vpop.permute.xlu0 %2934
      %2936 = vrot.lane.b32.xlu0 %v2264, 113
      %v2937 = vpop.permute.xlu0 %2936
      %2938 = vrot.lane.b32.xlu0 %v2266, 113
      %v2939 = vpop.permute.xlu0 %2938
      %2940 = vrot.lane.b32.xlu0 %v2268, 113
      %v2941 = vpop.permute.xlu0 %2940
      %2942 = vrot.lane.b32.xlu0 %v2270, 113
      %v2943 = vpop.permute.xlu0 %2942
      %2944 = vrot.lane.b32.xlu0 %v2272, 113
      %v2945 = vpop.permute.xlu0 %2944
      %2946 = vrot.lane.b32.xlu0 %v2274, 113
      %v2947 = vpop.permute.xlu0 %2946
      %2948 = vrot.lane.b32.xlu0 %v2276, 113
      %v2949 = vpop.permute.xlu0 %2948
      %2950 = vrot.lane.b32.xlu0 %v2278, 113
      %v2951 = vpop.permute.xlu0 %2950
      %2952 = vrot.lane.b32.xlu0 %v2280, 113
      %v2953 = vpop.permute.xlu0 %2952
      %2954 = vrot.lane.b32.xlu0 %v2282, 113
      %v2955 = vpop.permute.xlu0 %2954
      %2956 = vrot.lane.b32.xlu0 %v2284, 113
      %v2957 = vpop.permute.xlu0 %2956
      %2958 = vrot.lane.b32.xlu0 %v2255, 113
      %v2959 = vpop.permute.xlu0 %2958
      %2960 = vrot.lane.b32.xlu0 %v2257, 113
      %v2961 = vpop.permute.xlu0 %2960
      %2962 = vrot.lane.b32.xlu0 %v2259, 113
      %v2963 = vpop.permute.xlu0 %2962
      %2964 = vrot.lane.b32.xlu0 %v2261, 113
      %v2965 = vpop.permute.xlu0 %2964
      %2966 = vrot.lane.b32.xlu0 %v2263, 113
      %v2967 = vpop.permute.xlu0 %2966
      %2968 = vrot.lane.b32.xlu0 %v2265, 113
      %v2969 = vpop.permute.xlu0 %2968
      %2970 = vrot.lane.b32.xlu0 %v2267, 113
      %v2971 = vpop.permute.xlu0 %2970
      %2972 = vrot.lane.b32.xlu0 %v2269, 113
      %v2973 = vpop.permute.xlu0 %2972
      %2974 = vrot.lane.b32.xlu0 %v2271, 113
      %v2975 = vpop.permute.xlu0 %2974
      %2976 = vrot.lane.b32.xlu0 %v2273, 113
      %v2977 = vpop.permute.xlu0 %2976
      %2978 = vrot.lane.b32.xlu0 %v2275, 113
      %v2979 = vpop.permute.xlu0 %2978
      %2980 = vrot.lane.b32.xlu0 %v2277, 113
      %v2981 = vpop.permute.xlu0 %2980
      %2982 = vrot.lane.b32.xlu0 %v2279, 113
      %v2983 = vpop.permute.xlu0 %2982
      %2984 = vrot.lane.b32.xlu0 %v2281, 113
      %v2985 = vpop.permute.xlu0 %2984
      %2986 = vrot.lane.b32.xlu0 %v2283, 113
      %v2987 = vpop.permute.xlu0 %2986
      %2988 = vrot.lane.b32.xlu0 %v2285, 113
      %v2989 = vpop.permute.xlu0 %2988
      %v2990 = vsel %vm892, %v2927, %v2959
      %v2991 = vsel %vm892, %v2929, %v2961
      %v2992 = vsel %vm892, %v2931, %v2963
      %v2993 = vsel %vm892, %v2933, %v2965
      %v2994 = vsel %vm892, %v2935, %v2967
      %v2995 = vsel %vm892, %v2937, %v2969
      %v2996 = vsel %vm892, %v2939, %v2971
      %v2997 = vsel %vm892, %v2941, %v2973
      %v2998 = vsel %vm892, %v2943, %v2975
      %v2999 = vsel %vm892, %v2945, %v2977
      %v3000 = vsel %vm892, %v2947, %v2979
      %v3001 = vsel %vm892, %v2949, %v2981
      %v3002 = vsel %vm892, %v2951, %v2983
      %v3003 = vsel %vm892, %v2953, %v2985
      %v3004 = vsel %vm892, %v2955, %v2987
      %v3005 = vsel %vm892, %v2957, %v2989
      %v3006 = vsel %vm892, %v2959, %v2927
      %v3007 = vsel %vm892, %v2961, %v2929
      %v3008 = vsel %vm892, %v2963, %v2931
      %v3009 = vsel %vm892, %v2965, %v2933
      %v3010 = vsel %vm892, %v2967, %v2935
      %v3011 = vsel %vm892, %v2969, %v2937
      %v3012 = vsel %vm892, %v2971, %v2939
      %v3013 = vsel %vm892, %v2973, %v2941
      %v3014 = vsel %vm892, %v2975, %v2943
      %v3015 = vsel %vm892, %v2977, %v2945
      %v3016 = vsel %vm892, %v2979, %v2947
      %v3017 = vsel %vm892, %v2981, %v2949
      %v3018 = vsel %vm892, %v2983, %v2951
      %v3019 = vsel %vm892, %v2985, %v2953
      %v3020 = vsel %vm892, %v2987, %v2955
      %v3021 = vsel %vm892, %v2989, %v2957
      %v3022 = vmul.f32 %v2990, %v1929
      %v3023 = vmul.f32 %v3006, %v1930
      %v3024 = vmul.f32 %v2991, %v1929
      %v3025 = vmul.f32 %v3007, %v1930
      %v3026 = vmul.f32 %v2992, %v1929
      %v3027 = vmul.f32 %v3008, %v1930
      %v3028 = vmul.f32 %v2993, %v1929
      %v3029 = vmul.f32 %v3009, %v1930
      %v3030 = vmul.f32 %v2994, %v1929
      %v3031 = vmul.f32 %v3010, %v1930
      %v3032 = vmul.f32 %v2995, %v1929
      %v3033 = vmul.f32 %v3011, %v1930
      %v3034 = vmul.f32 %v2996, %v1929
      %v3035 = vmul.f32 %v3012, %v1930
      %v3036 = vmul.f32 %v2997, %v1929
      %v3037 = vmul.f32 %v3013, %v1930
      %v3038 = vmul.f32 %v2998, %v1929
      %v3039 = vmul.f32 %v3014, %v1930
      %v3040 = vmul.f32 %v2999, %v1929
      %v3041 = vmul.f32 %v3015, %v1930
      %v3042 = vmul.f32 %v3000, %v1929
      %v3043 = vmul.f32 %v3016, %v1930
      %v3044 = vmul.f32 %v3001, %v1929
      %v3045 = vmul.f32 %v3017, %v1930
      %v3046 = vmul.f32 %v3002, %v1929
      %v3047 = vmul.f32 %v3018, %v1930
      %v3048 = vmul.f32 %v3003, %v1929
      %v3049 = vmul.f32 %v3019, %v1930
      %v3050 = vmul.f32 %v3004, %v1929
      %v3051 = vmul.f32 %v3020, %v1930
      %v3052 = vmul.f32 %v3005, %v1929
      %v3053 = vmul.f32 %v3021, %v1930
      %3054 = vrot.lane.b32.xlu0 %v2254, 112
      %v3055 = vpop.permute.xlu0 %3054
      %3056 = vrot.lane.b32.xlu0 %v2256, 112
      %v3057 = vpop.permute.xlu0 %3056
      %3058 = vrot.lane.b32.xlu0 %v2258, 112
      %v3059 = vpop.permute.xlu0 %3058
      %3060 = vrot.lane.b32.xlu0 %v2260, 112
      %v3061 = vpop.permute.xlu0 %3060
      %3062 = vrot.lane.b32.xlu0 %v2262, 112
      %v3063 = vpop.permute.xlu0 %3062
      %3064 = vrot.lane.b32.xlu0 %v2264, 112
      %v3065 = vpop.permute.xlu0 %3064
      %3066 = vrot.lane.b32.xlu0 %v2266, 112
      %v3067 = vpop.permute.xlu0 %3066
      %3068 = vrot.lane.b32.xlu0 %v2268, 112
      %v3069 = vpop.permute.xlu0 %3068
      %3070 = vrot.lane.b32.xlu0 %v2270, 112
      %v3071 = vpop.permute.xlu0 %3070
      %3072 = vrot.lane.b32.xlu0 %v2272, 112
      %v3073 = vpop.permute.xlu0 %3072
      %3074 = vrot.lane.b32.xlu0 %v2274, 112
      %v3075 = vpop.permute.xlu0 %3074
      %3076 = vrot.lane.b32.xlu0 %v2276, 112
      %v3077 = vpop.permute.xlu0 %3076
      %3078 = vrot.lane.b32.xlu0 %v2278, 112
      %v3079 = vpop.permute.xlu0 %3078
      %3080 = vrot.lane.b32.xlu0 %v2280, 112
      %v3081 = vpop.permute.xlu0 %3080
      %3082 = vrot.lane.b32.xlu0 %v2282, 112
      %v3083 = vpop.permute.xlu0 %3082
      %3084 = vrot.lane.b32.xlu0 %v2284, 112
      %v3085 = vpop.permute.xlu0 %3084
      %3086 = vrot.lane.b32.xlu0 %v2255, 112
      %v3087 = vpop.permute.xlu0 %3086
      %3088 = vrot.lane.b32.xlu0 %v2257, 112
      %v3089 = vpop.permute.xlu0 %3088
      %3090 = vrot.lane.b32.xlu0 %v2259, 112
      %v3091 = vpop.permute.xlu0 %3090
      %3092 = vrot.lane.b32.xlu0 %v2261, 112
      %v3093 = vpop.permute.xlu0 %3092
      %3094 = vrot.lane.b32.xlu0 %v2263, 112
      %v3095 = vpop.permute.xlu0 %3094
      %3096 = vrot.lane.b32.xlu0 %v2265, 112
      %v3097 = vpop.permute.xlu0 %3096
      %3098 = vrot.lane.b32.xlu0 %v2267, 112
      %v3099 = vpop.permute.xlu0 %3098
      %3100 = vrot.lane.b32.xlu0 %v2269, 112
      %v3101 = vpop.permute.xlu0 %3100
      %3102 = vrot.lane.b32.xlu0 %v2271, 112
      %v3103 = vpop.permute.xlu0 %3102
      %3104 = vrot.lane.b32.xlu0 %v2273, 112
      %v3105 = vpop.permute.xlu0 %3104
      %3106 = vrot.lane.b32.xlu0 %v2275, 112
      %v3107 = vpop.permute.xlu0 %3106
      %3108 = vrot.lane.b32.xlu0 %v2277, 112
      %v3109 = vpop.permute.xlu0 %3108
      %3110 = vrot.lane.b32.xlu0 %v2279, 112
      %v3111 = vpop.permute.xlu0 %3110
      %3112 = vrot.lane.b32.xlu0 %v2281, 112
      %v3113 = vpop.permute.xlu0 %3112
      %3114 = vrot.lane.b32.xlu0 %v2283, 112
      %v3115 = vpop.permute.xlu0 %3114
      %3116 = vrot.lane.b32.xlu0 %v2285, 112
      %v3117 = vpop.permute.xlu0 %3116
      %v3118 = vsel %vm916, %v3055, %v3087
      %v3119 = vsel %vm916, %v3057, %v3089
      %v3120 = vsel %vm916, %v3059, %v3091
      %v3121 = vsel %vm916, %v3061, %v3093
      %v3122 = vsel %vm916, %v3063, %v3095
      %v3123 = vsel %vm916, %v3065, %v3097
      %v3124 = vsel %vm916, %v3067, %v3099
      %v3125 = vsel %vm916, %v3069, %v3101
      %v3126 = vsel %vm916, %v3071, %v3103
      %v3127 = vsel %vm916, %v3073, %v3105
      %v3128 = vsel %vm916, %v3075, %v3107
      %v3129 = vsel %vm916, %v3077, %v3109
      %v3130 = vsel %vm916, %v3079, %v3111
      %v3131 = vsel %vm916, %v3081, %v3113
      %v3132 = vsel %vm916, %v3083, %v3115
      %v3133 = vsel %vm916, %v3085, %v3117
      %v3134 = vsel %vm916, %v3087, %v3055
      %v3135 = vsel %vm916, %v3089, %v3057
      %v3136 = vsel %vm916, %v3091, %v3059
      %v3137 = vsel %vm916, %v3093, %v3061
      %v3138 = vsel %vm916, %v3095, %v3063
      %v3139 = vsel %vm916, %v3097, %v3065
      %v3140 = vsel %vm916, %v3099, %v3067
      %v3141 = vsel %vm916, %v3101, %v3069
      %v3142 = vsel %vm916, %v3103, %v3071
      %v3143 = vsel %vm916, %v3105, %v3073
      %v3144 = vsel %vm916, %v3107, %v3075
      %v3145 = vsel %vm916, %v3109, %v3077
      %v3146 = vsel %vm916, %v3111, %v3079
      %v3147 = vsel %vm916, %v3113, %v3081
      %v3148 = vsel %vm916, %v3115, %v3083
      %v3149 = vsel %vm916, %v3117, %v3085
      %v3150 = vmul.f32 %v3118, %v1943
      %v3151 = vmul.f32 %v3134, %v1944
      %v3152 = vmul.f32 %v3119, %v1943
      %v3153 = vmul.f32 %v3135, %v1944
      %v3154 = vmul.f32 %v3120, %v1943
      %v3155 = vmul.f32 %v3136, %v1944
      %v3156 = vmul.f32 %v3121, %v1943
      %v3157 = vmul.f32 %v3137, %v1944
      %v3158 = vmul.f32 %v3122, %v1943
      %v3159 = vmul.f32 %v3138, %v1944
      %v3160 = vmul.f32 %v3123, %v1943
      %v3161 = vmul.f32 %v3139, %v1944
      %v3162 = vmul.f32 %v3124, %v1943
      %v3163 = vmul.f32 %v3140, %v1944
      %v3164 = vmul.f32 %v3125, %v1943
      %v3165 = vmul.f32 %v3141, %v1944
      %v3166 = vmul.f32 %v3126, %v1943
      %v3167 = vmul.f32 %v3142, %v1944
      %v3168 = vmul.f32 %v3127, %v1943
      %v3169 = vmul.f32 %v3143, %v1944
      %v3170 = vmul.f32 %v3128, %v1943
      %v3171 = vmul.f32 %v3144, %v1944
      %v3172 = vmul.f32 %v3129, %v1943
      %v3173 = vmul.f32 %v3145, %v1944
      %v3174 = vmul.f32 %v3130, %v1943
      %v3175 = vmul.f32 %v3146, %v1944
      %v3176 = vmul.f32 %v3131, %v1943
      %v3177 = vmul.f32 %v3147, %v1944
      %v3178 = vmul.f32 %v3132, %v1943
      %v3179 = vmul.f32 %v3148, %v1944
      %v3180 = vmul.f32 %v3133, %v1943
      %v3181 = vmul.f32 %v3149, %v1944
      %3182 = vrot.lane.b32.xlu0 %v2254, 111
      %v3183 = vpop.permute.xlu0 %3182
      %3184 = vrot.lane.b32.xlu0 %v2256, 111
      %v3185 = vpop.permute.xlu0 %3184
      %3186 = vrot.lane.b32.xlu0 %v2258, 111
      %v3187 = vpop.permute.xlu0 %3186
      %3188 = vrot.lane.b32.xlu0 %v2260, 111
      %v3189 = vpop.permute.xlu0 %3188
      %3190 = vrot.lane.b32.xlu0 %v2262, 111
      %v3191 = vpop.permute.xlu0 %3190
      %3192 = vrot.lane.b32.xlu0 %v2264, 111
      %v3193 = vpop.permute.xlu0 %3192
      %3194 = vrot.lane.b32.xlu0 %v2266, 111
      %v3195 = vpop.permute.xlu0 %3194
      %3196 = vrot.lane.b32.xlu0 %v2268, 111
      %v3197 = vpop.permute.xlu0 %3196
      %3198 = vrot.lane.b32.xlu0 %v2270, 111
      %v3199 = vpop.permute.xlu0 %3198
      %3200 = vrot.lane.b32.xlu0 %v2272, 111
      %v3201 = vpop.permute.xlu0 %3200
      %3202 = vrot.lane.b32.xlu0 %v2274, 111
      %v3203 = vpop.permute.xlu0 %3202
      %3204 = vrot.lane.b32.xlu0 %v2276, 111
      %v3205 = vpop.permute.xlu0 %3204
      %3206 = vrot.lane.b32.xlu0 %v2278, 111
      %v3207 = vpop.permute.xlu0 %3206
      %3208 = vrot.lane.b32.xlu0 %v2280, 111
      %v3209 = vpop.permute.xlu0 %3208
      %3210 = vrot.lane.b32.xlu0 %v2282, 111
      %v3211 = vpop.permute.xlu0 %3210
      %3212 = vrot.lane.b32.xlu0 %v2284, 111
      %v3213 = vpop.permute.xlu0 %3212
      %3214 = vrot.lane.b32.xlu0 %v2255, 111
      %v3215 = vpop.permute.xlu0 %3214
      %3216 = vrot.lane.b32.xlu0 %v2257, 111
      %v3217 = vpop.permute.xlu0 %3216
      %3218 = vrot.lane.b32.xlu0 %v2259, 111
      %v3219 = vpop.permute.xlu0 %3218
      %3220 = vrot.lane.b32.xlu0 %v2261, 111
      %v3221 = vpop.permute.xlu0 %3220
      %3222 = vrot.lane.b32.xlu0 %v2263, 111
      %v3223 = vpop.permute.xlu0 %3222
      %3224 = vrot.lane.b32.xlu0 %v2265, 111
      %v3225 = vpop.permute.xlu0 %3224
      %3226 = vrot.lane.b32.xlu0 %v2267, 111
      %v3227 = vpop.permute.xlu0 %3226
      %3228 = vrot.lane.b32.xlu0 %v2269, 111
      %v3229 = vpop.permute.xlu0 %3228
      %3230 = vrot.lane.b32.xlu0 %v2271, 111
      %v3231 = vpop.permute.xlu0 %3230
      %3232 = vrot.lane.b32.xlu0 %v2273, 111
      %v3233 = vpop.permute.xlu0 %3232
      %3234 = vrot.lane.b32.xlu0 %v2275, 111
      %v3235 = vpop.permute.xlu0 %3234
      %3236 = vrot.lane.b32.xlu0 %v2277, 111
      %v3237 = vpop.permute.xlu0 %3236
      %3238 = vrot.lane.b32.xlu0 %v2279, 111
      %v3239 = vpop.permute.xlu0 %3238
      %3240 = vrot.lane.b32.xlu0 %v2281, 111
      %v3241 = vpop.permute.xlu0 %3240
      %3242 = vrot.lane.b32.xlu0 %v2283, 111
      %v3243 = vpop.permute.xlu0 %3242
      %3244 = vrot.lane.b32.xlu0 %v2285, 111
      %v3245 = vpop.permute.xlu0 %3244
      %v3246 = vsel %vm940, %v3183, %v3215
      %v3247 = vsel %vm940, %v3185, %v3217
      %v3248 = vsel %vm940, %v3187, %v3219
      %v3249 = vsel %vm940, %v3189, %v3221
      %v3250 = vsel %vm940, %v3191, %v3223
      %v3251 = vsel %vm940, %v3193, %v3225
      %v3252 = vsel %vm940, %v3195, %v3227
      %v3253 = vsel %vm940, %v3197, %v3229
      %v3254 = vsel %vm940, %v3199, %v3231
      %v3255 = vsel %vm940, %v3201, %v3233
      %v3256 = vsel %vm940, %v3203, %v3235
      %v3257 = vsel %vm940, %v3205, %v3237
      %v3258 = vsel %vm940, %v3207, %v3239
      %v3259 = vsel %vm940, %v3209, %v3241
      %v3260 = vsel %vm940, %v3211, %v3243
      %v3261 = vsel %vm940, %v3213, %v3245
      %v3262 = vsel %vm940, %v3215, %v3183
      %v3263 = vsel %vm940, %v3217, %v3185
      %v3264 = vsel %vm940, %v3219, %v3187
      %v3265 = vsel %vm940, %v3221, %v3189
      %v3266 = vsel %vm940, %v3223, %v3191
      %v3267 = vsel %vm940, %v3225, %v3193
      %v3268 = vsel %vm940, %v3227, %v3195
      %v3269 = vsel %vm940, %v3229, %v3197
      %v3270 = vsel %vm940, %v3231, %v3199
      %v3271 = vsel %vm940, %v3233, %v3201
      %v3272 = vsel %vm940, %v3235, %v3203
      %v3273 = vsel %vm940, %v3237, %v3205
      %v3274 = vsel %vm940, %v3239, %v3207
      %v3275 = vsel %vm940, %v3241, %v3209
      %v3276 = vsel %vm940, %v3243, %v3211
      %v3277 = vsel %vm940, %v3245, %v3213
      %v3278 = vmul.f32 %v3246, %v1957
      %v3279 = vmul.f32 %v3262, %v1958
      %v3280 = vmul.f32 %v3247, %v1957
      %v3281 = vmul.f32 %v3263, %v1958
      %v3282 = vmul.f32 %v3248, %v1957
      %v3283 = vmul.f32 %v3264, %v1958
      %v3284 = vmul.f32 %v3249, %v1957
      %v3285 = vmul.f32 %v3265, %v1958
      %v3286 = vmul.f32 %v3250, %v1957
      %v3287 = vmul.f32 %v3266, %v1958
      %v3288 = vmul.f32 %v3251, %v1957
      %v3289 = vmul.f32 %v3267, %v1958
      %v3290 = vmul.f32 %v3252, %v1957
      %v3291 = vmul.f32 %v3268, %v1958
      %v3292 = vmul.f32 %v3253, %v1957
      %v3293 = vmul.f32 %v3269, %v1958
      %v3294 = vmul.f32 %v3254, %v1957
      %v3295 = vmul.f32 %v3270, %v1958
      %v3296 = vmul.f32 %v3255, %v1957
      %v3297 = vmul.f32 %v3271, %v1958
      %v3298 = vmul.f32 %v3256, %v1957
      %v3299 = vmul.f32 %v3272, %v1958
      %v3300 = vmul.f32 %v3257, %v1957
      %v3301 = vmul.f32 %v3273, %v1958
      %v3302 = vmul.f32 %v3258, %v1957
      %v3303 = vmul.f32 %v3274, %v1958
      %v3304 = vmul.f32 %v3259, %v1957
      %v3305 = vmul.f32 %v3275, %v1958
      %v3306 = vmul.f32 %v3260, %v1957
      %v3307 = vmul.f32 %v3276, %v1958
      %v3308 = vmul.f32 %v3261, %v1957
      %v3309 = vmul.f32 %v3277, %v1958
      %v3310 = vld [vmem:[%s18] sm:$0xff]
      %v3311 = vld [vmem:[%s18 + $0x8] sm:$0xff]
      %v3312 = vld [vmem:[%s18 + $0x10] sm:$0xff]
      %v3313 = vld [vmem:[%s18 + $0x18] sm:$0xff]
      %v3314 = vld [vmem:[%s18 + $0x20] sm:$0xff]
      %v3315 = vld [vmem:[%s18 + $0x28] sm:$0xff]
      %v3316 = vld [vmem:[%s18 + $0x30] sm:$0xff]
      %v3317 = vld [vmem:[%s18 + $0x38] sm:$0xff]
      %v3318 = vld [vmem:[%s18 + $0x40] sm:$0xff]
      %v3319 = vld [vmem:[%s18 + $0x48] sm:$0xff]
      %v3320 = vld [vmem:[%s18 + $0x50] sm:$0xff]
      %v3321 = vld [vmem:[%s18 + $0x58] sm:$0xff]
      %v3322 = vld [vmem:[%s18 + $0x60] sm:$0xff]
      %v3323 = vld [vmem:[%s18 + $0x68] sm:$0xff]
      %v3324 = vld [vmem:[%s18 + $0x70] sm:$0xff]
      %v3325 = vld [vmem:[%s18 + $0x78] sm:$0xff]
      %v3326 = vld [vmem:[%s18 + $0x80] sm:$0xff]
      %v3327 = vld [vmem:[%s18 + $0x88] sm:$0xff]
      %v3328 = vld [vmem:[%s18 + $0x90] sm:$0xff]
      %v3329 = vld [vmem:[%s18 + $0x98] sm:$0xff]
      %v3330 = vld [vmem:[%s18 + $0xa0] sm:$0xff]
      %v3331 = vld [vmem:[%s18 + $0xa8] sm:$0xff]
      %v3332 = vld [vmem:[%s18 + $0xb0] sm:$0xff]
      %v3333 = vld [vmem:[%s18 + $0xb8] sm:$0xff]
      %v3334 = vld [vmem:[%s18 + $0xc0] sm:$0xff]
      %v3335 = vld [vmem:[%s18 + $0xc8] sm:$0xff]
      %v3336 = vld [vmem:[%s18 + $0xd0] sm:$0xff]
      %v3337 = vld [vmem:[%s18 + $0xd8] sm:$0xff]
      %v3338 = vld [vmem:[%s18 + $0xe0] sm:$0xff]
      %v3339 = vld [vmem:[%s18 + $0xe8] sm:$0xff]
      %v3340 = vld [vmem:[%s18 + $0xf0] sm:$0xff]
      %v3341 = vld [vmem:[%s18 + $0xf8] sm:$0xff]
      %v3342 = vld [vmem:[%s18 + $0x100] sm:$0xff]
      %v3343 = vld [vmem:[%s18 + $0x108] sm:$0xff]
      %v3344 = vld [vmem:[%s18 + $0x110] sm:$0xff]
      %v3345 = vld [vmem:[%s18 + $0x118] sm:$0xff]
      %v3346 = vld [vmem:[%s19] sm:$0xff]
      %v3347 = vld [vmem:[%s19 + $0x8] sm:$0xff]
      %v3348 = vld [vmem:[%s19 + $0x10] sm:$0xff]
      %v3349 = vld [vmem:[%s19 + $0x18] sm:$0xff]
      %3351 = vset.pattern.permute.xlu0 0
      %3352 = vperm.xlu0 %3351, %v3346
      %v3353 = vpop.permute.xlu0 %3352
      %3356 = vset.pattern.permute.xlu0 0
      %3357 = vperm.xlu0 %3356, %v3347
      %v3358 = vpop.permute.xlu0 %3357
      %3361 = vset.pattern.permute.xlu0 0
      %3362 = vperm.xlu0 %3361, %v3348
      %v3363 = vpop.permute.xlu0 %3362
      %3366 = vset.pattern.permute.xlu0 0
      %3367 = vperm.xlu0 %3366, %v3349
      %v3368 = vpop.permute.xlu0 %3367
      %3370 = vmatpush.msra.mxu0 %v2412
      %3371 = vmatpush.msra.mxu0 %v2410
      %3372 = vmatpush.msra.mxu0 %v2408
      %3373 = vmatpush.msra.mxu0 %v2406
      %3374 = vmatpush.msra.mxu0 %v2404
      %3375 = vmatpush.msra.mxu0 %v2402
      %3376 = vmatpush.msra.mxu0 %v2400
      %3377 = vmatpush.msra.mxu0 %v2398
      %3378 = vmatpush.msra.mxu0 %v2396
      %3379 = vmatpush.msra.mxu0 %v2394
      %3380 = vmatpush.msra.mxu0 %v2392
      %3381 = vmatpush.msra.mxu0 %v2390
      %3382 = vmatpush.msra.mxu0 %v2388
      %3383 = vmatpush.msra.mxu0 %v2386
      %3384 = vmatpush.msra.mxu0 %v2384
      %3385 = vmatpush.msra.mxu0 %v2382
      %3386 = vmatmul.f32.gmra.mxu0 %v3310
      %v3387 = vpop.f32.mrf.mxu0
      %v3388 = vadd.f32 %v3353, %v3387
      %3389 = vmatmul.f32.gmra.mxu0 %v3319
      %v3390 = vpop.f32.mrf.mxu0
      %v3391 = vadd.f32 %v3358, %v3390
      %3392 = vmatmul.f32.gmra.mxu0 %v3328
      %v3393 = vpop.f32.mrf.mxu0
      %v3394 = vadd.f32 %v3363, %v3393
      %3395 = vmatmul.f32.gmra.mxu0 %v3337
      %v3396 = vpop.f32.mrf.mxu0
      %v3397 = vadd.f32 %v3368, %v3396
      %3398 = vdwg.mxu0
      %3399 = vmatpush.msra.mxu0 %v2540
      %3400 = vmatpush.msra.mxu0 %v2538
      %3401 = vmatpush.msra.mxu0 %v2536
      %3402 = vmatpush.msra.mxu0 %v2534
      %3403 = vmatpush.msra.mxu0 %v2532
      %3404 = vmatpush.msra.mxu0 %v2530
      %3405 = vmatpush.msra.mxu0 %v2528
      %3406 = vmatpush.msra.mxu0 %v2526
      %3407 = vmatpush.msra.mxu0 %v2524
      %3408 = vmatpush.msra.mxu0 %v2522
      %3409 = vmatpush.msra.mxu0 %v2520
      %3410 = vmatpush.msra.mxu0 %v2518
      %3411 = vmatpush.msra.mxu0 %v2516
      %3412 = vmatpush.msra.mxu0 %v2514
      %3413 = vmatpush.msra.mxu0 %v2512
      %3414 = vmatpush.msra.mxu0 %v2510
      %3415 = vmatmul.f32.gmra.mxu0 %v3311
      %v3416 = vpop.f32.mrf.mxu0
      %v3417 = vadd.f32 %v3388, %v3416
      %3418 = vmatmul.f32.gmra.mxu0 %v3320
      %v3419 = vpop.f32.mrf.mxu0
      %v3420 = vadd.f32 %v3391, %v3419
      %3421 = vmatmul.f32.gmra.mxu0 %v3329
      %v3422 = vpop.f32.mrf.mxu0
      %v3423 = vadd.f32 %v3394, %v3422
      %3424 = vmatmul.f32.gmra.mxu0 %v3338
      %v3425 = vpop.f32.mrf.mxu0
      %v3426 = vadd.f32 %v3397, %v3425
      %3427 = vdwg.mxu0
      %3428 = vmatpush.msra.mxu0 %v2668
      %3429 = vmatpush.msra.mxu0 %v2666
      %3430 = vmatpush.msra.mxu0 %v2664
      %3431 = vmatpush.msra.mxu0 %v2662
      %3432 = vmatpush.msra.mxu0 %v2660
      %3433 = vmatpush.msra.mxu0 %v2658
      %3434 = vmatpush.msra.mxu0 %v2656
      %3435 = vmatpush.msra.mxu0 %v2654
      %3436 = vmatpush.msra.mxu0 %v2652
      %3437 = vmatpush.msra.mxu0 %v2650
      %3438 = vmatpush.msra.mxu0 %v2648
      %3439 = vmatpush.msra.mxu0 %v2646
      %3440 = vmatpush.msra.mxu0 %v2644
      %3441 = vmatpush.msra.mxu0 %v2642
      %3442 = vmatpush.msra.mxu0 %v2640
      %3443 = vmatpush.msra.mxu0 %v2638
      %3444 = vmatmul.f32.gmra.mxu0 %v3312
      %v3445 = vpop.f32.mrf.mxu0
      %v3446 = vadd.f32 %v3417, %v3445
      %3447 = vmatmul.f32.gmra.mxu0 %v3321
      %v3448 = vpop.f32.mrf.mxu0
      %v3449 = vadd.f32 %v3420, %v3448
      %3450 = vmatmul.f32.gmra.mxu0 %v3330
      %v3451 = vpop.f32.mrf.mxu0
      %v3452 = vadd.f32 %v3423, %v3451
      %3453 = vmatmul.f32.gmra.mxu0 %v3339
      %v3454 = vpop.f32.mrf.mxu0
      %v3455 = vadd.f32 %v3426, %v3454
      %3456 = vdwg.mxu0
      %3457 = vmatpush.msra.mxu0 %v2796
      %3458 = vmatpush.msra.mxu0 %v2794
      %3459 = vmatpush.msra.mxu0 %v2792
      %3460 = vmatpush.msra.mxu0 %v2790
      %3461 = vmatpush.msra.mxu0 %v2788
      %3462 = vmatpush.msra.mxu0 %v2786
      %3463 = vmatpush.msra.mxu0 %v2784
      %3464 = vmatpush.msra.mxu0 %v2782
      %3465 = vmatpush.msra.mxu0 %v2780
      %3466 = vmatpush.msra.mxu0 %v2778
      %3467 = vmatpush.msra.mxu0 %v2776
      %3468 = vmatpush.msra.mxu0 %v2774
      %3469 = vmatpush.msra.mxu0 %v2772
      %3470 = vmatpush.msra.mxu0 %v2770
      %3471 = vmatpush.msra.mxu0 %v2768
      %3472 = vmatpush.msra.mxu0 %v2766
      %3473 = vmatmul.f32.gmra.mxu0 %v3313
      %v3474 = vpop.f32.mrf.mxu0
      %v3475 = vadd.f32 %v3446, %v3474
      %3476 = vmatmul.f32.gmra.mxu0 %v3322
      %v3477 = vpop.f32.mrf.mxu0
      %v3478 = vadd.f32 %v3449, %v3477
      %3479 = vmatmul.f32.gmra.mxu0 %v3331
      %v3480 = vpop.f32.mrf.mxu0
      %v3481 = vadd.f32 %v3452, %v3480
      %3482 = vmatmul.f32.gmra.mxu0 %v3340
      %v3483 = vpop.f32.mrf.mxu0
      %v3484 = vadd.f32 %v3455, %v3483
      %3485 = vdwg.mxu0
      %3486 = vmatpush.msra.mxu0 %v2284
      %3487 = vmatpush.msra.mxu0 %v2282
      %3488 = vmatpush.msra.mxu0 %v2280
      %3489 = vmatpush.msra.mxu0 %v2278
      %3490 = vmatpush.msra.mxu0 %v2276
      %3491 = vmatpush.msra.mxu0 %v2274
      %3492 = vmatpush.msra.mxu0 %v2272
      %3493 = vmatpush.msra.mxu0 %v2270
      %3494 = vmatpush.msra.mxu0 %v2268
      %3495 = vmatpush.msra.mxu0 %v2266
      %3496 = vmatpush.msra.mxu0 %v2264
      %3497 = vmatpush.msra.mxu0 %v2262
      %3498 = vmatpush.msra.mxu0 %v2260
      %3499 = vmatpush.msra.mxu0 %v2258
      %3500 = vmatpush.msra.mxu0 %v2256
      %3501 = vmatpush.msra.mxu0 %v2254
      %3502 = vmatmul.f32.gmra.mxu0 %v3314
      %v3503 = vpop.f32.mrf.mxu0
      %v3504 = vadd.f32 %v3475, %v3503
      %3505 = vmatmul.f32.gmra.mxu0 %v3323
      %v3506 = vpop.f32.mrf.mxu0
      %v3507 = vadd.f32 %v3478, %v3506
      %3508 = vmatmul.f32.gmra.mxu0 %v3332
      %v3509 = vpop.f32.mrf.mxu0
      %v3510 = vadd.f32 %v3481, %v3509
      %3511 = vmatmul.f32.gmra.mxu0 %v3341
      %v3512 = vpop.f32.mrf.mxu0
      %v3513 = vadd.f32 %v3484, %v3512
      %3514 = vdwg.mxu0
      %3515 = vmatpush.msra.mxu0 %v2924
      %3516 = vmatpush.msra.mxu0 %v2922
      %3517 = vmatpush.msra.mxu0 %v2920
      %3518 = vmatpush.msra.mxu0 %v2918
      %3519 = vmatpush.msra.mxu0 %v2916
      %3520 = vmatpush.msra.mxu0 %v2914
      %3521 = vmatpush.msra.mxu0 %v2912
      %3522 = vmatpush.msra.mxu0 %v2910
      %3523 = vmatpush.msra.mxu0 %v2908
      %3524 = vmatpush.msra.mxu0 %v2906
      %3525 = vmatpush.msra.mxu0 %v2904
      %3526 = vmatpush.msra.mxu0 %v2902
      %3527 = vmatpush.msra.mxu0 %v2900
      %3528 = vmatpush.msra.mxu0 %v2898
      %3529 = vmatpush.msra.mxu0 %v2896
      %3530 = vmatpush.msra.mxu0 %v2894
      %3531 = vmatmul.f32.gmra.mxu0 %v3315
      %v3532 = vpop.f32.mrf.mxu0
      %v3533 = vadd.f32 %v3504, %v3532
      %3534 = vmatmul.f32.gmra.mxu0 %v3324
      %v3535 = vpop.f32.mrf.mxu0
      %v3536 = vadd.f32 %v3507, %v3535
      %3537 = vmatmul.f32.gmra.mxu0 %v3333
      %v3538 = vpop.f32.mrf.mxu0
      %v3539 = vadd.f32 %v3510, %v3538
      %3540 = vmatmul.f32.gmra.mxu0 %v3342
      %v3541 = vpop.f32.mrf.mxu0
      %v3542 = vadd.f32 %v3513, %v3541
      %3543 = vdwg.mxu0
      %3544 = vmatpush.msra.mxu0 %v3052
      %3545 = vmatpush.msra.mxu0 %v3050
      %3546 = vmatpush.msra.mxu0 %v3048
      %3547 = vmatpush.msra.mxu0 %v3046
      %3548 = vmatpush.msra.mxu0 %v3044
      %3549 = vmatpush.msra.mxu0 %v3042
      %3550 = vmatpush.msra.mxu0 %v3040
      %3551 = vmatpush.msra.mxu0 %v3038
      %3552 = vmatpush.msra.mxu0 %v3036
      %3553 = vmatpush.msra.mxu0 %v3034
      %3554 = vmatpush.msra.mxu0 %v3032
      %3555 = vmatpush.msra.mxu0 %v3030
      %3556 = vmatpush.msra.mxu0 %v3028
      %3557 = vmatpush.msra.mxu0 %v3026
      %3558 = vmatpush.msra.mxu0 %v3024
      %3559 = vmatpush.msra.mxu0 %v3022
      %3560 = vmatmul.f32.gmra.mxu0 %v3316
      %v3561 = vpop.f32.mrf.mxu0
      %v3562 = vadd.f32 %v3533, %v3561
      %3563 = vmatmul.f32.gmra.mxu0 %v3325
      %v3564 = vpop.f32.mrf.mxu0
      %v3565 = vadd.f32 %v3536, %v3564
      %3566 = vmatmul.f32.gmra.mxu0 %v3334
      %v3567 = vpop.f32.mrf.mxu0
      %v3568 = vadd.f32 %v3539, %v3567
      %3569 = vmatmul.f32.gmra.mxu0 %v3343
      %v3570 = vpop.f32.mrf.mxu0
      %v3571 = vadd.f32 %v3542, %v3570
      %3572 = vdwg.mxu0
      %3573 = vmatpush.msra.mxu0 %v3180
      %3574 = vmatpush.msra.mxu0 %v3178
      %3575 = vmatpush.msra.mxu0 %v3176
      %3576 = vmatpush.msra.mxu0 %v3174
      %3577 = vmatpush.msra.mxu0 %v3172
      %3578 = vmatpush.msra.mxu0 %v3170
      %3579 = vmatpush.msra.mxu0 %v3168
      %3580 = vmatpush.msra.mxu0 %v3166
      %3581 = vmatpush.msra.mxu0 %v3164
      %3582 = vmatpush.msra.mxu0 %v3162
      %3583 = vmatpush.msra.mxu0 %v3160
      %3584 = vmatpush.msra.mxu0 %v3158
      %3585 = vmatpush.msra.mxu0 %v3156
      %3586 = vmatpush.msra.mxu0 %v3154
      %3587 = vmatpush.msra.mxu0 %v3152
      %3588 = vmatpush.msra.mxu0 %v3150
      %3589 = vmatmul.f32.gmra.mxu0 %v3317
      %v3590 = vpop.f32.mrf.mxu0
      %v3591 = vadd.f32 %v3562, %v3590
      %3592 = vmatmul.f32.gmra.mxu0 %v3326
      %v3593 = vpop.f32.mrf.mxu0
      %v3594 = vadd.f32 %v3565, %v3593
      %3595 = vmatmul.f32.gmra.mxu0 %v3335
      %v3596 = vpop.f32.mrf.mxu0
      %v3597 = vadd.f32 %v3568, %v3596
      %3598 = vmatmul.f32.gmra.mxu0 %v3344
      %v3599 = vpop.f32.mrf.mxu0
      %v3600 = vadd.f32 %v3571, %v3599
      %3601 = vdwg.mxu0
      %3602 = vmatpush.msra.mxu0 %v3308
      %3603 = vmatpush.msra.mxu0 %v3306
      %3604 = vmatpush.msra.mxu0 %v3304
      %3605 = vmatpush.msra.mxu0 %v3302
      %3606 = vmatpush.msra.mxu0 %v3300
      %3607 = vmatpush.msra.mxu0 %v3298
      %3608 = vmatpush.msra.mxu0 %v3296
      %3609 = vmatpush.msra.mxu0 %v3294
      %3610 = vmatpush.msra.mxu0 %v3292
      %3611 = vmatpush.msra.mxu0 %v3290
      %3612 = vmatpush.msra.mxu0 %v3288
      %3613 = vmatpush.msra.mxu0 %v3286
      %3614 = vmatpush.msra.mxu0 %v3284
      %3615 = vmatpush.msra.mxu0 %v3282
      %3616 = vmatpush.msra.mxu0 %v3280
      %3617 = vmatpush.msra.mxu0 %v3278
      %3618 = vmatmul.f32.gmra.mxu0 %v3318
      %v3619 = vpop.f32.mrf.mxu0
      %v3620 = vadd.f32 %v3591, %v3619
      %3621 = vmatmul.f32.gmra.mxu0 %v3327
      %v3622 = vpop.f32.mrf.mxu0
      %v3623 = vadd.f32 %v3594, %v3622
      %3624 = vmatmul.f32.gmra.mxu0 %v3336
      %v3625 = vpop.f32.mrf.mxu0
      %v3626 = vadd.f32 %v3597, %v3625
      %3627 = vmatmul.f32.gmra.mxu0 %v3345
      %v3628 = vpop.f32.mrf.mxu0
      %v3629 = vadd.f32 %v3600, %v3628
      %3630 = vdwg.mxu0
      %3631 = vmatpush.msra.mxu0 %v2413
      %3632 = vmatpush.msra.mxu0 %v2411
      %3633 = vmatpush.msra.mxu0 %v2409
      %3634 = vmatpush.msra.mxu0 %v2407
      %3635 = vmatpush.msra.mxu0 %v2405
      %3636 = vmatpush.msra.mxu0 %v2403
      %3637 = vmatpush.msra.mxu0 %v2401
      %3638 = vmatpush.msra.mxu0 %v2399
      %3639 = vmatpush.msra.mxu0 %v2397
      %3640 = vmatpush.msra.mxu0 %v2395
      %3641 = vmatpush.msra.mxu0 %v2393
      %3642 = vmatpush.msra.mxu0 %v2391
      %3643 = vmatpush.msra.mxu0 %v2389
      %3644 = vmatpush.msra.mxu0 %v2387
      %3645 = vmatpush.msra.mxu0 %v2385
      %3646 = vmatpush.msra.mxu0 %v2383
      %3647 = vmatmul.f32.gmra.mxu0 %v3310
      %v3648 = vpop.f32.mrf.mxu0
      %v3649 = vadd.f32 %v3353, %v3648
      %3650 = vmatmul.f32.gmra.mxu0 %v3319
      %v3651 = vpop.f32.mrf.mxu0
      %v3652 = vadd.f32 %v3358, %v3651
      %3653 = vmatmul.f32.gmra.mxu0 %v3328
      %v3654 = vpop.f32.mrf.mxu0
      %v3655 = vadd.f32 %v3363, %v3654
      %3656 = vmatmul.f32.gmra.mxu0 %v3337
      %v3657 = vpop.f32.mrf.mxu0
      %v3658 = vadd.f32 %v3368, %v3657
      %3659 = vdwg.mxu0
      %3660 = vmatpush.msra.mxu0 %v2541
      %3661 = vmatpush.msra.mxu0 %v2539
      %3662 = vmatpush.msra.mxu0 %v2537
      %3663 = vmatpush.msra.mxu0 %v2535
      %3664 = vmatpush.msra.mxu0 %v2533
      %3665 = vmatpush.msra.mxu0 %v2531
      %3666 = vmatpush.msra.mxu0 %v2529
      %3667 = vmatpush.msra.mxu0 %v2527
      %3668 = vmatpush.msra.mxu0 %v2525
      %3669 = vmatpush.msra.mxu0 %v2523
      %3670 = vmatpush.msra.mxu0 %v2521
      %3671 = vmatpush.msra.mxu0 %v2519
      %3672 = vmatpush.msra.mxu0 %v2517
      %3673 = vmatpush.msra.mxu0 %v2515
      %3674 = vmatpush.msra.mxu0 %v2513
      %3675 = vmatpush.msra.mxu0 %v2511
      %3676 = vmatmul.f32.gmra.mxu0 %v3311
      %v3677 = vpop.f32.mrf.mxu0
      %v3678 = vadd.f32 %v3649, %v3677
      %3679 = vmatmul.f32.gmra.mxu0 %v3320
      %v3680 = vpop.f32.mrf.mxu0
      %v3681 = vadd.f32 %v3652, %v3680
      %3682 = vmatmul.f32.gmra.mxu0 %v3329
      %v3683 = vpop.f32.mrf.mxu0
      %v3684 = vadd.f32 %v3655, %v3683
      %3685 = vmatmul.f32.gmra.mxu0 %v3338
      %v3686 = vpop.f32.mrf.mxu0
      %v3687 = vadd.f32 %v3658, %v3686
      %3688 = vdwg.mxu0
      %3689 = vmatpush.msra.mxu0 %v2669
      %3690 = vmatpush.msra.mxu0 %v2667
      %3691 = vmatpush.msra.mxu0 %v2665
      %3692 = vmatpush.msra.mxu0 %v2663
      %3693 = vmatpush.msra.mxu0 %v2661
      %3694 = vmatpush.msra.mxu0 %v2659
      %3695 = vmatpush.msra.mxu0 %v2657
      %3696 = vmatpush.msra.mxu0 %v2655
      %3697 = vmatpush.msra.mxu0 %v2653
      %3698 = vmatpush.msra.mxu0 %v2651
      %3699 = vmatpush.msra.mxu0 %v2649
      %3700 = vmatpush.msra.mxu0 %v2647
      %3701 = vmatpush.msra.mxu0 %v2645
      %3702 = vmatpush.msra.mxu0 %v2643
      %3703 = vmatpush.msra.mxu0 %v2641
      %3704 = vmatpush.msra.mxu0 %v2639
      %3705 = vmatmul.f32.gmra.mxu0 %v3312
      %v3706 = vpop.f32.mrf.mxu0
      %v3707 = vadd.f32 %v3678, %v3706
      %3708 = vmatmul.f32.gmra.mxu0 %v3321
      %v3709 = vpop.f32.mrf.mxu0
      %v3710 = vadd.f32 %v3681, %v3709
      %3711 = vmatmul.f32.gmra.mxu0 %v3330
      %v3712 = vpop.f32.mrf.mxu0
      %v3713 = vadd.f32 %v3684, %v3712
      %3714 = vmatmul.f32.gmra.mxu0 %v3339
      %v3715 = vpop.f32.mrf.mxu0
      %v3716 = vadd.f32 %v3687, %v3715
      %3717 = vdwg.mxu0
      %3718 = vmatpush.msra.mxu0 %v2797
      %3719 = vmatpush.msra.mxu0 %v2795
      %3720 = vmatpush.msra.mxu0 %v2793
      %3721 = vmatpush.msra.mxu0 %v2791
      %3722 = vmatpush.msra.mxu0 %v2789
      %3723 = vmatpush.msra.mxu0 %v2787
      %3724 = vmatpush.msra.mxu0 %v2785
      %3725 = vmatpush.msra.mxu0 %v2783
      %3726 = vmatpush.msra.mxu0 %v2781
      %3727 = vmatpush.msra.mxu0 %v2779
      %3728 = vmatpush.msra.mxu0 %v2777
      %3729 = vmatpush.msra.mxu0 %v2775
      %3730 = vmatpush.msra.mxu0 %v2773
      %3731 = vmatpush.msra.mxu0 %v2771
      %3732 = vmatpush.msra.mxu0 %v2769
      %3733 = vmatpush.msra.mxu0 %v2767
      %3734 = vmatmul.f32.gmra.mxu0 %v3313
      %v3735 = vpop.f32.mrf.mxu0
      %v3736 = vadd.f32 %v3707, %v3735
      %3737 = vmatmul.f32.gmra.mxu0 %v3322
      %v3738 = vpop.f32.mrf.mxu0
      %v3739 = vadd.f32 %v3710, %v3738
      %3740 = vmatmul.f32.gmra.mxu0 %v3331
      %v3741 = vpop.f32.mrf.mxu0
      %v3742 = vadd.f32 %v3713, %v3741
      %3743 = vmatmul.f32.gmra.mxu0 %v3340
      %v3744 = vpop.f32.mrf.mxu0
      %v3745 = vadd.f32 %v3716, %v3744
      %3746 = vdwg.mxu0
      %3747 = vmatpush.msra.mxu0 %v2285
      %3748 = vmatpush.msra.mxu0 %v2283
      %3749 = vmatpush.msra.mxu0 %v2281
      %3750 = vmatpush.msra.mxu0 %v2279
      %3751 = vmatpush.msra.mxu0 %v2277
      %3752 = vmatpush.msra.mxu0 %v2275
      %3753 = vmatpush.msra.mxu0 %v2273
      %3754 = vmatpush.msra.mxu0 %v2271
      %3755 = vmatpush.msra.mxu0 %v2269
      %3756 = vmatpush.msra.mxu0 %v2267
      %3757 = vmatpush.msra.mxu0 %v2265
      %3758 = vmatpush.msra.mxu0 %v2263
      %3759 = vmatpush.msra.mxu0 %v2261
      %3760 = vmatpush.msra.mxu0 %v2259
      %3761 = vmatpush.msra.mxu0 %v2257
      %3762 = vmatpush.msra.mxu0 %v2255
      %3763 = vmatmul.f32.gmra.mxu0 %v3314
      %v3764 = vpop.f32.mrf.mxu0
      %v3765 = vadd.f32 %v3736, %v3764
      %3766 = vmatmul.f32.gmra.mxu0 %v3323
      %v3767 = vpop.f32.mrf.mxu0
      %v3768 = vadd.f32 %v3739, %v3767
      %3769 = vmatmul.f32.gmra.mxu0 %v3332
      %v3770 = vpop.f32.mrf.mxu0
      %v3771 = vadd.f32 %v3742, %v3770
      %3772 = vmatmul.f32.gmra.mxu0 %v3341
      %v3773 = vpop.f32.mrf.mxu0
      %v3774 = vadd.f32 %v3745, %v3773
      %3775 = vdwg.mxu0
      %3776 = vmatpush.msra.mxu0 %v2925
      %3777 = vmatpush.msra.mxu0 %v2923
      %3778 = vmatpush.msra.mxu0 %v2921
      %3779 = vmatpush.msra.mxu0 %v2919
      %3780 = vmatpush.msra.mxu0 %v2917
      %3781 = vmatpush.msra.mxu0 %v2915
      %3782 = vmatpush.msra.mxu0 %v2913
      %3783 = vmatpush.msra.mxu0 %v2911
      %3784 = vmatpush.msra.mxu0 %v2909
      %3785 = vmatpush.msra.mxu0 %v2907
      %3786 = vmatpush.msra.mxu0 %v2905
      %3787 = vmatpush.msra.mxu0 %v2903
      %3788 = vmatpush.msra.mxu0 %v2901
      %3789 = vmatpush.msra.mxu0 %v2899
      %3790 = vmatpush.msra.mxu0 %v2897
      %3791 = vmatpush.msra.mxu0 %v2895
      %3792 = vmatmul.f32.gmra.mxu0 %v3315
      %v3793 = vpop.f32.mrf.mxu0
      %v3794 = vadd.f32 %v3765, %v3793
      %3795 = vmatmul.f32.gmra.mxu0 %v3324
      %v3796 = vpop.f32.mrf.mxu0
      %v3797 = vadd.f32 %v3768, %v3796
      %3798 = vmatmul.f32.gmra.mxu0 %v3333
      %v3799 = vpop.f32.mrf.mxu0
      %v3800 = vadd.f32 %v3771, %v3799
      %3801 = vmatmul.f32.gmra.mxu0 %v3342
      %v3802 = vpop.f32.mrf.mxu0
      %v3803 = vadd.f32 %v3774, %v3802
      %3804 = vdwg.mxu0
      %3805 = vmatpush.msra.mxu0 %v3053
      %3806 = vmatpush.msra.mxu0 %v3051
      %3807 = vmatpush.msra.mxu0 %v3049
      %3808 = vmatpush.msra.mxu0 %v3047
      %3809 = vmatpush.msra.mxu0 %v3045
      %3810 = vmatpush.msra.mxu0 %v3043
      %3811 = vmatpush.msra.mxu0 %v3041
      %3812 = vmatpush.msra.mxu0 %v3039
      %3813 = vmatpush.msra.mxu0 %v3037
      %3814 = vmatpush.msra.mxu0 %v3035
      %3815 = vmatpush.msra.mxu0 %v3033
      %3816 = vmatpush.msra.mxu0 %v3031
      %3817 = vmatpush.msra.mxu0 %v3029
      %3818 = vmatpush.msra.mxu0 %v3027
      %3819 = vmatpush.msra.mxu0 %v3025
      %3820 = vmatpush.msra.mxu0 %v3023
      %3821 = vmatmul.f32.gmra.mxu0 %v3316
      %v3822 = vpop.f32.mrf.mxu0
      %v3823 = vadd.f32 %v3794, %v3822
      %3824 = vmatmul.f32.gmra.mxu0 %v3325
      %v3825 = vpop.f32.mrf.mxu0
      %v3826 = vadd.f32 %v3797, %v3825
      %3827 = vmatmul.f32.gmra.mxu0 %v3334
      %v3828 = vpop.f32.mrf.mxu0
      %v3829 = vadd.f32 %v3800, %v3828
      %3830 = vmatmul.f32.gmra.mxu0 %v3343
      %v3831 = vpop.f32.mrf.mxu0
      %v3832 = vadd.f32 %v3803, %v3831
      %3833 = vdwg.mxu0
      %3834 = vmatpush.msra.mxu0 %v3181
      %3835 = vmatpush.msra.mxu0 %v3179
      %3836 = vmatpush.msra.mxu0 %v3177
      %3837 = vmatpush.msra.mxu0 %v3175
      %3838 = vmatpush.msra.mxu0 %v3173
      %3839 = vmatpush.msra.mxu0 %v3171
      %3840 = vmatpush.msra.mxu0 %v3169
      %3841 = vmatpush.msra.mxu0 %v3167
      %3842 = vmatpush.msra.mxu0 %v3165
      %3843 = vmatpush.msra.mxu0 %v3163
      %3844 = vmatpush.msra.mxu0 %v3161
      %3845 = vmatpush.msra.mxu0 %v3159
      %3846 = vmatpush.msra.mxu0 %v3157
      %3847 = vmatpush.msra.mxu0 %v3155
      %3848 = vmatpush.msra.mxu0 %v3153
      %3849 = vmatpush.msra.mxu0 %v3151
      %3850 = vmatmul.f32.gmra.mxu0 %v3317
      %v3851 = vpop.f32.mrf.mxu0
      %v3852 = vadd.f32 %v3823, %v3851
      %3853 = vmatmul.f32.gmra.mxu0 %v3326
      %v3854 = vpop.f32.mrf.mxu0
      %v3855 = vadd.f32 %v3826, %v3854
      %3856 = vmatmul.f32.gmra.mxu0 %v3335
      %v3857 = vpop.f32.mrf.mxu0
      %v3858 = vadd.f32 %v3829, %v3857
      %3859 = vmatmul.f32.gmra.mxu0 %v3344
      %v3860 = vpop.f32.mrf.mxu0
      %v3861 = vadd.f32 %v3832, %v3860
      %3862 = vdwg.mxu0
      %3863 = vmatpush.msra.mxu0 %v3309
      %3864 = vmatpush.msra.mxu0 %v3307
      %3865 = vmatpush.msra.mxu0 %v3305
      %3866 = vmatpush.msra.mxu0 %v3303
      %3867 = vmatpush.msra.mxu0 %v3301
      %3868 = vmatpush.msra.mxu0 %v3299
      %3869 = vmatpush.msra.mxu0 %v3297
      %3870 = vmatpush.msra.mxu0 %v3295
      %3871 = vmatpush.msra.mxu0 %v3293
      %3872 = vmatpush.msra.mxu0 %v3291
      %3873 = vmatpush.msra.mxu0 %v3289
      %3874 = vmatpush.msra.mxu0 %v3287
      %3875 = vmatpush.msra.mxu0 %v3285
      %3876 = vmatpush.msra.mxu0 %v3283
      %3877 = vmatpush.msra.mxu0 %v3281
      %3878 = vmatpush.msra.mxu0 %v3279
      %3879 = vmatmul.f32.gmra.mxu0 %v3318
      %v3880 = vpop.f32.mrf.mxu0
      %v3881 = vadd.f32 %v3852, %v3880
      %3882 = vmatmul.f32.gmra.mxu0 %v3327
      %v3883 = vpop.f32.mrf.mxu0
      %v3884 = vadd.f32 %v3855, %v3883
      %3885 = vmatmul.f32.gmra.mxu0 %v3336
      %v3886 = vpop.f32.mrf.mxu0
      %v3887 = vadd.f32 %v3858, %v3886
      %3888 = vmatmul.f32.gmra.mxu0 %v3345
      %v3889 = vpop.f32.mrf.mxu0
      %v3890 = vadd.f32 %v3861, %v3889
      %3891 = vdwg.mxu0
      %v3892 = vadd.f32 %v3620, 1.0
      %v3893 = vadd.f32 %v3881, 1.0
      %v3894 = vadd.f32 %v3623, 1.0
      %v3895 = vadd.f32 %v3884, 1.0
      %v3896 = vmul.f32 %v1847, %v3892
      %v3897 = vmul.f32 %v1848, %v3893
      %v3898 = vmul.f32 %v1849, %v3894
      %v3899 = vmul.f32 %v1850, %v3895
      %v3900 = vadd.f32 %v3896, %v3626
      %v3901 = vadd.f32 %v3897, %v3887
      %v3902 = vadd.f32 %v3898, %v3629
      %v3903 = vadd.f32 %v3899, %v3890
      %3904 = vst [vmem:[%s738] sm:$0xff] %v3900
      %3905 = vst [vmem:[%s738 + $0x8] sm:$0xff] %v3901
      %3906 = vst [vmem:[%s738 + $0x10] sm:$0xff] %v3902
      %3907 = vst [vmem:[%s738 + $0x18] sm:$0xff] %v3903
      %p3908 = scmp.lt.s32.totalorder %s34, 1
      %s3909 = scalar_select %p3908, %s34, 1
      %s3910 = smul.addr %s3909, 4
      %s3911 = smul.addr %s3910, 8
      %s3912 = scalar_lea.vmem %s20, %s3911
      %p3913 = scmp.lt.s32.totalorder %s34, 1
      %s3914 = scalar_select %p3913, %s34, 1
      %s3915 = smul.addr %s3914, 2
      %s3916 = smul.addr %s3915, 8
      %s3917 = scalar_lea.vmem %s21, %s3916
      %p3918 = scmp.lt.s32.totalorder %s34, 1
      %s3919 = scalar_select %p3918, %s34, 1
      %s3920 = smul.addr %s3919, 2
      %s3921 = smul.addr %s3920, 8
      %s3922 = scalar_lea.vmem %s22, %s3921
      // Predicated region
      $region101: #{forward.1} parent=99 // pred_check
        %p3923 = pneg %p487
      $region102: #{forward.1} parent=99 // pred_check_branch
        %3925 = sbr.rel (%p3923) target = $region104
      $region103: #{forward.1} parent=99 // pred_region
        _
      $region104: #{forward.1} parent=99 // pred_fallthru
        _
      // Predicated region
      $region105: #{forward.1} parent=99 // pred_check
        %p3926 = pneg %p513
      $region106: #{forward.1} parent=99 // pred_check_branch
        %3928 = sbr.rel (%p3926) target = $region108
      $region107: #{forward.1} parent=99 // pred_region
        _
      $region108: #{forward.1} parent=99 // pred_fallthru
        _
      // Predicated region
      $region109: #{forward.1} parent=99 // pred_check
        %p3929 = pneg %p539
      $region110: #{forward.1} parent=99 // pred_check_branch
        %3931 = sbr.rel (%p3929) target = $region112
      $region111: #{forward.1} parent=99 // pred_region
        _
      $region112: #{forward.1} parent=99 // pred_fallthru
        _
    $region100: #{forward.1} parent=5 // pred_fallthru
      _
    %p3932 = scmp.le.s32.totalorder 2, %s29
    // Predicated region
    $region113: #{forward.1} parent=5 // pred_check
      %p3933 = pneg %p3932
    $region114: #{forward.1} parent=5 // pred_check_branch
      %3935 = sbr.rel (%p3933) target = $region116
    $region115: #{forward.1} parent=5 // pred_region
      %s3936 = ssub.s32 %s29, 2
      // Predicated region
      $region117: #{forward.1} parent=115 // pred_check
        %p3937 = pneg %p493
      $region118: #{forward.1} parent=115 // pred_check_branch
        %3939 = sbr.rel (%p3937) target = $region120
      $region119: #{forward.1} parent=115 // pred_region
        %p3940 = scmp.lt.s32.totalorder %s35, 1
        %s3941 = scalar_select %p3940, %s35, 1
        %s3942 = smul.addr %s3941, 4
        %s3943 = smul.addr %s3942, 8
        %s3944 = scalar_lea.vmem %s20, %s3943
      $region120: #{forward.1} parent=115 // pred_fallthru
        _
      // Predicated region
      $region121: #{forward.1} parent=115 // pred_check
        %p3945 = pneg %p519
      $region122: #{forward.1} parent=115 // pred_check_branch
        %3947 = sbr.rel (%p3945) target = $region124
      $region123: #{forward.1} parent=115 // pred_region
        %p3948 = scmp.lt.s32.totalorder %s35, 1
        %s3949 = scalar_select %p3948, %s35, 1
        %s3950 = smul.addr %s3949, 2
        %s3951 = smul.addr %s3950, 8
        %s3952 = scalar_lea.vmem %s21, %s3951
      $region124: #{forward.1} parent=115 // pred_fallthru
        _
      // Predicated region
      $region125: #{forward.1} parent=115 // pred_check
        %p3953 = pneg %p545
      $region126: #{forward.1} parent=115 // pred_check_branch
        %3955 = sbr.rel (%p3953) target = $region128
      $region127: #{forward.1} parent=115 // pred_region
        %p3956 = scmp.lt.s32.totalorder %s35, 1
        %s3957 = scalar_select %p3956, %s35, 1
        %s3958 = smul.addr %s3957, 2
        %s3959 = smul.addr %s3958, 8
        %s3960 = scalar_lea.vmem %s22, %s3959
      $region128: #{forward.1} parent=115 // pred_fallthru
        _
    $region116: #{forward.1} parent=5 // pred_fallthru
      _
  $region6: #{forward.1} parent=0 // loop_footer
    %s33 = sadd.s32 1, %s29
  $region7: #{forward.1} parent=0 // loop_footer_branch
    %28 = sbr.rel target = $region3
  $region8: #{forward.1} parent=0 // loop_exit
    _

</llo_original>
